<compile_context>
chip_gen: v7x
topology: tpu7x:2x2x1
jax: 0.10.0
libtpu: 0.0.40
codegen_flags: <defaults>
</compile_context>

<pallas_src>
import functools

import jax
import jax.numpy as jnp
from jax.experimental import pallas as pl
from jax.experimental.pallas import tpu as pltpu


def _fused_conv_stack_kernel(x_ref, w1_ref, b1_ref, w2_ref, b2_ref,
                             w3_ref, b3_ref, o_ref, buf1, buf2):
    """One batch element: three fused 1x1 convs, each with spatial zero-pad 1.

    x_ref : (1, C0, H,   W  ) VMEM  input slab (NCHW)
    w*_ref: (Cout, Cin)       SMEM  1x1 conv weights
    b*_ref: (Cout,)           SMEM  biases (b3 already includes `+ other`)
    o_ref : (1, C3, H+6,W+6)  VMEM  output slab (NCHW)
    buf1  : (C1, H+2, W+2)    VMEM scratch (padded layer-1 output)
    buf2  : (C2, H+4, W+4)    VMEM scratch (padded layer-2 output)
    """
    _, c0, h0, w0 = x_ref.shape
    c1 = w1_ref.shape[0]
    c2 = w2_ref.shape[0]
    c3 = w3_ref.shape[0]
    ph1, pw1 = h0 + 2, w0 + 2
    ph2, pw2 = h0 + 4, w0 + 4
    ph3, pw3 = h0 + 6, w0 + 6

    # ---- layer 1: C0 -> C1 (border of the padded output is exactly b1) ----
    for co in range(c1):
        acc = jnp.full((h0, w0), b1_ref[co], dtype=jnp.float32)
        for ci in range(c0):
            acc = acc + w1_ref[co, ci] * x_ref[0, ci, :, :]
        buf1[co, :, :] = jnp.full((ph1, pw1), b1_ref[co], dtype=jnp.float32)
        buf1[co, pl.ds(1, h0), pl.ds(1, w0)] = acc

    # ---- layer 2: C1 -> C2 ----
    for co in range(c2):
        acc = jnp.full((ph1, pw1), b2_ref[co], dtype=jnp.float32)
        for ci in range(c1):
            acc = acc + w2_ref[co, ci] * buf1[ci, :, :]
        buf2[co, :, :] = jnp.full((ph2, pw2), b2_ref[co], dtype=jnp.float32)
        buf2[co, pl.ds(1, ph1), pl.ds(1, pw1)] = acc

    # ---- layer 3: C2 -> C3 (b3 already carries `+ other`) ----
    for co in range(c3):
        acc = jnp.full((ph2, pw2), b3_ref[co], dtype=jnp.float32)
        for ci in range(c2):
            acc = acc + w3_ref[co, ci] * buf2[ci, :, :]
        o_ref[0, co, :, :] = jnp.full((ph3, pw3), b3_ref[co], dtype=jnp.float32)
        o_ref[0, co, pl.ds(1, ph2), pl.ds(1, pw2)] = acc


def _smem_spec():
    return pl.BlockSpec(memory_space=pltpu.MemorySpace.SMEM)


def fused_conv_stack(x, w1, b1, w2, b2, w3, b3_eff):
    """x: (N, 3, H, W) f32; w_i: (Cout_i, Cin_i); b_i: (Cout_i,). NCHW out."""
    n, c0, h, w = x.shape
    c1, c2, c3 = w1.shape[0], w2.shape[0], w3.shape[0]
    ho, wo = h + 6, w + 6
    return pl.pallas_call(
        _fused_conv_stack_kernel,
        out_shape=jax.ShapeDtypeStruct((n, c3, ho, wo), jnp.float32),
        grid=(n,),
        in_specs=[
            pl.BlockSpec((1, c0, h, w), lambda i: (i, 0, 0, 0)),
            _smem_spec(), _smem_spec(),   # w1, b1
            _smem_spec(), _smem_spec(),   # w2, b2
            _smem_spec(), _smem_spec(),   # w3, b3(+other)
        ],
        out_specs=pl.BlockSpec((1, c3, ho, wo), lambda i: (i, 0, 0, 0)),
        scratch_shapes=[
            pltpu.VMEM((c1, h + 2, w + 2), jnp.float32),
            pltpu.VMEM((c2, h + 4, w + 4), jnp.float32),
        ],
        compiler_params=pltpu.CompilerParams(
            dimension_semantics=("parallel",),
        ),
    )(x, w1, b1, w2, b2, w3, b3_eff)


@jax.jit
def model_forward(x_nchw, w1, b1, w2, b2, w3, b3, other=1.0):
    """Mirror of Model.forward with padding1=padding2=None (default path)."""
    # Fold the scalar `+ other` exactly into conv3's bias.
    b3_eff = b3 + jnp.asarray(other, dtype=jnp.float32)
    return fused_conv_stack(x_nchw, w1, b1, w2, b2, w3, b3_eff)


def _init_conv_params(key, cin, cout):
    """Deterministic init mimicking PyTorch Conv2d default (U(-1/sqrt(fan_in), .))."""
    kw, kb = jax.random.split(key)
    bound = 1.0 / (float(cin) ** 0.5)
    w = jax.random.uniform(kw, (cout, cin), jnp.float32, -bound, bound)
    b = jax.random.uniform(kb, (cout,), jnp.float32, -bound, bound)
    return w, b


def _reference(x_nchw, w1, b1, w2, b2, w3, b3, other=1.0):
    """Pure-JAX/XLA reference using lax.conv for validation."""
    def conv(x, w_oi, b_vec):
        w_oihw = w_oi[:, :, None, None]  # (Cout, Cin, 1, 1)
        y = jax.lax.conv_general_dilated(
            x, w_oihw, window_strides=(1, 1), padding=((1, 1), (1, 1)),
            dimension_numbers=("NCHW", "OIHW", "NCHW"))
        return y + b_vec.reshape(1, -1, 1, 1)

    v = conv(x_nchw, w1, b1)
    v = conv(v, w2, b2)
    v = conv(v, w3, b3)
    return v + other


if __name__ == "__main__":
    key = jax.random.PRNGKey(0)
    k_x, k1, k2, k3 = jax.random.split(key, 4)

    # Small shapes consistent with the module (in_channels must be 3);
    # batch=2 exercises the parallel batch grid (2 TensorCores on v7x).
    N, H, W = 2, 16, 16
    x = jax.random.normal(k_x, (N, 3, H, W), jnp.float32)

    w1, b1 = _init_conv_params(k1, 3, 7)
    w2, b2 = _init_conv_params(k2, 7, 8)
    w3, b3 = _init_conv_params(k3, 8, 2)

    out = model_forward(x, w1, b1, w2, b2, w3, b3, 1.0)
    out = jax.block_until_ready(out)

    assert out.shape == (N, 2, H + 6, W + 6), out.shape   # 16 -> 18 -> 20 -> 22
    ref = _reference(x, w1, b1, w2, b2, w3, b3, 1.0)
    assert jnp.allclose(out, ref, atol=1e-4, rtol=1e-4), "mismatch vs reference"

    print("KERNEL_OK")
</pallas_src>

<mosaic_0001>
module attributes {stable_mosaic.version = 11 : i64} {
  func.func @_fused_conv_stack_kernel(%arg0: i32, %arg1: memref<1x3x16x16xf32, #tpu.memory_space<vmem>>, %arg2: memref<7x3xf32, #tpu.memory_space<smem>>, %arg3: memref<7xf32, #tpu.memory_space<smem>>, %arg4: memref<8x7xf32, #tpu.memory_space<smem>>, %arg5: memref<8xf32, #tpu.memory_space<smem>>, %arg6: memref<2x8xf32, #tpu.memory_space<smem>>, %arg7: memref<2xf32, #tpu.memory_space<smem>>, %arg8: memref<1x2x22x22xf32, #tpu.memory_space<vmem>>, %arg9: memref<7x18x18xf32, #tpu.memory_space<vmem>>, %arg10: memref<8x20x20xf32, #tpu.memory_space<vmem>>) attributes {dimension_semantics = [#tpu.dimension_semantics<parallel>], iteration_bounds = array<i64: 2>, scalar_prefetch = 0 : i64, scratch_operands = 2 : i64, tpu.core_type = #tpu.core_type<tc>, window_params = [{transform_indices = @transform_0, window_bounds = array<i64: 1, 3, 16, 16>}, {transform_indices = @transform_1, window_bounds = array<i64: 7, 3>}, {transform_indices = @transform_2, window_bounds = array<i64: 7>}, {transform_indices = @transform_3, window_bounds = array<i64: 8, 7>}, {transform_indices = @transform_4, window_bounds = array<i64: 8>}, {transform_indices = @transform_5, window_bounds = array<i64: 2, 8>}, {transform_indices = @transform_6, window_bounds = array<i64: 2>}, {transform_indices = @transform_7, window_bounds = array<i64: 1, 2, 22, 22>}]} {
    %c0 = arith.constant 0 : index
    %0 = memref.load %arg3[%c0] : memref<7xf32, #tpu.memory_space<smem>>
    %1 = vector.broadcast %0 : f32 to vector<16x16xf32>
    %c0_0 = arith.constant 0 : index
    %c0_1 = arith.constant 0 : index
    %2 = memref.load %arg2[%c0_0, %c0_1] : memref<7x3xf32, #tpu.memory_space<smem>>
    %c0_2 = arith.constant 0 : index
    %c0_3 = arith.constant 0 : index
    %c0_4 = arith.constant 0 : index
    %c0_5 = arith.constant 0 : index
    %3 = vector.load %arg1[%c0_2, %c0_3, %c0_4, %c0_5] : memref<1x3x16x16xf32, #tpu.memory_space<vmem>>, vector<1x1x16x16xf32>
    %4 = vector.shape_cast %3 : vector<1x1x16x16xf32> to vector<16x16xf32>
    %5 = vector.broadcast %2 : f32 to vector<16x16xf32>
    %6 = arith.mulf %5, %4 : vector<16x16xf32>
    %7 = arith.addf %1, %6 : vector<16x16xf32>
    %c0_6 = arith.constant 0 : index
    %c1 = arith.constant 1 : index
    %8 = memref.load %arg2[%c0_6, %c1] : memref<7x3xf32, #tpu.memory_space<smem>>
    %c0_7 = arith.constant 0 : index
    %c1_8 = arith.constant 1 : index
    %c0_9 = arith.constant 0 : index
    %c0_10 = arith.constant 0 : index
    %9 = vector.load %arg1[%c0_7, %c1_8, %c0_9, %c0_10] : memref<1x3x16x16xf32, #tpu.memory_space<vmem>>, vector<1x1x16x16xf32>
    %10 = vector.shape_cast %9 : vector<1x1x16x16xf32> to vector<16x16xf32>
    %11 = vector.broadcast %8 : f32 to vector<16x16xf32>
    %12 = arith.mulf %11, %10 : vector<16x16xf32>
    %13 = arith.addf %7, %12 : vector<16x16xf32>
    %c0_11 = arith.constant 0 : index
    %c2 = arith.constant 2 : index
    %14 = memref.load %arg2[%c0_11, %c2] : memref<7x3xf32, #tpu.memory_space<smem>>
    %c0_12 = arith.constant 0 : index
    %c2_13 = arith.constant 2 : index
    %c0_14 = arith.constant 0 : index
    %c0_15 = arith.constant 0 : index
    %15 = vector.load %arg1[%c0_12, %c2_13, %c0_14, %c0_15] : memref<1x3x16x16xf32, #tpu.memory_space<vmem>>, vector<1x1x16x16xf32>
    %16 = vector.shape_cast %15 : vector<1x1x16x16xf32> to vector<16x16xf32>
    %17 = vector.broadcast %14 : f32 to vector<16x16xf32>
    %18 = arith.mulf %17, %16 : vector<16x16xf32>
    %19 = arith.addf %13, %18 : vector<16x16xf32>
    %c0_16 = arith.constant 0 : index
    %20 = memref.load %arg3[%c0_16] : memref<7xf32, #tpu.memory_space<smem>>
    %21 = vector.broadcast %20 : f32 to vector<18x18xf32>
    %c0_17 = arith.constant 0 : index
    %c0_18 = arith.constant 0 : index
    %c0_19 = arith.constant 0 : index
    %22 = vector.load %arg9[%c0_17, %c0_18, %c0_19] : memref<7x18x18xf32, #tpu.memory_space<vmem>>, vector<1x18x18xf32>
    %23 = vector.shape_cast %22 : vector<1x18x18xf32> to vector<18x18xf32>
    %24 = vector.shape_cast %21 : vector<18x18xf32> to vector<1x18x18xf32>
    tpu.vector_store %arg9[%c0_17, %c0_18, %c0_19], %24 {strides = array<i32>} : memref<7x18x18xf32, #tpu.memory_space<vmem>>, vector<1x18x18xf32>,
    %c0_20 = arith.constant 0 : index
    %c1_21 = arith.constant 1 : index
    %c1_22 = arith.constant 1 : index
    %25 = vector.load %arg9[%c0_20, %c1_21, %c1_22] : memref<7x18x18xf32, #tpu.memory_space<vmem>>, vector<1x16x16xf32>
    %26 = vector.shape_cast %25 : vector<1x16x16xf32> to vector<16x16xf32>
    %27 = vector.shape_cast %19 : vector<16x16xf32> to vector<1x16x16xf32>
    tpu.vector_store %arg9[%c0_20, %c1_21, %c1_22], %27 {strides = array<i32>} : memref<7x18x18xf32, #tpu.memory_space<vmem>>, vector<1x16x16xf32>,
    %c1_23 = arith.constant 1 : index
    %28 = memref.load %arg3[%c1_23] : memref<7xf32, #tpu.memory_space<smem>>
    %29 = vector.broadcast %28 : f32 to vector<16x16xf32>
    %c1_24 = arith.constant 1 : index
    %c0_25 = arith.constant 0 : index
    %30 = memref.load %arg2[%c1_24, %c0_25] : memref<7x3xf32, #tpu.memory_space<smem>>
    %c0_26 = arith.constant 0 : index
    %c0_27 = arith.constant 0 : index
    %c0_28 = arith.constant 0 : index
    %c0_29 = arith.constant 0 : index
    %31 = vector.load %arg1[%c0_26, %c0_27, %c0_28, %c0_29] : memref<1x3x16x16xf32, #tpu.memory_space<vmem>>, vector<1x1x16x16xf32>
    %32 = vector.shape_cast %31 : vector<1x1x16x16xf32> to vector<16x16xf32>
    %33 = vector.broadcast %30 : f32 to vector<16x16xf32>
    %34 = arith.mulf %33, %32 : vector<16x16xf32>
    %35 = arith.addf %29, %34 : vector<16x16xf32>
    %c1_30 = arith.constant 1 : index
    %c1_31 = arith.constant 1 : index
    %36 = memref.load %arg2[%c1_30, %c1_31] : memref<7x3xf32, #tpu.memory_space<smem>>
    %c0_32 = arith.constant 0 : index
    %c1_33 = arith.constant 1 : index
    %c0_34 = arith.constant 0 : index
    %c0_35 = arith.constant 0 : index
    %37 = vector.load %arg1[%c0_32, %c1_33, %c0_34, %c0_35] : memref<1x3x16x16xf32, #tpu.memory_space<vmem>>, vector<1x1x16x16xf32>
    %38 = vector.shape_cast %37 : vector<1x1x16x16xf32> to vector<16x16xf32>
    %39 = vector.broadcast %36 : f32 to vector<16x16xf32>
    %40 = arith.mulf %39, %38 : vector<16x16xf32>
    %41 = arith.addf %35, %40 : vector<16x16xf32>
    %c1_36 = arith.constant 1 : index
    %c2_37 = arith.constant 2 : index
    %42 = memref.load %arg2[%c1_36, %c2_37] : memref<7x3xf32, #tpu.memory_space<smem>>
    %c0_38 = arith.constant 0 : index
    %c2_39 = arith.constant 2 : index
    %c0_40 = arith.constant 0 : index
    %c0_41 = arith.constant 0 : index
    %43 = vector.load %arg1[%c0_38, %c2_39, %c0_40, %c0_41] : memref<1x3x16x16xf32, #tpu.memory_space<vmem>>, vector<1x1x16x16xf32>
    %44 = vector.shape_cast %43 : vector<1x1x16x16xf32> to vector<16x16xf32>
    %45 = vector.broadcast %42 : f32 to vector<16x16xf32>
    %46 = arith.mulf %45, %44 : vector<16x16xf32>
    %47 = arith.addf %41, %46 : vector<16x16xf32>
    %c1_42 = arith.constant 1 : index
    %48 = memref.load %arg3[%c1_42] : memref<7xf32, #tpu.memory_space<smem>>
    %49 = vector.broadcast %48 : f32 to vector<18x18xf32>
    %c1_43 = arith.constant 1 : index
    %c0_44 = arith.constant 0 : index
    %c0_45 = arith.constant 0 : index
    %50 = vector.load %arg9[%c1_43, %c0_44, %c0_45] : memref<7x18x18xf32, #tpu.memory_space<vmem>>, vector<1x18x18xf32>
    %51 = vector.shape_cast %50 : vector<1x18x18xf32> to vector<18x18xf32>
    %52 = vector.shape_cast %49 : vector<18x18xf32> to vector<1x18x18xf32>
    tpu.vector_store %arg9[%c1_43, %c0_44, %c0_45], %52 {strides = array<i32>} : memref<7x18x18xf32, #tpu.memory_space<vmem>>, vector<1x18x18xf32>,
    %c1_46 = arith.constant 1 : index
    %c1_47 = arith.constant 1 : index
    %c1_48 = arith.constant 1 : index
    %53 = vector.load %arg9[%c1_46, %c1_47, %c1_48] : memref<7x18x18xf32, #tpu.memory_space<vmem>>, vector<1x16x16xf32>
    %54 = vector.shape_cast %53 : vector<1x16x16xf32> to vector<16x16xf32>
    %55 = vector.shape_cast %47 : vector<16x16xf32> to vector<1x16x16xf32>
    tpu.vector_store %arg9[%c1_46, %c1_47, %c1_48], %55 {strides = array<i32>} : memref<7x18x18xf32, #tpu.memory_space<vmem>>, vector<1x16x16xf32>,
    %c2_49 = arith.constant 2 : index
    %56 = memref.load %arg3[%c2_49] : memref<7xf32, #tpu.memory_space<smem>>
    %57 = vector.broadcast %56 : f32 to vector<16x16xf32>
    %c2_50 = arith.constant 2 : index
    %c0_51 = arith.constant 0 : index
    %58 = memref.load %arg2[%c2_50, %c0_51] : memref<7x3xf32, #tpu.memory_space<smem>>
    %c0_52 = arith.constant 0 : index
    %c0_53 = arith.constant 0 : index
    %c0_54 = arith.constant 0 : index
    %c0_55 = arith.constant 0 : index
    %59 = vector.load %arg1[%c0_52, %c0_53, %c0_54, %c0_55] : memref<1x3x16x16xf32, #tpu.memory_space<vmem>>, vector<1x1x16x16xf32>
    %60 = vector.shape_cast %59 : vector<1x1x16x16xf32> to vector<16x16xf32>
    %61 = vector.broadcast %58 : f32 to vector<16x16xf32>
    %62 = arith.mulf %61, %60 : vector<16x16xf32>
    %63 = arith.addf %57, %62 : vector<16x16xf32>
    %c2_56 = arith.constant 2 : index
    %c1_57 = arith.constant 1 : index
    %64 = memref.load %arg2[%c2_56, %c1_57] : memref<7x3xf32, #tpu.memory_space<smem>>
    %c0_58 = arith.constant 0 : index
    %c1_59 = arith.constant 1 : index
    %c0_60 = arith.constant 0 : index
    %c0_61 = arith.constant 0 : index
    %65 = vector.load %arg1[%c0_58, %c1_59, %c0_60, %c0_61] : memref<1x3x16x16xf32, #tpu.memory_space<vmem>>, vector<1x1x16x16xf32>
    %66 = vector.shape_cast %65 : vector<1x1x16x16xf32> to vector<16x16xf32>
    %67 = vector.broadcast %64 : f32 to vector<16x16xf32>
    %68 = arith.mulf %67, %66 : vector<16x16xf32>
    %69 = arith.addf %63, %68 : vector<16x16xf32>
    %c2_62 = arith.constant 2 : index
    %c2_63 = arith.constant 2 : index
    %70 = memref.load %arg2[%c2_62, %c2_63] : memref<7x3xf32, #tpu.memory_space<smem>>
    %c0_64 = arith.constant 0 : index
    %c2_65 = arith.constant 2 : index
    %c0_66 = arith.constant 0 : index
    %c0_67 = arith.constant 0 : index
    %71 = vector.load %arg1[%c0_64, %c2_65, %c0_66, %c0_67] : memref<1x3x16x16xf32, #tpu.memory_space<vmem>>, vector<1x1x16x16xf32>
    %72 = vector.shape_cast %71 : vector<1x1x16x16xf32> to vector<16x16xf32>
    %73 = vector.broadcast %70 : f32 to vector<16x16xf32>
    %74 = arith.mulf %73, %72 : vector<16x16xf32>
    %75 = arith.addf %69, %74 : vector<16x16xf32>
    %c2_68 = arith.constant 2 : index
    %76 = memref.load %arg3[%c2_68] : memref<7xf32, #tpu.memory_space<smem>>
    %77 = vector.broadcast %76 : f32 to vector<18x18xf32>
    %c2_69 = arith.constant 2 : index
    %c0_70 = arith.constant 0 : index
    %c0_71 = arith.constant 0 : index
    %78 = vector.load %arg9[%c2_69, %c0_70, %c0_71] : memref<7x18x18xf32, #tpu.memory_space<vmem>>, vector<1x18x18xf32>
    %79 = vector.shape_cast %78 : vector<1x18x18xf32> to vector<18x18xf32>
    %80 = vector.shape_cast %77 : vector<18x18xf32> to vector<1x18x18xf32>
    tpu.vector_store %arg9[%c2_69, %c0_70, %c0_71], %80 {strides = array<i32>} : memref<7x18x18xf32, #tpu.memory_space<vmem>>, vector<1x18x18xf32>,
    %c2_72 = arith.constant 2 : index
    %c1_73 = arith.constant 1 : index
    %c1_74 = arith.constant 1 : index
    %81 = vector.load %arg9[%c2_72, %c1_73, %c1_74] : memref<7x18x18xf32, #tpu.memory_space<vmem>>, vector<1x16x16xf32>
    %82 = vector.shape_cast %81 : vector<1x16x16xf32> to vector<16x16xf32>
    %83 = vector.shape_cast %75 : vector<16x16xf32> to vector<1x16x16xf32>
    tpu.vector_store %arg9[%c2_72, %c1_73, %c1_74], %83 {strides = array<i32>} : memref<7x18x18xf32, #tpu.memory_space<vmem>>, vector<1x16x16xf32>,
    %c3 = arith.constant 3 : index
    %84 = memref.load %arg3[%c3] : memref<7xf32, #tpu.memory_space<smem>>
    %85 = vector.broadcast %84 : f32 to vector<16x16xf32>
    %c3_75 = arith.constant 3 : index
    %c0_76 = arith.constant 0 : index
    %86 = memref.load %arg2[%c3_75, %c0_76] : memref<7x3xf32, #tpu.memory_space<smem>>
    %c0_77 = arith.constant 0 : index
    %c0_78 = arith.constant 0 : index
    %c0_79 = arith.constant 0 : index
    %c0_80 = arith.constant 0 : index
    %87 = vector.load %arg1[%c0_77, %c0_78, %c0_79, %c0_80] : memref<1x3x16x16xf32, #tpu.memory_space<vmem>>, vector<1x1x16x16xf32>
    %88 = vector.shape_cast %87 : vector<1x1x16x16xf32> to vector<16x16xf32>
    %89 = vector.broadcast %86 : f32 to vector<16x16xf32>
    %90 = arith.mulf %89, %88 : vector<16x16xf32>
    %91 = arith.addf %85, %90 : vector<16x16xf32>
    %c3_81 = arith.constant 3 : index
    %c1_82 = arith.constant 1 : index
    %92 = memref.load %arg2[%c3_81, %c1_82] : memref<7x3xf32, #tpu.memory_space<smem>>
    %c0_83 = arith.constant 0 : index
    %c1_84 = arith.constant 1 : index
    %c0_85 = arith.constant 0 : index
    %c0_86 = arith.constant 0 : index
    %93 = vector.load %arg1[%c0_83, %c1_84, %c0_85, %c0_86] : memref<1x3x16x16xf32, #tpu.memory_space<vmem>>, vector<1x1x16x16xf32>
    %94 = vector.shape_cast %93 : vector<1x1x16x16xf32> to vector<16x16xf32>
    %95 = vector.broadcast %92 : f32 to vector<16x16xf32>
    %96 = arith.mulf %95, %94 : vector<16x16xf32>
    %97 = arith.addf %91, %96 : vector<16x16xf32>
    %c3_87 = arith.constant 3 : index
    %c2_88 = arith.constant 2 : index
    %98 = memref.load %arg2[%c3_87, %c2_88] : memref<7x3xf32, #tpu.memory_space<smem>>
    %c0_89 = arith.constant 0 : index
    %c2_90 = arith.constant 2 : index
    %c0_91 = arith.constant 0 : index
    %c0_92 = arith.constant 0 : index
    %99 = vector.load %arg1[%c0_89, %c2_90, %c0_91, %c0_92] : memref<1x3x16x16xf32, #tpu.memory_space<vmem>>, vector<1x1x16x16xf32>
    %100 = vector.shape_cast %99 : vector<1x1x16x16xf32> to vector<16x16xf32>
    %101 = vector.broadcast %98 : f32 to vector<16x16xf32>
    %102 = arith.mulf %101, %100 : vector<16x16xf32>
    %103 = arith.addf %97, %102 : vector<16x16xf32>
    %c3_93 = arith.constant 3 : index
    %104 = memref.load %arg3[%c3_93] : memref<7xf32, #tpu.memory_space<smem>>
    %105 = vector.broadcast %104 : f32 to vector<18x18xf32>
    %c3_94 = arith.constant 3 : index
    %c0_95 = arith.constant 0 : index
    %c0_96 = arith.constant 0 : index
    %106 = vector.load %arg9[%c3_94, %c0_95, %c0_96] : memref<7x18x18xf32, #tpu.memory_space<vmem>>, vector<1x18x18xf32>
    %107 = vector.shape_cast %106 : vector<1x18x18xf32> to vector<18x18xf32>
    %108 = vector.shape_cast %105 : vector<18x18xf32> to vector<1x18x18xf32>
    tpu.vector_store %arg9[%c3_94, %c0_95, %c0_96], %108 {strides = array<i32>} : memref<7x18x18xf32, #tpu.memory_space<vmem>>, vector<1x18x18xf32>,
    %c3_97 = arith.constant 3 : index
    %c1_98 = arith.constant 1 : index
    %c1_99 = arith.constant 1 : index
    %109 = vector.load %arg9[%c3_97, %c1_98, %c1_99] : memref<7x18x18xf32, #tpu.memory_space<vmem>>, vector<1x16x16xf32>
    %110 = vector.shape_cast %109 : vector<1x16x16xf32> to vector<16x16xf32>
    %111 = vector.shape_cast %103 : vector<16x16xf32> to vector<1x16x16xf32>
    tpu.vector_store %arg9[%c3_97, %c1_98, %c1_99], %111 {strides = array<i32>} : memref<7x18x18xf32, #tpu.memory_space<vmem>>, vector<1x16x16xf32>,
    %c4 = arith.constant 4 : index
    %112 = memref.load %arg3[%c4] : memref<7xf32, #tpu.memory_space<smem>>
    %113 = vector.broadcast %112 : f32 to vector<16x16xf32>
    %c4_100 = arith.constant 4 : index
    %c0_101 = arith.constant 0 : index
    %114 = memref.load %arg2[%c4_100, %c0_101] : memref<7x3xf32, #tpu.memory_space<smem>>
    %c0_102 = arith.constant 0 : index
    %c0_103 = arith.constant 0 : index
    %c0_104 = arith.constant 0 : index
    %c0_105 = arith.constant 0 : index
    %115 = vector.load %arg1[%c0_102, %c0_103, %c0_104, %c0_105] : memref<1x3x16x16xf32, #tpu.memory_space<vmem>>, vector<1x1x16x16xf32>
    %116 = vector.shape_cast %115 : vector<1x1x16x16xf32> to vector<16x16xf32>
    %117 = vector.broadcast %114 : f32 to vector<16x16xf32>
    %118 = arith.mulf %117, %116 : vector<16x16xf32>
    %119 = arith.addf %113, %118 : vector<16x16xf32>
    %c4_106 = arith.constant 4 : index
    %c1_107 = arith.constant 1 : index
    %120 = memref.load %arg2[%c4_106, %c1_107] : memref<7x3xf32, #tpu.memory_space<smem>>
    %c0_108 = arith.constant 0 : index
    %c1_109 = arith.constant 1 : index
    %c0_110 = arith.constant 0 : index
    %c0_111 = arith.constant 0 : index
    %121 = vector.load %arg1[%c0_108, %c1_109, %c0_110, %c0_111] : memref<1x3x16x16xf32, #tpu.memory_space<vmem>>, vector<1x1x16x16xf32>
    %122 = vector.shape_cast %121 : vector<1x1x16x16xf32> to vector<16x16xf32>
    %123 = vector.broadcast %120 : f32 to vector<16x16xf32>
    %124 = arith.mulf %123, %122 : vector<16x16xf32>
    %125 = arith.addf %119, %124 : vector<16x16xf32>
    %c4_112 = arith.constant 4 : index
    %c2_113 = arith.constant 2 : index
    %126 = memref.load %arg2[%c4_112, %c2_113] : memref<7x3xf32, #tpu.memory_space<smem>>
    %c0_114 = arith.constant 0 : index
    %c2_115 = arith.constant 2 : index
    %c0_116 = arith.constant 0 : index
    %c0_117 = arith.constant 0 : index
    %127 = vector.load %arg1[%c0_114, %c2_115, %c0_116, %c0_117] : memref<1x3x16x16xf32, #tpu.memory_space<vmem>>, vector<1x1x16x16xf32>
    %128 = vector.shape_cast %127 : vector<1x1x16x16xf32> to vector<16x16xf32>
    %129 = vector.broadcast %126 : f32 to vector<16x16xf32>
    %130 = arith.mulf %129, %128 : vector<16x16xf32>
    %131 = arith.addf %125, %130 : vector<16x16xf32>
    %c4_118 = arith.constant 4 : index
    %132 = memref.load %arg3[%c4_118] : memref<7xf32, #tpu.memory_space<smem>>
    %133 = vector.broadcast %132 : f32 to vector<18x18xf32>
    %c4_119 = arith.constant 4 : index
    %c0_120 = arith.constant 0 : index
    %c0_121 = arith.constant 0 : index
    %134 = vector.load %arg9[%c4_119, %c0_120, %c0_121] : memref<7x18x18xf32, #tpu.memory_space<vmem>>, vector<1x18x18xf32>
    %135 = vector.shape_cast %134 : vector<1x18x18xf32> to vector<18x18xf32>
    %136 = vector.shape_cast %133 : vector<18x18xf32> to vector<1x18x18xf32>
    tpu.vector_store %arg9[%c4_119, %c0_120, %c0_121], %136 {strides = array<i32>} : memref<7x18x18xf32, #tpu.memory_space<vmem>>, vector<1x18x18xf32>,
    %c4_122 = arith.constant 4 : index
    %c1_123 = arith.constant 1 : index
    %c1_124 = arith.constant 1 : index
    %137 = vector.load %arg9[%c4_122, %c1_123, %c1_124] : memref<7x18x18xf32, #tpu.memory_space<vmem>>, vector<1x16x16xf32>
    %138 = vector.shape_cast %137 : vector<1x16x16xf32> to vector<16x16xf32>
    %139 = vector.shape_cast %131 : vector<16x16xf32> to vector<1x16x16xf32>
    tpu.vector_store %arg9[%c4_122, %c1_123, %c1_124], %139 {strides = array<i32>} : memref<7x18x18xf32, #tpu.memory_space<vmem>>, vector<1x16x16xf32>,
    %c5 = arith.constant 5 : index
    %140 = memref.load %arg3[%c5] : memref<7xf32, #tpu.memory_space<smem>>
    %141 = vector.broadcast %140 : f32 to vector<16x16xf32>
    %c5_125 = arith.constant 5 : index
    %c0_126 = arith.constant 0 : index
    %142 = memref.load %arg2[%c5_125, %c0_126] : memref<7x3xf32, #tpu.memory_space<smem>>
    %c0_127 = arith.constant 0 : index
    %c0_128 = arith.constant 0 : index
    %c0_129 = arith.constant 0 : index
    %c0_130 = arith.constant 0 : index
    %143 = vector.load %arg1[%c0_127, %c0_128, %c0_129, %c0_130] : memref<1x3x16x16xf32, #tpu.memory_space<vmem>>, vector<1x1x16x16xf32>
    %144 = vector.shape_cast %143 : vector<1x1x16x16xf32> to vector<16x16xf32>
    %145 = vector.broadcast %142 : f32 to vector<16x16xf32>
    %146 = arith.mulf %145, %144 : vector<16x16xf32>
    %147 = arith.addf %141, %146 : vector<16x16xf32>
    %c5_131 = arith.constant 5 : index
    %c1_132 = arith.constant 1 : index
    %148 = memref.load %arg2[%c5_131, %c1_132] : memref<7x3xf32, #tpu.memory_space<smem>>
    %c0_133 = arith.constant 0 : index
    %c1_134 = arith.constant 1 : index
    %c0_135 = arith.constant 0 : index
    %c0_136 = arith.constant 0 : index
    %149 = vector.load %arg1[%c0_133, %c1_134, %c0_135, %c0_136] : memref<1x3x16x16xf32, #tpu.memory_space<vmem>>, vector<1x1x16x16xf32>
    %150 = vector.shape_cast %149 : vector<1x1x16x16xf32> to vector<16x16xf32>
    %151 = vector.broadcast %148 : f32 to vector<16x16xf32>
    %152 = arith.mulf %151, %150 : vector<16x16xf32>
    %153 = arith.addf %147, %152 : vector<16x16xf32>
    %c5_137 = arith.constant 5 : index
    %c2_138 = arith.constant 2 : index
    %154 = memref.load %arg2[%c5_137, %c2_138] : memref<7x3xf32, #tpu.memory_space<smem>>
    %c0_139 = arith.constant 0 : index
    %c2_140 = arith.constant 2 : index
    %c0_141 = arith.constant 0 : index
    %c0_142 = arith.constant 0 : index
    %155 = vector.load %arg1[%c0_139, %c2_140, %c0_141, %c0_142] : memref<1x3x16x16xf32, #tpu.memory_space<vmem>>, vector<1x1x16x16xf32>
    %156 = vector.shape_cast %155 : vector<1x1x16x16xf32> to vector<16x16xf32>
    %157 = vector.broadcast %154 : f32 to vector<16x16xf32>
    %158 = arith.mulf %157, %156 : vector<16x16xf32>
    %159 = arith.addf %153, %158 : vector<16x16xf32>
    %c5_143 = arith.constant 5 : index
    %160 = memref.load %arg3[%c5_143] : memref<7xf32, #tpu.memory_space<smem>>
    %161 = vector.broadcast %160 : f32 to vector<18x18xf32>
    %c5_144 = arith.constant 5 : index
    %c0_145 = arith.constant 0 : index
    %c0_146 = arith.constant 0 : index
    %162 = vector.load %arg9[%c5_144, %c0_145, %c0_146] : memref<7x18x18xf32, #tpu.memory_space<vmem>>, vector<1x18x18xf32>
    %163 = vector.shape_cast %162 : vector<1x18x18xf32> to vector<18x18xf32>
    %164 = vector.shape_cast %161 : vector<18x18xf32> to vector<1x18x18xf32>
    tpu.vector_store %arg9[%c5_144, %c0_145, %c0_146], %164 {strides = array<i32>} : memref<7x18x18xf32, #tpu.memory_space<vmem>>, vector<1x18x18xf32>,
    %c5_147 = arith.constant 5 : index
    %c1_148 = arith.constant 1 : index
    %c1_149 = arith.constant 1 : index
    %165 = vector.load %arg9[%c5_147, %c1_148, %c1_149] : memref<7x18x18xf32, #tpu.memory_space<vmem>>, vector<1x16x16xf32>
    %166 = vector.shape_cast %165 : vector<1x16x16xf32> to vector<16x16xf32>
    %167 = vector.shape_cast %159 : vector<16x16xf32> to vector<1x16x16xf32>
    tpu.vector_store %arg9[%c5_147, %c1_148, %c1_149], %167 {strides = array<i32>} : memref<7x18x18xf32, #tpu.memory_space<vmem>>, vector<1x16x16xf32>,
    %c6 = arith.constant 6 : index
    %168 = memref.load %arg3[%c6] : memref<7xf32, #tpu.memory_space<smem>>
    %169 = vector.broadcast %168 : f32 to vector<16x16xf32>
    %c6_150 = arith.constant 6 : index
    %c0_151 = arith.constant 0 : index
    %170 = memref.load %arg2[%c6_150, %c0_151] : memref<7x3xf32, #tpu.memory_space<smem>>
    %c0_152 = arith.constant 0 : index
    %c0_153 = arith.constant 0 : index
    %c0_154 = arith.constant 0 : index
    %c0_155 = arith.constant 0 : index
    %171 = vector.load %arg1[%c0_152, %c0_153, %c0_154, %c0_155] : memref<1x3x16x16xf32, #tpu.memory_space<vmem>>, vector<1x1x16x16xf32>
    %172 = vector.shape_cast %171 : vector<1x1x16x16xf32> to vector<16x16xf32>
    %173 = vector.broadcast %170 : f32 to vector<16x16xf32>
    %174 = arith.mulf %173, %172 : vector<16x16xf32>
    %175 = arith.addf %169, %174 : vector<16x16xf32>
    %c6_156 = arith.constant 6 : index
    %c1_157 = arith.constant 1 : index
    %176 = memref.load %arg2[%c6_156, %c1_157] : memref<7x3xf32, #tpu.memory_space<smem>>
    %c0_158 = arith.constant 0 : index
    %c1_159 = arith.constant 1 : index
    %c0_160 = arith.constant 0 : index
    %c0_161 = arith.constant 0 : index
    %177 = vector.load %arg1[%c0_158, %c1_159, %c0_160, %c0_161] : memref<1x3x16x16xf32, #tpu.memory_space<vmem>>, vector<1x1x16x16xf32>
    %178 = vector.shape_cast %177 : vector<1x1x16x16xf32> to vector<16x16xf32>
    %179 = vector.broadcast %176 : f32 to vector<16x16xf32>
    %180 = arith.mulf %179, %178 : vector<16x16xf32>
    %181 = arith.addf %175, %180 : vector<16x16xf32>
    %c6_162 = arith.constant 6 : index
    %c2_163 = arith.constant 2 : index
    %182 = memref.load %arg2[%c6_162, %c2_163] : memref<7x3xf32, #tpu.memory_space<smem>>
    %c0_164 = arith.constant 0 : index
    %c2_165 = arith.constant 2 : index
    %c0_166 = arith.constant 0 : index
    %c0_167 = arith.constant 0 : index
    %183 = vector.load %arg1[%c0_164, %c2_165, %c0_166, %c0_167] : memref<1x3x16x16xf32, #tpu.memory_space<vmem>>, vector<1x1x16x16xf32>
    %184 = vector.shape_cast %183 : vector<1x1x16x16xf32> to vector<16x16xf32>
    %185 = vector.broadcast %182 : f32 to vector<16x16xf32>
    %186 = arith.mulf %185, %184 : vector<16x16xf32>
    %187 = arith.addf %181, %186 : vector<16x16xf32>
    %c6_168 = arith.constant 6 : index
    %188 = memref.load %arg3[%c6_168] : memref<7xf32, #tpu.memory_space<smem>>
    %189 = vector.broadcast %188 : f32 to vector<18x18xf32>
    %c6_169 = arith.constant 6 : index
    %c0_170 = arith.constant 0 : index
    %c0_171 = arith.constant 0 : index
    %190 = vector.load %arg9[%c6_169, %c0_170, %c0_171] : memref<7x18x18xf32, #tpu.memory_space<vmem>>, vector<1x18x18xf32>
    %191 = vector.shape_cast %190 : vector<1x18x18xf32> to vector<18x18xf32>
    %192 = vector.shape_cast %189 : vector<18x18xf32> to vector<1x18x18xf32>
    tpu.vector_store %arg9[%c6_169, %c0_170, %c0_171], %192 {strides = array<i32>} : memref<7x18x18xf32, #tpu.memory_space<vmem>>, vector<1x18x18xf32>,
    %c6_172 = arith.constant 6 : index
    %c1_173 = arith.constant 1 : index
    %c1_174 = arith.constant 1 : index
    %193 = vector.load %arg9[%c6_172, %c1_173, %c1_174] : memref<7x18x18xf32, #tpu.memory_space<vmem>>, vector<1x16x16xf32>
    %194 = vector.shape_cast %193 : vector<1x16x16xf32> to vector<16x16xf32>
    %195 = vector.shape_cast %187 : vector<16x16xf32> to vector<1x16x16xf32>
    tpu.vector_store %arg9[%c6_172, %c1_173, %c1_174], %195 {strides = array<i32>} : memref<7x18x18xf32, #tpu.memory_space<vmem>>, vector<1x16x16xf32>,
    %c0_175 = arith.constant 0 : index
    %196 = memref.load %arg5[%c0_175] : memref<8xf32, #tpu.memory_space<smem>>
    %197 = vector.broadcast %196 : f32 to vector<18x18xf32>
    %c0_176 = arith.constant 0 : index
    %c0_177 = arith.constant 0 : index
    %198 = memref.load %arg4[%c0_176, %c0_177] : memref<8x7xf32, #tpu.memory_space<smem>>
    %c0_178 = arith.constant 0 : index
    %c0_179 = arith.constant 0 : index
    %c0_180 = arith.constant 0 : index
    %199 = vector.load %arg9[%c0_178, %c0_179, %c0_180] : memref<7x18x18xf32, #tpu.memory_space<vmem>>, vector<1x18x18xf32>
    %200 = vector.shape_cast %199 : vector<1x18x18xf32> to vector<18x18xf32>
    %201 = vector.broadcast %198 : f32 to vector<18x18xf32>
    %202 = arith.mulf %201, %200 : vector<18x18xf32>
    %203 = arith.addf %197, %202 : vector<18x18xf32>
    %c0_181 = arith.constant 0 : index
    %c1_182 = arith.constant 1 : index
    %204 = memref.load %arg4[%c0_181, %c1_182] : memref<8x7xf32, #tpu.memory_space<smem>>
    %c1_183 = arith.constant 1 : index
    %c0_184 = arith.constant 0 : index
    %c0_185 = arith.constant 0 : index
    %205 = vector.load %arg9[%c1_183, %c0_184, %c0_185] : memref<7x18x18xf32, #tpu.memory_space<vmem>>, vector<1x18x18xf32>
    %206 = vector.shape_cast %205 : vector<1x18x18xf32> to vector<18x18xf32>
    %207 = vector.broadcast %204 : f32 to vector<18x18xf32>
    %208 = arith.mulf %207, %206 : vector<18x18xf32>
    %209 = arith.addf %203, %208 : vector<18x18xf32>
    %c0_186 = arith.constant 0 : index
    %c2_187 = arith.constant 2 : index
    %210 = memref.load %arg4[%c0_186, %c2_187] : memref<8x7xf32, #tpu.memory_space<smem>>
    %c2_188 = arith.constant 2 : index
    %c0_189 = arith.constant 0 : index
    %c0_190 = arith.constant 0 : index
    %211 = vector.load %arg9[%c2_188, %c0_189, %c0_190] : memref<7x18x18xf32, #tpu.memory_space<vmem>>, vector<1x18x18xf32>
    %212 = vector.shape_cast %211 : vector<1x18x18xf32> to vector<18x18xf32>
    %213 = vector.broadcast %210 : f32 to vector<18x18xf32>
    %214 = arith.mulf %213, %212 : vector<18x18xf32>
    %215 = arith.addf %209, %214 : vector<18x18xf32>
    %c0_191 = arith.constant 0 : index
    %c3_192 = arith.constant 3 : index
    %216 = memref.load %arg4[%c0_191, %c3_192] : memref<8x7xf32, #tpu.memory_space<smem>>
    %c3_193 = arith.constant 3 : index
    %c0_194 = arith.constant 0 : index
    %c0_195 = arith.constant 0 : index
    %217 = vector.load %arg9[%c3_193, %c0_194, %c0_195] : memref<7x18x18xf32, #tpu.memory_space<vmem>>, vector<1x18x18xf32>
    %218 = vector.shape_cast %217 : vector<1x18x18xf32> to vector<18x18xf32>
    %219 = vector.broadcast %216 : f32 to vector<18x18xf32>
    %220 = arith.mulf %219, %218 : vector<18x18xf32>
    %221 = arith.addf %215, %220 : vector<18x18xf32>
    %c0_196 = arith.constant 0 : index
    %c4_197 = arith.constant 4 : index
    %222 = memref.load %arg4[%c0_196, %c4_197] : memref<8x7xf32, #tpu.memory_space<smem>>
    %c4_198 = arith.constant 4 : index
    %c0_199 = arith.constant 0 : index
    %c0_200 = arith.constant 0 : index
    %223 = vector.load %arg9[%c4_198, %c0_199, %c0_200] : memref<7x18x18xf32, #tpu.memory_space<vmem>>, vector<1x18x18xf32>
    %224 = vector.shape_cast %223 : vector<1x18x18xf32> to vector<18x18xf32>
    %225 = vector.broadcast %222 : f32 to vector<18x18xf32>
    %226 = arith.mulf %225, %224 : vector<18x18xf32>
    %227 = arith.addf %221, %226 : vector<18x18xf32>
    %c0_201 = arith.constant 0 : index
    %c5_202 = arith.constant 5 : index
    %228 = memref.load %arg4[%c0_201, %c5_202] : memref<8x7xf32, #tpu.memory_space<smem>>
    %c5_203 = arith.constant 5 : index
    %c0_204 = arith.constant 0 : index
    %c0_205 = arith.constant 0 : index
    %229 = vector.load %arg9[%c5_203, %c0_204, %c0_205] : memref<7x18x18xf32, #tpu.memory_space<vmem>>, vector<1x18x18xf32>
    %230 = vector.shape_cast %229 : vector<1x18x18xf32> to vector<18x18xf32>
    %231 = vector.broadcast %228 : f32 to vector<18x18xf32>
    %232 = arith.mulf %231, %230 : vector<18x18xf32>
    %233 = arith.addf %227, %232 : vector<18x18xf32>
    %c0_206 = arith.constant 0 : index
    %c6_207 = arith.constant 6 : index
    %234 = memref.load %arg4[%c0_206, %c6_207] : memref<8x7xf32, #tpu.memory_space<smem>>
    %c6_208 = arith.constant 6 : index
    %c0_209 = arith.constant 0 : index
    %c0_210 = arith.constant 0 : index
    %235 = vector.load %arg9[%c6_208, %c0_209, %c0_210] : memref<7x18x18xf32, #tpu.memory_space<vmem>>, vector<1x18x18xf32>
    %236 = vector.shape_cast %235 : vector<1x18x18xf32> to vector<18x18xf32>
    %237 = vector.broadcast %234 : f32 to vector<18x18xf32>
    %238 = arith.mulf %237, %236 : vector<18x18xf32>
    %239 = arith.addf %233, %238 : vector<18x18xf32>
    %c0_211 = arith.constant 0 : index
    %240 = memref.load %arg5[%c0_211] : memref<8xf32, #tpu.memory_space<smem>>
    %241 = vector.broadcast %240 : f32 to vector<20x20xf32>
    %c0_212 = arith.constant 0 : index
    %c0_213 = arith.constant 0 : index
    %c0_214 = arith.constant 0 : index
    %242 = vector.load %arg10[%c0_212, %c0_213, %c0_214] : memref<8x20x20xf32, #tpu.memory_space<vmem>>, vector<1x20x20xf32>
    %243 = vector.shape_cast %242 : vector<1x20x20xf32> to vector<20x20xf32>
    %244 = vector.shape_cast %241 : vector<20x20xf32> to vector<1x20x20xf32>
    tpu.vector_store %arg10[%c0_212, %c0_213, %c0_214], %244 {strides = array<i32>} : memref<8x20x20xf32, #tpu.memory_space<vmem>>, vector<1x20x20xf32>,
    %c0_215 = arith.constant 0 : index
    %c1_216 = arith.constant 1 : index
    %c1_217 = arith.constant 1 : index
    %245 = vector.load %arg10[%c0_215, %c1_216, %c1_217] : memref<8x20x20xf32, #tpu.memory_space<vmem>>, vector<1x18x18xf32>
    %246 = vector.shape_cast %245 : vector<1x18x18xf32> to vector<18x18xf32>
    %247 = vector.shape_cast %239 : vector<18x18xf32> to vector<1x18x18xf32>
    tpu.vector_store %arg10[%c0_215, %c1_216, %c1_217], %247 {strides = array<i32>} : memref<8x20x20xf32, #tpu.memory_space<vmem>>, vector<1x18x18xf32>,
    %c1_218 = arith.constant 1 : index
    %248 = memref.load %arg5[%c1_218] : memref<8xf32, #tpu.memory_space<smem>>
    %249 = vector.broadcast %248 : f32 to vector<18x18xf32>
    %c1_219 = arith.constant 1 : index
    %c0_220 = arith.constant 0 : index
    %250 = memref.load %arg4[%c1_219, %c0_220] : memref<8x7xf32, #tpu.memory_space<smem>>
    %c0_221 = arith.constant 0 : index
    %c0_222 = arith.constant 0 : index
    %c0_223 = arith.constant 0 : index
    %251 = vector.load %arg9[%c0_221, %c0_222, %c0_223] : memref<7x18x18xf32, #tpu.memory_space<vmem>>, vector<1x18x18xf32>
    %252 = vector.shape_cast %251 : vector<1x18x18xf32> to vector<18x18xf32>
    %253 = vector.broadcast %250 : f32 to vector<18x18xf32>
    %254 = arith.mulf %253, %252 : vector<18x18xf32>
    %255 = arith.addf %249, %254 : vector<18x18xf32>
    %c1_224 = arith.constant 1 : index
    %c1_225 = arith.constant 1 : index
    %256 = memref.load %arg4[%c1_224, %c1_225] : memref<8x7xf32, #tpu.memory_space<smem>>
    %c1_226 = arith.constant 1 : index
    %c0_227 = arith.constant 0 : index
    %c0_228 = arith.constant 0 : index
    %257 = vector.load %arg9[%c1_226, %c0_227, %c0_228] : memref<7x18x18xf32, #tpu.memory_space<vmem>>, vector<1x18x18xf32>
    %258 = vector.shape_cast %257 : vector<1x18x18xf32> to vector<18x18xf32>
    %259 = vector.broadcast %256 : f32 to vector<18x18xf32>
    %260 = arith.mulf %259, %258 : vector<18x18xf32>
    %261 = arith.addf %255, %260 : vector<18x18xf32>
    %c1_229 = arith.constant 1 : index
    %c2_230 = arith.constant 2 : index
    %262 = memref.load %arg4[%c1_229, %c2_230] : memref<8x7xf32, #tpu.memory_space<smem>>
    %c2_231 = arith.constant 2 : index
    %c0_232 = arith.constant 0 : index
    %c0_233 = arith.constant 0 : index
    %263 = vector.load %arg9[%c2_231, %c0_232, %c0_233] : memref<7x18x18xf32, #tpu.memory_space<vmem>>, vector<1x18x18xf32>
    %264 = vector.shape_cast %263 : vector<1x18x18xf32> to vector<18x18xf32>
    %265 = vector.broadcast %262 : f32 to vector<18x18xf32>
    %266 = arith.mulf %265, %264 : vector<18x18xf32>
    %267 = arith.addf %261, %266 : vector<18x18xf32>
    %c1_234 = arith.constant 1 : index
    %c3_235 = arith.constant 3 : index
    %268 = memref.load %arg4[%c1_234, %c3_235] : memref<8x7xf32, #tpu.memory_space<smem>>
    %c3_236 = arith.constant 3 : index
    %c0_237 = arith.constant 0 : index
    %c0_238 = arith.constant 0 : index
    %269 = vector.load %arg9[%c3_236, %c0_237, %c0_238] : memref<7x18x18xf32, #tpu.memory_space<vmem>>, vector<1x18x18xf32>
    %270 = vector.shape_cast %269 : vector<1x18x18xf32> to vector<18x18xf32>
    %271 = vector.broadcast %268 : f32 to vector<18x18xf32>
    %272 = arith.mulf %271, %270 : vector<18x18xf32>
    %273 = arith.addf %267, %272 : vector<18x18xf32>
    %c1_239 = arith.constant 1 : index
    %c4_240 = arith.constant 4 : index
    %274 = memref.load %arg4[%c1_239, %c4_240] : memref<8x7xf32, #tpu.memory_space<smem>>
    %c4_241 = arith.constant 4 : index
    %c0_242 = arith.constant 0 : index
    %c0_243 = arith.constant 0 : index
    %275 = vector.load %arg9[%c4_241, %c0_242, %c0_243] : memref<7x18x18xf32, #tpu.memory_space<vmem>>, vector<1x18x18xf32>
    %276 = vector.shape_cast %275 : vector<1x18x18xf32> to vector<18x18xf32>
    %277 = vector.broadcast %274 : f32 to vector<18x18xf32>
    %278 = arith.mulf %277, %276 : vector<18x18xf32>
    %279 = arith.addf %273, %278 : vector<18x18xf32>
    %c1_244 = arith.constant 1 : index
    %c5_245 = arith.constant 5 : index
    %280 = memref.load %arg4[%c1_244, %c5_245] : memref<8x7xf32, #tpu.memory_space<smem>>
    %c5_246 = arith.constant 5 : index
    %c0_247 = arith.constant 0 : index
    %c0_248 = arith.constant 0 : index
    %281 = vector.load %arg9[%c5_246, %c0_247, %c0_248] : memref<7x18x18xf32, #tpu.memory_space<vmem>>, vector<1x18x18xf32>
    %282 = vector.shape_cast %281 : vector<1x18x18xf32> to vector<18x18xf32>
    %283 = vector.broadcast %280 : f32 to vector<18x18xf32>
    %284 = arith.mulf %283, %282 : vector<18x18xf32>
    %285 = arith.addf %279, %284 : vector<18x18xf32>
    %c1_249 = arith.constant 1 : index
    %c6_250 = arith.constant 6 : index
    %286 = memref.load %arg4[%c1_249, %c6_250] : memref<8x7xf32, #tpu.memory_space<smem>>
    %c6_251 = arith.constant 6 : index
    %c0_252 = arith.constant 0 : index
    %c0_253 = arith.constant 0 : index
    %287 = vector.load %arg9[%c6_251, %c0_252, %c0_253] : memref<7x18x18xf32, #tpu.memory_space<vmem>>, vector<1x18x18xf32>
    %288 = vector.shape_cast %287 : vector<1x18x18xf32> to vector<18x18xf32>
    %289 = vector.broadcast %286 : f32 to vector<18x18xf32>
    %290 = arith.mulf %289, %288 : vector<18x18xf32>
    %291 = arith.addf %285, %290 : vector<18x18xf32>
    %c1_254 = arith.constant 1 : index
    %292 = memref.load %arg5[%c1_254] : memref<8xf32, #tpu.memory_space<smem>>
    %293 = vector.broadcast %292 : f32 to vector<20x20xf32>
    %c1_255 = arith.constant 1 : index
    %c0_256 = arith.constant 0 : index
    %c0_257 = arith.constant 0 : index
    %294 = vector.load %arg10[%c1_255, %c0_256, %c0_257] : memref<8x20x20xf32, #tpu.memory_space<vmem>>, vector<1x20x20xf32>
    %295 = vector.shape_cast %294 : vector<1x20x20xf32> to vector<20x20xf32>
    %296 = vector.shape_cast %293 : vector<20x20xf32> to vector<1x20x20xf32>
    tpu.vector_store %arg10[%c1_255, %c0_256, %c0_257], %296 {strides = array<i32>} : memref<8x20x20xf32, #tpu.memory_space<vmem>>, vector<1x20x20xf32>,
    %c1_258 = arith.constant 1 : index
    %c1_259 = arith.constant 1 : index
    %c1_260 = arith.constant 1 : index
    %297 = vector.load %arg10[%c1_258, %c1_259, %c1_260] : memref<8x20x20xf32, #tpu.memory_space<vmem>>, vector<1x18x18xf32>
    %298 = vector.shape_cast %297 : vector<1x18x18xf32> to vector<18x18xf32>
    %299 = vector.shape_cast %291 : vector<18x18xf32> to vector<1x18x18xf32>
    tpu.vector_store %arg10[%c1_258, %c1_259, %c1_260], %299 {strides = array<i32>} : memref<8x20x20xf32, #tpu.memory_space<vmem>>, vector<1x18x18xf32>,
    %c2_261 = arith.constant 2 : index
    %300 = memref.load %arg5[%c2_261] : memref<8xf32, #tpu.memory_space<smem>>
    %301 = vector.broadcast %300 : f32 to vector<18x18xf32>
    %c2_262 = arith.constant 2 : index
    %c0_263 = arith.constant 0 : index
    %302 = memref.load %arg4[%c2_262, %c0_263] : memref<8x7xf32, #tpu.memory_space<smem>>
    %c0_264 = arith.constant 0 : index
    %c0_265 = arith.constant 0 : index
    %c0_266 = arith.constant 0 : index
    %303 = vector.load %arg9[%c0_264, %c0_265, %c0_266] : memref<7x18x18xf32, #tpu.memory_space<vmem>>, vector<1x18x18xf32>
    %304 = vector.shape_cast %303 : vector<1x18x18xf32> to vector<18x18xf32>
    %305 = vector.broadcast %302 : f32 to vector<18x18xf32>
    %306 = arith.mulf %305, %304 : vector<18x18xf32>
    %307 = arith.addf %301, %306 : vector<18x18xf32>
    %c2_267 = arith.constant 2 : index
    %c1_268 = arith.constant 1 : index
    %308 = memref.load %arg4[%c2_267, %c1_268] : memref<8x7xf32, #tpu.memory_space<smem>>
    %c1_269 = arith.constant 1 : index
    %c0_270 = arith.constant 0 : index
    %c0_271 = arith.constant 0 : index
    %309 = vector.load %arg9[%c1_269, %c0_270, %c0_271] : memref<7x18x18xf32, #tpu.memory_space<vmem>>, vector<1x18x18xf32>
    %310 = vector.shape_cast %309 : vector<1x18x18xf32> to vector<18x18xf32>
    %311 = vector.broadcast %308 : f32 to vector<18x18xf32>
    %312 = arith.mulf %311, %310 : vector<18x18xf32>
    %313 = arith.addf %307, %312 : vector<18x18xf32>
    %c2_272 = arith.constant 2 : index
    %c2_273 = arith.constant 2 : index
    %314 = memref.load %arg4[%c2_272, %c2_273] : memref<8x7xf32, #tpu.memory_space<smem>>
    %c2_274 = arith.constant 2 : index
    %c0_275 = arith.constant 0 : index
    %c0_276 = arith.constant 0 : index
    %315 = vector.load %arg9[%c2_274, %c0_275, %c0_276] : memref<7x18x18xf32, #tpu.memory_space<vmem>>, vector<1x18x18xf32>
    %316 = vector.shape_cast %315 : vector<1x18x18xf32> to vector<18x18xf32>
    %317 = vector.broadcast %314 : f32 to vector<18x18xf32>
    %318 = arith.mulf %317, %316 : vector<18x18xf32>
    %319 = arith.addf %313, %318 : vector<18x18xf32>
    %c2_277 = arith.constant 2 : index
    %c3_278 = arith.constant 3 : index
    %320 = memref.load %arg4[%c2_277, %c3_278] : memref<8x7xf32, #tpu.memory_space<smem>>
    %c3_279 = arith.constant 3 : index
    %c0_280 = arith.constant 0 : index
    %c0_281 = arith.constant 0 : index
    %321 = vector.load %arg9[%c3_279, %c0_280, %c0_281] : memref<7x18x18xf32, #tpu.memory_space<vmem>>, vector<1x18x18xf32>
    %322 = vector.shape_cast %321 : vector<1x18x18xf32> to vector<18x18xf32>
    %323 = vector.broadcast %320 : f32 to vector<18x18xf32>
    %324 = arith.mulf %323, %322 : vector<18x18xf32>
    %325 = arith.addf %319, %324 : vector<18x18xf32>
    %c2_282 = arith.constant 2 : index
    %c4_283 = arith.constant 4 : index
    %326 = memref.load %arg4[%c2_282, %c4_283] : memref<8x7xf32, #tpu.memory_space<smem>>
    %c4_284 = arith.constant 4 : index
    %c0_285 = arith.constant 0 : index
    %c0_286 = arith.constant 0 : index
    %327 = vector.load %arg9[%c4_284, %c0_285, %c0_286] : memref<7x18x18xf32, #tpu.memory_space<vmem>>, vector<1x18x18xf32>
    %328 = vector.shape_cast %327 : vector<1x18x18xf32> to vector<18x18xf32>
    %329 = vector.broadcast %326 : f32 to vector<18x18xf32>
    %330 = arith.mulf %329, %328 : vector<18x18xf32>
    %331 = arith.addf %325, %330 : vector<18x18xf32>
    %c2_287 = arith.constant 2 : index
    %c5_288 = arith.constant 5 : index
    %332 = memref.load %arg4[%c2_287, %c5_288] : memref<8x7xf32, #tpu.memory_space<smem>>
    %c5_289 = arith.constant 5 : index
    %c0_290 = arith.constant 0 : index
    %c0_291 = arith.constant 0 : index
    %333 = vector.load %arg9[%c5_289, %c0_290, %c0_291] : memref<7x18x18xf32, #tpu.memory_space<vmem>>, vector<1x18x18xf32>
    %334 = vector.shape_cast %333 : vector<1x18x18xf32> to vector<18x18xf32>
    %335 = vector.broadcast %332 : f32 to vector<18x18xf32>
    %336 = arith.mulf %335, %334 : vector<18x18xf32>
    %337 = arith.addf %331, %336 : vector<18x18xf32>
    %c2_292 = arith.constant 2 : index
    %c6_293 = arith.constant 6 : index
    %338 = memref.load %arg4[%c2_292, %c6_293] : memref<8x7xf32, #tpu.memory_space<smem>>
    %c6_294 = arith.constant 6 : index
    %c0_295 = arith.constant 0 : index
    %c0_296 = arith.constant 0 : index
    %339 = vector.load %arg9[%c6_294, %c0_295, %c0_296] : memref<7x18x18xf32, #tpu.memory_space<vmem>>, vector<1x18x18xf32>
    %340 = vector.shape_cast %339 : vector<1x18x18xf32> to vector<18x18xf32>
    %341 = vector.broadcast %338 : f32 to vector<18x18xf32>
    %342 = arith.mulf %341, %340 : vector<18x18xf32>
    %343 = arith.addf %337, %342 : vector<18x18xf32>
    %c2_297 = arith.constant 2 : index
    %344 = memref.load %arg5[%c2_297] : memref<8xf32, #tpu.memory_space<smem>>
    %345 = vector.broadcast %344 : f32 to vector<20x20xf32>
    %c2_298 = arith.constant 2 : index
    %c0_299 = arith.constant 0 : index
    %c0_300 = arith.constant 0 : index
    %346 = vector.load %arg10[%c2_298, %c0_299, %c0_300] : memref<8x20x20xf32, #tpu.memory_space<vmem>>, vector<1x20x20xf32>
    %347 = vector.shape_cast %346 : vector<1x20x20xf32> to vector<20x20xf32>
    %348 = vector.shape_cast %345 : vector<20x20xf32> to vector<1x20x20xf32>
    tpu.vector_store %arg10[%c2_298, %c0_299, %c0_300], %348 {strides = array<i32>} : memref<8x20x20xf32, #tpu.memory_space<vmem>>, vector<1x20x20xf32>,
    %c2_301 = arith.constant 2 : index
    %c1_302 = arith.constant 1 : index
    %c1_303 = arith.constant 1 : index
    %349 = vector.load %arg10[%c2_301, %c1_302, %c1_303] : memref<8x20x20xf32, #tpu.memory_space<vmem>>, vector<1x18x18xf32>
    %350 = vector.shape_cast %349 : vector<1x18x18xf32> to vector<18x18xf32>
    %351 = vector.shape_cast %343 : vector<18x18xf32> to vector<1x18x18xf32>
    tpu.vector_store %arg10[%c2_301, %c1_302, %c1_303], %351 {strides = array<i32>} : memref<8x20x20xf32, #tpu.memory_space<vmem>>, vector<1x18x18xf32>,
    %c3_304 = arith.constant 3 : index
    %352 = memref.load %arg5[%c3_304] : memref<8xf32, #tpu.memory_space<smem>>
    %353 = vector.broadcast %352 : f32 to vector<18x18xf32>
    %c3_305 = arith.constant 3 : index
    %c0_306 = arith.constant 0 : index
    %354 = memref.load %arg4[%c3_305, %c0_306] : memref<8x7xf32, #tpu.memory_space<smem>>
    %c0_307 = arith.constant 0 : index
    %c0_308 = arith.constant 0 : index
    %c0_309 = arith.constant 0 : index
    %355 = vector.load %arg9[%c0_307, %c0_308, %c0_309] : memref<7x18x18xf32, #tpu.memory_space<vmem>>, vector<1x18x18xf32>
    %356 = vector.shape_cast %355 : vector<1x18x18xf32> to vector<18x18xf32>
    %357 = vector.broadcast %354 : f32 to vector<18x18xf32>
    %358 = arith.mulf %357, %356 : vector<18x18xf32>
    %359 = arith.addf %353, %358 : vector<18x18xf32>
    %c3_310 = arith.constant 3 : index
    %c1_311 = arith.constant 1 : index
    %360 = memref.load %arg4[%c3_310, %c1_311] : memref<8x7xf32, #tpu.memory_space<smem>>
    %c1_312 = arith.constant 1 : index
    %c0_313 = arith.constant 0 : index
    %c0_314 = arith.constant 0 : index
    %361 = vector.load %arg9[%c1_312, %c0_313, %c0_314] : memref<7x18x18xf32, #tpu.memory_space<vmem>>, vector<1x18x18xf32>
    %362 = vector.shape_cast %361 : vector<1x18x18xf32> to vector<18x18xf32>
    %363 = vector.broadcast %360 : f32 to vector<18x18xf32>
    %364 = arith.mulf %363, %362 : vector<18x18xf32>
    %365 = arith.addf %359, %364 : vector<18x18xf32>
    %c3_315 = arith.constant 3 : index
    %c2_316 = arith.constant 2 : index
    %366 = memref.load %arg4[%c3_315, %c2_316] : memref<8x7xf32, #tpu.memory_space<smem>>
    %c2_317 = arith.constant 2 : index
    %c0_318 = arith.constant 0 : index
    %c0_319 = arith.constant 0 : index
    %367 = vector.load %arg9[%c2_317, %c0_318, %c0_319] : memref<7x18x18xf32, #tpu.memory_space<vmem>>, vector<1x18x18xf32>
    %368 = vector.shape_cast %367 : vector<1x18x18xf32> to vector<18x18xf32>
    %369 = vector.broadcast %366 : f32 to vector<18x18xf32>
    %370 = arith.mulf %369, %368 : vector<18x18xf32>
    %371 = arith.addf %365, %370 : vector<18x18xf32>
    %c3_320 = arith.constant 3 : index
    %c3_321 = arith.constant 3 : index
    %372 = memref.load %arg4[%c3_320, %c3_321] : memref<8x7xf32, #tpu.memory_space<smem>>
    %c3_322 = arith.constant 3 : index
    %c0_323 = arith.constant 0 : index
    %c0_324 = arith.constant 0 : index
    %373 = vector.load %arg9[%c3_322, %c0_323, %c0_324] : memref<7x18x18xf32, #tpu.memory_space<vmem>>, vector<1x18x18xf32>
    %374 = vector.shape_cast %373 : vector<1x18x18xf32> to vector<18x18xf32>
    %375 = vector.broadcast %372 : f32 to vector<18x18xf32>
    %376 = arith.mulf %375, %374 : vector<18x18xf32>
    %377 = arith.addf %371, %376 : vector<18x18xf32>
    %c3_325 = arith.constant 3 : index
    %c4_326 = arith.constant 4 : index
    %378 = memref.load %arg4[%c3_325, %c4_326] : memref<8x7xf32, #tpu.memory_space<smem>>
    %c4_327 = arith.constant 4 : index
    %c0_328 = arith.constant 0 : index
    %c0_329 = arith.constant 0 : index
    %379 = vector.load %arg9[%c4_327, %c0_328, %c0_329] : memref<7x18x18xf32, #tpu.memory_space<vmem>>, vector<1x18x18xf32>
    %380 = vector.shape_cast %379 : vector<1x18x18xf32> to vector<18x18xf32>
    %381 = vector.broadcast %378 : f32 to vector<18x18xf32>
    %382 = arith.mulf %381, %380 : vector<18x18xf32>
    %383 = arith.addf %377, %382 : vector<18x18xf32>
    %c3_330 = arith.constant 3 : index
    %c5_331 = arith.constant 5 : index
    %384 = memref.load %arg4[%c3_330, %c5_331] : memref<8x7xf32, #tpu.memory_space<smem>>
    %c5_332 = arith.constant 5 : index
    %c0_333 = arith.constant 0 : index
    %c0_334 = arith.constant 0 : index
    %385 = vector.load %arg9[%c5_332, %c0_333, %c0_334] : memref<7x18x18xf32, #tpu.memory_space<vmem>>, vector<1x18x18xf32>
    %386 = vector.shape_cast %385 : vector<1x18x18xf32> to vector<18x18xf32>
    %387 = vector.broadcast %384 : f32 to vector<18x18xf32>
    %388 = arith.mulf %387, %386 : vector<18x18xf32>
    %389 = arith.addf %383, %388 : vector<18x18xf32>
    %c3_335 = arith.constant 3 : index
    %c6_336 = arith.constant 6 : index
    %390 = memref.load %arg4[%c3_335, %c6_336] : memref<8x7xf32, #tpu.memory_space<smem>>
    %c6_337 = arith.constant 6 : index
    %c0_338 = arith.constant 0 : index
    %c0_339 = arith.constant 0 : index
    %391 = vector.load %arg9[%c6_337, %c0_338, %c0_339] : memref<7x18x18xf32, #tpu.memory_space<vmem>>, vector<1x18x18xf32>
    %392 = vector.shape_cast %391 : vector<1x18x18xf32> to vector<18x18xf32>
    %393 = vector.broadcast %390 : f32 to vector<18x18xf32>
    %394 = arith.mulf %393, %392 : vector<18x18xf32>
    %395 = arith.addf %389, %394 : vector<18x18xf32>
    %c3_340 = arith.constant 3 : index
    %396 = memref.load %arg5[%c3_340] : memref<8xf32, #tpu.memory_space<smem>>
    %397 = vector.broadcast %396 : f32 to vector<20x20xf32>
    %c3_341 = arith.constant 3 : index
    %c0_342 = arith.constant 0 : index
    %c0_343 = arith.constant 0 : index
    %398 = vector.load %arg10[%c3_341, %c0_342, %c0_343] : memref<8x20x20xf32, #tpu.memory_space<vmem>>, vector<1x20x20xf32>
    %399 = vector.shape_cast %398 : vector<1x20x20xf32> to vector<20x20xf32>
    %400 = vector.shape_cast %397 : vector<20x20xf32> to vector<1x20x20xf32>
    tpu.vector_store %arg10[%c3_341, %c0_342, %c0_343], %400 {strides = array<i32>} : memref<8x20x20xf32, #tpu.memory_space<vmem>>, vector<1x20x20xf32>,
    %c3_344 = arith.constant 3 : index
    %c1_345 = arith.constant 1 : index
    %c1_346 = arith.constant 1 : index
    %401 = vector.load %arg10[%c3_344, %c1_345, %c1_346] : memref<8x20x20xf32, #tpu.memory_space<vmem>>, vector<1x18x18xf32>
    %402 = vector.shape_cast %401 : vector<1x18x18xf32> to vector<18x18xf32>
    %403 = vector.shape_cast %395 : vector<18x18xf32> to vector<1x18x18xf32>
    tpu.vector_store %arg10[%c3_344, %c1_345, %c1_346], %403 {strides = array<i32>} : memref<8x20x20xf32, #tpu.memory_space<vmem>>, vector<1x18x18xf32>,
    %c4_347 = arith.constant 4 : index
    %404 = memref.load %arg5[%c4_347] : memref<8xf32, #tpu.memory_space<smem>>
    %405 = vector.broadcast %404 : f32 to vector<18x18xf32>
    %c4_348 = arith.constant 4 : index
    %c0_349 = arith.constant 0 : index
    %406 = memref.load %arg4[%c4_348, %c0_349] : memref<8x7xf32, #tpu.memory_space<smem>>
    %c0_350 = arith.constant 0 : index
    %c0_351 = arith.constant 0 : index
    %c0_352 = arith.constant 0 : index
    %407 = vector.load %arg9[%c0_350, %c0_351, %c0_352] : memref<7x18x18xf32, #tpu.memory_space<vmem>>, vector<1x18x18xf32>
    %408 = vector.shape_cast %407 : vector<1x18x18xf32> to vector<18x18xf32>
    %409 = vector.broadcast %406 : f32 to vector<18x18xf32>
    %410 = arith.mulf %409, %408 : vector<18x18xf32>
    %411 = arith.addf %405, %410 : vector<18x18xf32>
    %c4_353 = arith.constant 4 : index
    %c1_354 = arith.constant 1 : index
    %412 = memref.load %arg4[%c4_353, %c1_354] : memref<8x7xf32, #tpu.memory_space<smem>>
    %c1_355 = arith.constant 1 : index
    %c0_356 = arith.constant 0 : index
    %c0_357 = arith.constant 0 : index
    %413 = vector.load %arg9[%c1_355, %c0_356, %c0_357] : memref<7x18x18xf32, #tpu.memory_space<vmem>>, vector<1x18x18xf32>
    %414 = vector.shape_cast %413 : vector<1x18x18xf32> to vector<18x18xf32>
    %415 = vector.broadcast %412 : f32 to vector<18x18xf32>
    %416 = arith.mulf %415, %414 : vector<18x18xf32>
    %417 = arith.addf %411, %416 : vector<18x18xf32>
    %c4_358 = arith.constant 4 : index
    %c2_359 = arith.constant 2 : index
    %418 = memref.load %arg4[%c4_358, %c2_359] : memref<8x7xf32, #tpu.memory_space<smem>>
    %c2_360 = arith.constant 2 : index
    %c0_361 = arith.constant 0 : index
    %c0_362 = arith.constant 0 : index
    %419 = vector.load %arg9[%c2_360, %c0_361, %c0_362] : memref<7x18x18xf32, #tpu.memory_space<vmem>>, vector<1x18x18xf32>
    %420 = vector.shape_cast %419 : vector<1x18x18xf32> to vector<18x18xf32>
    %421 = vector.broadcast %418 : f32 to vector<18x18xf32>
    %422 = arith.mulf %421, %420 : vector<18x18xf32>
    %423 = arith.addf %417, %422 : vector<18x18xf32>
    %c4_363 = arith.constant 4 : index
    %c3_364 = arith.constant 3 : index
    %424 = memref.load %arg4[%c4_363, %c3_364] : memref<8x7xf32, #tpu.memory_space<smem>>
    %c3_365 = arith.constant 3 : index
    %c0_366 = arith.constant 0 : index
    %c0_367 = arith.constant 0 : index
    %425 = vector.load %arg9[%c3_365, %c0_366, %c0_367] : memref<7x18x18xf32, #tpu.memory_space<vmem>>, vector<1x18x18xf32>
    %426 = vector.shape_cast %425 : vector<1x18x18xf32> to vector<18x18xf32>
    %427 = vector.broadcast %424 : f32 to vector<18x18xf32>
    %428 = arith.mulf %427, %426 : vector<18x18xf32>
    %429 = arith.addf %423, %428 : vector<18x18xf32>
    %c4_368 = arith.constant 4 : index
    %c4_369 = arith.constant 4 : index
    %430 = memref.load %arg4[%c4_368, %c4_369] : memref<8x7xf32, #tpu.memory_space<smem>>
    %c4_370 = arith.constant 4 : index
    %c0_371 = arith.constant 0 : index
    %c0_372 = arith.constant 0 : index
    %431 = vector.load %arg9[%c4_370, %c0_371, %c0_372] : memref<7x18x18xf32, #tpu.memory_space<vmem>>, vector<1x18x18xf32>
    %432 = vector.shape_cast %431 : vector<1x18x18xf32> to vector<18x18xf32>
    %433 = vector.broadcast %430 : f32 to vector<18x18xf32>
    %434 = arith.mulf %433, %432 : vector<18x18xf32>
    %435 = arith.addf %429, %434 : vector<18x18xf32>
    %c4_373 = arith.constant 4 : index
    %c5_374 = arith.constant 5 : index
    %436 = memref.load %arg4[%c4_373, %c5_374] : memref<8x7xf32, #tpu.memory_space<smem>>
    %c5_375 = arith.constant 5 : index
    %c0_376 = arith.constant 0 : index
    %c0_377 = arith.constant 0 : index
    %437 = vector.load %arg9[%c5_375, %c0_376, %c0_377] : memref<7x18x18xf32, #tpu.memory_space<vmem>>, vector<1x18x18xf32>
    %438 = vector.shape_cast %437 : vector<1x18x18xf32> to vector<18x18xf32>
    %439 = vector.broadcast %436 : f32 to vector<18x18xf32>
    %440 = arith.mulf %439, %438 : vector<18x18xf32>
    %441 = arith.addf %435, %440 : vector<18x18xf32>
    %c4_378 = arith.constant 4 : index
    %c6_379 = arith.constant 6 : index
    %442 = memref.load %arg4[%c4_378, %c6_379] : memref<8x7xf32, #tpu.memory_space<smem>>
    %c6_380 = arith.constant 6 : index
    %c0_381 = arith.constant 0 : index
    %c0_382 = arith.constant 0 : index
    %443 = vector.load %arg9[%c6_380, %c0_381, %c0_382] : memref<7x18x18xf32, #tpu.memory_space<vmem>>, vector<1x18x18xf32>
    %444 = vector.shape_cast %443 : vector<1x18x18xf32> to vector<18x18xf32>
    %445 = vector.broadcast %442 : f32 to vector<18x18xf32>
    %446 = arith.mulf %445, %444 : vector<18x18xf32>
    %447 = arith.addf %441, %446 : vector<18x18xf32>
    %c4_383 = arith.constant 4 : index
    %448 = memref.load %arg5[%c4_383] : memref<8xf32, #tpu.memory_space<smem>>
    %449 = vector.broadcast %448 : f32 to vector<20x20xf32>
    %c4_384 = arith.constant 4 : index
    %c0_385 = arith.constant 0 : index
    %c0_386 = arith.constant 0 : index
    %450 = vector.load %arg10[%c4_384, %c0_385, %c0_386] : memref<8x20x20xf32, #tpu.memory_space<vmem>>, vector<1x20x20xf32>
    %451 = vector.shape_cast %450 : vector<1x20x20xf32> to vector<20x20xf32>
    %452 = vector.shape_cast %449 : vector<20x20xf32> to vector<1x20x20xf32>
    tpu.vector_store %arg10[%c4_384, %c0_385, %c0_386], %452 {strides = array<i32>} : memref<8x20x20xf32, #tpu.memory_space<vmem>>, vector<1x20x20xf32>,
    %c4_387 = arith.constant 4 : index
    %c1_388 = arith.constant 1 : index
    %c1_389 = arith.constant 1 : index
    %453 = vector.load %arg10[%c4_387, %c1_388, %c1_389] : memref<8x20x20xf32, #tpu.memory_space<vmem>>, vector<1x18x18xf32>
    %454 = vector.shape_cast %453 : vector<1x18x18xf32> to vector<18x18xf32>
    %455 = vector.shape_cast %447 : vector<18x18xf32> to vector<1x18x18xf32>
    tpu.vector_store %arg10[%c4_387, %c1_388, %c1_389], %455 {strides = array<i32>} : memref<8x20x20xf32, #tpu.memory_space<vmem>>, vector<1x18x18xf32>,
    %c5_390 = arith.constant 5 : index
    %456 = memref.load %arg5[%c5_390] : memref<8xf32, #tpu.memory_space<smem>>
    %457 = vector.broadcast %456 : f32 to vector<18x18xf32>
    %c5_391 = arith.constant 5 : index
    %c0_392 = arith.constant 0 : index
    %458 = memref.load %arg4[%c5_391, %c0_392] : memref<8x7xf32, #tpu.memory_space<smem>>
    %c0_393 = arith.constant 0 : index
    %c0_394 = arith.constant 0 : index
    %c0_395 = arith.constant 0 : index
    %459 = vector.load %arg9[%c0_393, %c0_394, %c0_395] : memref<7x18x18xf32, #tpu.memory_space<vmem>>, vector<1x18x18xf32>
    %460 = vector.shape_cast %459 : vector<1x18x18xf32> to vector<18x18xf32>
    %461 = vector.broadcast %458 : f32 to vector<18x18xf32>
    %462 = arith.mulf %461, %460 : vector<18x18xf32>
    %463 = arith.addf %457, %462 : vector<18x18xf32>
    %c5_396 = arith.constant 5 : index
    %c1_397 = arith.constant 1 : index
    %464 = memref.load %arg4[%c5_396, %c1_397] : memref<8x7xf32, #tpu.memory_space<smem>>
    %c1_398 = arith.constant 1 : index
    %c0_399 = arith.constant 0 : index
    %c0_400 = arith.constant 0 : index
    %465 = vector.load %arg9[%c1_398, %c0_399, %c0_400] : memref<7x18x18xf32, #tpu.memory_space<vmem>>, vector<1x18x18xf32>
    %466 = vector.shape_cast %465 : vector<1x18x18xf32> to vector<18x18xf32>
    %467 = vector.broadcast %464 : f32 to vector<18x18xf32>
    %468 = arith.mulf %467, %466 : vector<18x18xf32>
    %469 = arith.addf %463, %468 : vector<18x18xf32>
    %c5_401 = arith.constant 5 : index
    %c2_402 = arith.constant 2 : index
    %470 = memref.load %arg4[%c5_401, %c2_402] : memref<8x7xf32, #tpu.memory_space<smem>>
    %c2_403 = arith.constant 2 : index
    %c0_404 = arith.constant 0 : index
    %c0_405 = arith.constant 0 : index
    %471 = vector.load %arg9[%c2_403, %c0_404, %c0_405] : memref<7x18x18xf32, #tpu.memory_space<vmem>>, vector<1x18x18xf32>
    %472 = vector.shape_cast %471 : vector<1x18x18xf32> to vector<18x18xf32>
    %473 = vector.broadcast %470 : f32 to vector<18x18xf32>
    %474 = arith.mulf %473, %472 : vector<18x18xf32>
    %475 = arith.addf %469, %474 : vector<18x18xf32>
    %c5_406 = arith.constant 5 : index
    %c3_407 = arith.constant 3 : index
    %476 = memref.load %arg4[%c5_406, %c3_407] : memref<8x7xf32, #tpu.memory_space<smem>>
    %c3_408 = arith.constant 3 : index
    %c0_409 = arith.constant 0 : index
    %c0_410 = arith.constant 0 : index
    %477 = vector.load %arg9[%c3_408, %c0_409, %c0_410] : memref<7x18x18xf32, #tpu.memory_space<vmem>>, vector<1x18x18xf32>
    %478 = vector.shape_cast %477 : vector<1x18x18xf32> to vector<18x18xf32>
    %479 = vector.broadcast %476 : f32 to vector<18x18xf32>
    %480 = arith.mulf %479, %478 : vector<18x18xf32>
    %481 = arith.addf %475, %480 : vector<18x18xf32>
    %c5_411 = arith.constant 5 : index
    %c4_412 = arith.constant 4 : index
    %482 = memref.load %arg4[%c5_411, %c4_412] : memref<8x7xf32, #tpu.memory_space<smem>>
    %c4_413 = arith.constant 4 : index
    %c0_414 = arith.constant 0 : index
    %c0_415 = arith.constant 0 : index
    %483 = vector.load %arg9[%c4_413, %c0_414, %c0_415] : memref<7x18x18xf32, #tpu.memory_space<vmem>>, vector<1x18x18xf32>
    %484 = vector.shape_cast %483 : vector<1x18x18xf32> to vector<18x18xf32>
    %485 = vector.broadcast %482 : f32 to vector<18x18xf32>
    %486 = arith.mulf %485, %484 : vector<18x18xf32>
    %487 = arith.addf %481, %486 : vector<18x18xf32>
    %c5_416 = arith.constant 5 : index
    %c5_417 = arith.constant 5 : index
    %488 = memref.load %arg4[%c5_416, %c5_417] : memref<8x7xf32, #tpu.memory_space<smem>>
    %c5_418 = arith.constant 5 : index
    %c0_419 = arith.constant 0 : index
    %c0_420 = arith.constant 0 : index
    %489 = vector.load %arg9[%c5_418, %c0_419, %c0_420] : memref<7x18x18xf32, #tpu.memory_space<vmem>>, vector<1x18x18xf32>
    %490 = vector.shape_cast %489 : vector<1x18x18xf32> to vector<18x18xf32>
    %491 = vector.broadcast %488 : f32 to vector<18x18xf32>
    %492 = arith.mulf %491, %490 : vector<18x18xf32>
    %493 = arith.addf %487, %492 : vector<18x18xf32>
    %c5_421 = arith.constant 5 : index
    %c6_422 = arith.constant 6 : index
    %494 = memref.load %arg4[%c5_421, %c6_422] : memref<8x7xf32, #tpu.memory_space<smem>>
    %c6_423 = arith.constant 6 : index
    %c0_424 = arith.constant 0 : index
    %c0_425 = arith.constant 0 : index
    %495 = vector.load %arg9[%c6_423, %c0_424, %c0_425] : memref<7x18x18xf32, #tpu.memory_space<vmem>>, vector<1x18x18xf32>
    %496 = vector.shape_cast %495 : vector<1x18x18xf32> to vector<18x18xf32>
    %497 = vector.broadcast %494 : f32 to vector<18x18xf32>
    %498 = arith.mulf %497, %496 : vector<18x18xf32>
    %499 = arith.addf %493, %498 : vector<18x18xf32>
    %c5_426 = arith.constant 5 : index
    %500 = memref.load %arg5[%c5_426] : memref<8xf32, #tpu.memory_space<smem>>
    %501 = vector.broadcast %500 : f32 to vector<20x20xf32>
    %c5_427 = arith.constant 5 : index
    %c0_428 = arith.constant 0 : index
    %c0_429 = arith.constant 0 : index
    %502 = vector.load %arg10[%c5_427, %c0_428, %c0_429] : memref<8x20x20xf32, #tpu.memory_space<vmem>>, vector<1x20x20xf32>
    %503 = vector.shape_cast %502 : vector<1x20x20xf32> to vector<20x20xf32>
    %504 = vector.shape_cast %501 : vector<20x20xf32> to vector<1x20x20xf32>
    tpu.vector_store %arg10[%c5_427, %c0_428, %c0_429], %504 {strides = array<i32>} : memref<8x20x20xf32, #tpu.memory_space<vmem>>, vector<1x20x20xf32>,
    %c5_430 = arith.constant 5 : index
    %c1_431 = arith.constant 1 : index
    %c1_432 = arith.constant 1 : index
    %505 = vector.load %arg10[%c5_430, %c1_431, %c1_432] : memref<8x20x20xf32, #tpu.memory_space<vmem>>, vector<1x18x18xf32>
    %506 = vector.shape_cast %505 : vector<1x18x18xf32> to vector<18x18xf32>
    %507 = vector.shape_cast %499 : vector<18x18xf32> to vector<1x18x18xf32>
    tpu.vector_store %arg10[%c5_430, %c1_431, %c1_432], %507 {strides = array<i32>} : memref<8x20x20xf32, #tpu.memory_space<vmem>>, vector<1x18x18xf32>,
    %c6_433 = arith.constant 6 : index
    %508 = memref.load %arg5[%c6_433] : memref<8xf32, #tpu.memory_space<smem>>
    %509 = vector.broadcast %508 : f32 to vector<18x18xf32>
    %c6_434 = arith.constant 6 : index
    %c0_435 = arith.constant 0 : index
    %510 = memref.load %arg4[%c6_434, %c0_435] : memref<8x7xf32, #tpu.memory_space<smem>>
    %c0_436 = arith.constant 0 : index
    %c0_437 = arith.constant 0 : index
    %c0_438 = arith.constant 0 : index
    %511 = vector.load %arg9[%c0_436, %c0_437, %c0_438] : memref<7x18x18xf32, #tpu.memory_space<vmem>>, vector<1x18x18xf32>
    %512 = vector.shape_cast %511 : vector<1x18x18xf32> to vector<18x18xf32>
    %513 = vector.broadcast %510 : f32 to vector<18x18xf32>
    %514 = arith.mulf %513, %512 : vector<18x18xf32>
    %515 = arith.addf %509, %514 : vector<18x18xf32>
    %c6_439 = arith.constant 6 : index
    %c1_440 = arith.constant 1 : index
    %516 = memref.load %arg4[%c6_439, %c1_440] : memref<8x7xf32, #tpu.memory_space<smem>>
    %c1_441 = arith.constant 1 : index
    %c0_442 = arith.constant 0 : index
    %c0_443 = arith.constant 0 : index
    %517 = vector.load %arg9[%c1_441, %c0_442, %c0_443] : memref<7x18x18xf32, #tpu.memory_space<vmem>>, vector<1x18x18xf32>
    %518 = vector.shape_cast %517 : vector<1x18x18xf32> to vector<18x18xf32>
    %519 = vector.broadcast %516 : f32 to vector<18x18xf32>
    %520 = arith.mulf %519, %518 : vector<18x18xf32>
    %521 = arith.addf %515, %520 : vector<18x18xf32>
    %c6_444 = arith.constant 6 : index
    %c2_445 = arith.constant 2 : index
    %522 = memref.load %arg4[%c6_444, %c2_445] : memref<8x7xf32, #tpu.memory_space<smem>>
    %c2_446 = arith.constant 2 : index
    %c0_447 = arith.constant 0 : index
    %c0_448 = arith.constant 0 : index
    %523 = vector.load %arg9[%c2_446, %c0_447, %c0_448] : memref<7x18x18xf32, #tpu.memory_space<vmem>>, vector<1x18x18xf32>
    %524 = vector.shape_cast %523 : vector<1x18x18xf32> to vector<18x18xf32>
    %525 = vector.broadcast %522 : f32 to vector<18x18xf32>
    %526 = arith.mulf %525, %524 : vector<18x18xf32>
    %527 = arith.addf %521, %526 : vector<18x18xf32>
    %c6_449 = arith.constant 6 : index
    %c3_450 = arith.constant 3 : index
    %528 = memref.load %arg4[%c6_449, %c3_450] : memref<8x7xf32, #tpu.memory_space<smem>>
    %c3_451 = arith.constant 3 : index
    %c0_452 = arith.constant 0 : index
    %c0_453 = arith.constant 0 : index
    %529 = vector.load %arg9[%c3_451, %c0_452, %c0_453] : memref<7x18x18xf32, #tpu.memory_space<vmem>>, vector<1x18x18xf32>
    %530 = vector.shape_cast %529 : vector<1x18x18xf32> to vector<18x18xf32>
    %531 = vector.broadcast %528 : f32 to vector<18x18xf32>
    %532 = arith.mulf %531, %530 : vector<18x18xf32>
    %533 = arith.addf %527, %532 : vector<18x18xf32>
    %c6_454 = arith.constant 6 : index
    %c4_455 = arith.constant 4 : index
    %534 = memref.load %arg4[%c6_454, %c4_455] : memref<8x7xf32, #tpu.memory_space<smem>>
    %c4_456 = arith.constant 4 : index
    %c0_457 = arith.constant 0 : index
    %c0_458 = arith.constant 0 : index
    %535 = vector.load %arg9[%c4_456, %c0_457, %c0_458] : memref<7x18x18xf32, #tpu.memory_space<vmem>>, vector<1x18x18xf32>
    %536 = vector.shape_cast %535 : vector<1x18x18xf32> to vector<18x18xf32>
    %537 = vector.broadcast %534 : f32 to vector<18x18xf32>
    %538 = arith.mulf %537, %536 : vector<18x18xf32>
    %539 = arith.addf %533, %538 : vector<18x18xf32>
    %c6_459 = arith.constant 6 : index
    %c5_460 = arith.constant 5 : index
    %540 = memref.load %arg4[%c6_459, %c5_460] : memref<8x7xf32, #tpu.memory_space<smem>>
    %c5_461 = arith.constant 5 : index
    %c0_462 = arith.constant 0 : index
    %c0_463 = arith.constant 0 : index
    %541 = vector.load %arg9[%c5_461, %c0_462, %c0_463] : memref<7x18x18xf32, #tpu.memory_space<vmem>>, vector<1x18x18xf32>
    %542 = vector.shape_cast %541 : vector<1x18x18xf32> to vector<18x18xf32>
    %543 = vector.broadcast %540 : f32 to vector<18x18xf32>
    %544 = arith.mulf %543, %542 : vector<18x18xf32>
    %545 = arith.addf %539, %544 : vector<18x18xf32>
    %c6_464 = arith.constant 6 : index
    %c6_465 = arith.constant 6 : index
    %546 = memref.load %arg4[%c6_464, %c6_465] : memref<8x7xf32, #tpu.memory_space<smem>>
    %c6_466 = arith.constant 6 : index
    %c0_467 = arith.constant 0 : index
    %c0_468 = arith.constant 0 : index
    %547 = vector.load %arg9[%c6_466, %c0_467, %c0_468] : memref<7x18x18xf32, #tpu.memory_space<vmem>>, vector<1x18x18xf32>
    %548 = vector.shape_cast %547 : vector<1x18x18xf32> to vector<18x18xf32>
    %549 = vector.broadcast %546 : f32 to vector<18x18xf32>
    %550 = arith.mulf %549, %548 : vector<18x18xf32>
    %551 = arith.addf %545, %550 : vector<18x18xf32>
    %c6_469 = arith.constant 6 : index
    %552 = memref.load %arg5[%c6_469] : memref<8xf32, #tpu.memory_space<smem>>
    %553 = vector.broadcast %552 : f32 to vector<20x20xf32>
    %c6_470 = arith.constant 6 : index
    %c0_471 = arith.constant 0 : index
    %c0_472 = arith.constant 0 : index
    %554 = vector.load %arg10[%c6_470, %c0_471, %c0_472] : memref<8x20x20xf32, #tpu.memory_space<vmem>>, vector<1x20x20xf32>
    %555 = vector.shape_cast %554 : vector<1x20x20xf32> to vector<20x20xf32>
    %556 = vector.shape_cast %553 : vector<20x20xf32> to vector<1x20x20xf32>
    tpu.vector_store %arg10[%c6_470, %c0_471, %c0_472], %556 {strides = array<i32>} : memref<8x20x20xf32, #tpu.memory_space<vmem>>, vector<1x20x20xf32>,
    %c6_473 = arith.constant 6 : index
    %c1_474 = arith.constant 1 : index
    %c1_475 = arith.constant 1 : index
    %557 = vector.load %arg10[%c6_473, %c1_474, %c1_475] : memref<8x20x20xf32, #tpu.memory_space<vmem>>, vector<1x18x18xf32>
    %558 = vector.shape_cast %557 : vector<1x18x18xf32> to vector<18x18xf32>
    %559 = vector.shape_cast %551 : vector<18x18xf32> to vector<1x18x18xf32>
    tpu.vector_store %arg10[%c6_473, %c1_474, %c1_475], %559 {strides = array<i32>} : memref<8x20x20xf32, #tpu.memory_space<vmem>>, vector<1x18x18xf32>,
    %c7 = arith.constant 7 : index
    %560 = memref.load %arg5[%c7] : memref<8xf32, #tpu.memory_space<smem>>
    %561 = vector.broadcast %560 : f32 to vector<18x18xf32>
    %c7_476 = arith.constant 7 : index
    %c0_477 = arith.constant 0 : index
    %562 = memref.load %arg4[%c7_476, %c0_477] : memref<8x7xf32, #tpu.memory_space<smem>>
    %c0_478 = arith.constant 0 : index
    %c0_479 = arith.constant 0 : index
    %c0_480 = arith.constant 0 : index
    %563 = vector.load %arg9[%c0_478, %c0_479, %c0_480] : memref<7x18x18xf32, #tpu.memory_space<vmem>>, vector<1x18x18xf32>
    %564 = vector.shape_cast %563 : vector<1x18x18xf32> to vector<18x18xf32>
    %565 = vector.broadcast %562 : f32 to vector<18x18xf32>
    %566 = arith.mulf %565, %564 : vector<18x18xf32>
    %567 = arith.addf %561, %566 : vector<18x18xf32>
    %c7_481 = arith.constant 7 : index
    %c1_482 = arith.constant 1 : index
    %568 = memref.load %arg4[%c7_481, %c1_482] : memref<8x7xf32, #tpu.memory_space<smem>>
    %c1_483 = arith.constant 1 : index
    %c0_484 = arith.constant 0 : index
    %c0_485 = arith.constant 0 : index
    %569 = vector.load %arg9[%c1_483, %c0_484, %c0_485] : memref<7x18x18xf32, #tpu.memory_space<vmem>>, vector<1x18x18xf32>
    %570 = vector.shape_cast %569 : vector<1x18x18xf32> to vector<18x18xf32>
    %571 = vector.broadcast %568 : f32 to vector<18x18xf32>
    %572 = arith.mulf %571, %570 : vector<18x18xf32>
    %573 = arith.addf %567, %572 : vector<18x18xf32>
    %c7_486 = arith.constant 7 : index
    %c2_487 = arith.constant 2 : index
    %574 = memref.load %arg4[%c7_486, %c2_487] : memref<8x7xf32, #tpu.memory_space<smem>>
    %c2_488 = arith.constant 2 : index
    %c0_489 = arith.constant 0 : index
    %c0_490 = arith.constant 0 : index
    %575 = vector.load %arg9[%c2_488, %c0_489, %c0_490] : memref<7x18x18xf32, #tpu.memory_space<vmem>>, vector<1x18x18xf32>
    %576 = vector.shape_cast %575 : vector<1x18x18xf32> to vector<18x18xf32>
    %577 = vector.broadcast %574 : f32 to vector<18x18xf32>
    %578 = arith.mulf %577, %576 : vector<18x18xf32>
    %579 = arith.addf %573, %578 : vector<18x18xf32>
    %c7_491 = arith.constant 7 : index
    %c3_492 = arith.constant 3 : index
    %580 = memref.load %arg4[%c7_491, %c3_492] : memref<8x7xf32, #tpu.memory_space<smem>>
    %c3_493 = arith.constant 3 : index
    %c0_494 = arith.constant 0 : index
    %c0_495 = arith.constant 0 : index
    %581 = vector.load %arg9[%c3_493, %c0_494, %c0_495] : memref<7x18x18xf32, #tpu.memory_space<vmem>>, vector<1x18x18xf32>
    %582 = vector.shape_cast %581 : vector<1x18x18xf32> to vector<18x18xf32>
    %583 = vector.broadcast %580 : f32 to vector<18x18xf32>
    %584 = arith.mulf %583, %582 : vector<18x18xf32>
    %585 = arith.addf %579, %584 : vector<18x18xf32>
    %c7_496 = arith.constant 7 : index
    %c4_497 = arith.constant 4 : index
    %586 = memref.load %arg4[%c7_496, %c4_497] : memref<8x7xf32, #tpu.memory_space<smem>>
    %c4_498 = arith.constant 4 : index
    %c0_499 = arith.constant 0 : index
    %c0_500 = arith.constant 0 : index
    %587 = vector.load %arg9[%c4_498, %c0_499, %c0_500] : memref<7x18x18xf32, #tpu.memory_space<vmem>>, vector<1x18x18xf32>
    %588 = vector.shape_cast %587 : vector<1x18x18xf32> to vector<18x18xf32>
    %589 = vector.broadcast %586 : f32 to vector<18x18xf32>
    %590 = arith.mulf %589, %588 : vector<18x18xf32>
    %591 = arith.addf %585, %590 : vector<18x18xf32>
    %c7_501 = arith.constant 7 : index
    %c5_502 = arith.constant 5 : index
    %592 = memref.load %arg4[%c7_501, %c5_502] : memref<8x7xf32, #tpu.memory_space<smem>>
    %c5_503 = arith.constant 5 : index
    %c0_504 = arith.constant 0 : index
    %c0_505 = arith.constant 0 : index
    %593 = vector.load %arg9[%c5_503, %c0_504, %c0_505] : memref<7x18x18xf32, #tpu.memory_space<vmem>>, vector<1x18x18xf32>
    %594 = vector.shape_cast %593 : vector<1x18x18xf32> to vector<18x18xf32>
    %595 = vector.broadcast %592 : f32 to vector<18x18xf32>
    %596 = arith.mulf %595, %594 : vector<18x18xf32>
    %597 = arith.addf %591, %596 : vector<18x18xf32>
    %c7_506 = arith.constant 7 : index
    %c6_507 = arith.constant 6 : index
    %598 = memref.load %arg4[%c7_506, %c6_507] : memref<8x7xf32, #tpu.memory_space<smem>>
    %c6_508 = arith.constant 6 : index
    %c0_509 = arith.constant 0 : index
    %c0_510 = arith.constant 0 : index
    %599 = vector.load %arg9[%c6_508, %c0_509, %c0_510] : memref<7x18x18xf32, #tpu.memory_space<vmem>>, vector<1x18x18xf32>
    %600 = vector.shape_cast %599 : vector<1x18x18xf32> to vector<18x18xf32>
    %601 = vector.broadcast %598 : f32 to vector<18x18xf32>
    %602 = arith.mulf %601, %600 : vector<18x18xf32>
    %603 = arith.addf %597, %602 : vector<18x18xf32>
    %c7_511 = arith.constant 7 : index
    %604 = memref.load %arg5[%c7_511] : memref<8xf32, #tpu.memory_space<smem>>
    %605 = vector.broadcast %604 : f32 to vector<20x20xf32>
    %c7_512 = arith.constant 7 : index
    %c0_513 = arith.constant 0 : index
    %c0_514 = arith.constant 0 : index
    %606 = vector.load %arg10[%c7_512, %c0_513, %c0_514] : memref<8x20x20xf32, #tpu.memory_space<vmem>>, vector<1x20x20xf32>
    %607 = vector.shape_cast %606 : vector<1x20x20xf32> to vector<20x20xf32>
    %608 = vector.shape_cast %605 : vector<20x20xf32> to vector<1x20x20xf32>
    tpu.vector_store %arg10[%c7_512, %c0_513, %c0_514], %608 {strides = array<i32>} : memref<8x20x20xf32, #tpu.memory_space<vmem>>, vector<1x20x20xf32>,
    %c7_515 = arith.constant 7 : index
    %c1_516 = arith.constant 1 : index
    %c1_517 = arith.constant 1 : index
    %609 = vector.load %arg10[%c7_515, %c1_516, %c1_517] : memref<8x20x20xf32, #tpu.memory_space<vmem>>, vector<1x18x18xf32>
    %610 = vector.shape_cast %609 : vector<1x18x18xf32> to vector<18x18xf32>
    %611 = vector.shape_cast %603 : vector<18x18xf32> to vector<1x18x18xf32>
    tpu.vector_store %arg10[%c7_515, %c1_516, %c1_517], %611 {strides = array<i32>} : memref<8x20x20xf32, #tpu.memory_space<vmem>>, vector<1x18x18xf32>,
    %c0_518 = arith.constant 0 : index
    %612 = memref.load %arg7[%c0_518] : memref<2xf32, #tpu.memory_space<smem>>
    %613 = vector.broadcast %612 : f32 to vector<20x20xf32>
    %c0_519 = arith.constant 0 : index
    %c0_520 = arith.constant 0 : index
    %614 = memref.load %arg6[%c0_519, %c0_520] : memref<2x8xf32, #tpu.memory_space<smem>>
    %c0_521 = arith.constant 0 : index
    %c0_522 = arith.constant 0 : index
    %c0_523 = arith.constant 0 : index
    %615 = vector.load %arg10[%c0_521, %c0_522, %c0_523] : memref<8x20x20xf32, #tpu.memory_space<vmem>>, vector<1x20x20xf32>
    %616 = vector.shape_cast %615 : vector<1x20x20xf32> to vector<20x20xf32>
    %617 = vector.broadcast %614 : f32 to vector<20x20xf32>
    %618 = arith.mulf %617, %616 : vector<20x20xf32>
    %619 = arith.addf %613, %618 : vector<20x20xf32>
    %c0_524 = arith.constant 0 : index
    %c1_525 = arith.constant 1 : index
    %620 = memref.load %arg6[%c0_524, %c1_525] : memref<2x8xf32, #tpu.memory_space<smem>>
    %c1_526 = arith.constant 1 : index
    %c0_527 = arith.constant 0 : index
    %c0_528 = arith.constant 0 : index
    %621 = vector.load %arg10[%c1_526, %c0_527, %c0_528] : memref<8x20x20xf32, #tpu.memory_space<vmem>>, vector<1x20x20xf32>
    %622 = vector.shape_cast %621 : vector<1x20x20xf32> to vector<20x20xf32>
    %623 = vector.broadcast %620 : f32 to vector<20x20xf32>
    %624 = arith.mulf %623, %622 : vector<20x20xf32>
    %625 = arith.addf %619, %624 : vector<20x20xf32>
    %c0_529 = arith.constant 0 : index
    %c2_530 = arith.constant 2 : index
    %626 = memref.load %arg6[%c0_529, %c2_530] : memref<2x8xf32, #tpu.memory_space<smem>>
    %c2_531 = arith.constant 2 : index
    %c0_532 = arith.constant 0 : index
    %c0_533 = arith.constant 0 : index
    %627 = vector.load %arg10[%c2_531, %c0_532, %c0_533] : memref<8x20x20xf32, #tpu.memory_space<vmem>>, vector<1x20x20xf32>
    %628 = vector.shape_cast %627 : vector<1x20x20xf32> to vector<20x20xf32>
    %629 = vector.broadcast %626 : f32 to vector<20x20xf32>
    %630 = arith.mulf %629, %628 : vector<20x20xf32>
    %631 = arith.addf %625, %630 : vector<20x20xf32>
    %c0_534 = arith.constant 0 : index
    %c3_535 = arith.constant 3 : index
    %632 = memref.load %arg6[%c0_534, %c3_535] : memref<2x8xf32, #tpu.memory_space<smem>>
    %c3_536 = arith.constant 3 : index
    %c0_537 = arith.constant 0 : index
    %c0_538 = arith.constant 0 : index
    %633 = vector.load %arg10[%c3_536, %c0_537, %c0_538] : memref<8x20x20xf32, #tpu.memory_space<vmem>>, vector<1x20x20xf32>
    %634 = vector.shape_cast %633 : vector<1x20x20xf32> to vector<20x20xf32>
    %635 = vector.broadcast %632 : f32 to vector<20x20xf32>
    %636 = arith.mulf %635, %634 : vector<20x20xf32>
    %637 = arith.addf %631, %636 : vector<20x20xf32>
    %c0_539 = arith.constant 0 : index
    %c4_540 = arith.constant 4 : index
    %638 = memref.load %arg6[%c0_539, %c4_540] : memref<2x8xf32, #tpu.memory_space<smem>>
    %c4_541 = arith.constant 4 : index
    %c0_542 = arith.constant 0 : index
    %c0_543 = arith.constant 0 : index
    %639 = vector.load %arg10[%c4_541, %c0_542, %c0_543] : memref<8x20x20xf32, #tpu.memory_space<vmem>>, vector<1x20x20xf32>
    %640 = vector.shape_cast %639 : vector<1x20x20xf32> to vector<20x20xf32>
    %641 = vector.broadcast %638 : f32 to vector<20x20xf32>
    %642 = arith.mulf %641, %640 : vector<20x20xf32>
    %643 = arith.addf %637, %642 : vector<20x20xf32>
    %c0_544 = arith.constant 0 : index
    %c5_545 = arith.constant 5 : index
    %644 = memref.load %arg6[%c0_544, %c5_545] : memref<2x8xf32, #tpu.memory_space<smem>>
    %c5_546 = arith.constant 5 : index
    %c0_547 = arith.constant 0 : index
    %c0_548 = arith.constant 0 : index
    %645 = vector.load %arg10[%c5_546, %c0_547, %c0_548] : memref<8x20x20xf32, #tpu.memory_space<vmem>>, vector<1x20x20xf32>
    %646 = vector.shape_cast %645 : vector<1x20x20xf32> to vector<20x20xf32>
    %647 = vector.broadcast %644 : f32 to vector<20x20xf32>
    %648 = arith.mulf %647, %646 : vector<20x20xf32>
    %649 = arith.addf %643, %648 : vector<20x20xf32>
    %c0_549 = arith.constant 0 : index
    %c6_550 = arith.constant 6 : index
    %650 = memref.load %arg6[%c0_549, %c6_550] : memref<2x8xf32, #tpu.memory_space<smem>>
    %c6_551 = arith.constant 6 : index
    %c0_552 = arith.constant 0 : index
    %c0_553 = arith.constant 0 : index
    %651 = vector.load %arg10[%c6_551, %c0_552, %c0_553] : memref<8x20x20xf32, #tpu.memory_space<vmem>>, vector<1x20x20xf32>
    %652 = vector.shape_cast %651 : vector<1x20x20xf32> to vector<20x20xf32>
    %653 = vector.broadcast %650 : f32 to vector<20x20xf32>
    %654 = arith.mulf %653, %652 : vector<20x20xf32>
    %655 = arith.addf %649, %654 : vector<20x20xf32>
    %c0_554 = arith.constant 0 : index
    %c7_555 = arith.constant 7 : index
    %656 = memref.load %arg6[%c0_554, %c7_555] : memref<2x8xf32, #tpu.memory_space<smem>>
    %c7_556 = arith.constant 7 : index
    %c0_557 = arith.constant 0 : index
    %c0_558 = arith.constant 0 : index
    %657 = vector.load %arg10[%c7_556, %c0_557, %c0_558] : memref<8x20x20xf32, #tpu.memory_space<vmem>>, vector<1x20x20xf32>
    %658 = vector.shape_cast %657 : vector<1x20x20xf32> to vector<20x20xf32>
    %659 = vector.broadcast %656 : f32 to vector<20x20xf32>
    %660 = arith.mulf %659, %658 : vector<20x20xf32>
    %661 = arith.addf %655, %660 : vector<20x20xf32>
    %c0_559 = arith.constant 0 : index
    %662 = memref.load %arg7[%c0_559] : memref<2xf32, #tpu.memory_space<smem>>
    %663 = vector.broadcast %662 : f32 to vector<22x22xf32>
    %c0_560 = arith.constant 0 : index
    %c0_561 = arith.constant 0 : index
    %c0_562 = arith.constant 0 : index
    %c0_563 = arith.constant 0 : index
    %664 = vector.load %arg8[%c0_560, %c0_561, %c0_562, %c0_563] : memref<1x2x22x22xf32, #tpu.memory_space<vmem>>, vector<1x1x22x22xf32>
    %665 = vector.shape_cast %664 : vector<1x1x22x22xf32> to vector<22x22xf32>
    %666 = vector.shape_cast %663 : vector<22x22xf32> to vector<1x1x22x22xf32>
    tpu.vector_store %arg8[%c0_560, %c0_561, %c0_562, %c0_563], %666 {strides = array<i32>} : memref<1x2x22x22xf32, #tpu.memory_space<vmem>>, vector<1x1x22x22xf32>,
    %c0_564 = arith.constant 0 : index
    %c0_565 = arith.constant 0 : index
    %c1_566 = arith.constant 1 : index
    %c1_567 = arith.constant 1 : index
    %667 = vector.load %arg8[%c0_564, %c0_565, %c1_566, %c1_567] : memref<1x2x22x22xf32, #tpu.memory_space<vmem>>, vector<1x1x20x20xf32>
    %668 = vector.shape_cast %667 : vector<1x1x20x20xf32> to vector<20x20xf32>
    %669 = vector.shape_cast %661 : vector<20x20xf32> to vector<1x1x20x20xf32>
    tpu.vector_store %arg8[%c0_564, %c0_565, %c1_566, %c1_567], %669 {strides = array<i32>} : memref<1x2x22x22xf32, #tpu.memory_space<vmem>>, vector<1x1x20x20xf32>,
    %c1_568 = arith.constant 1 : index
    %670 = memref.load %arg7[%c1_568] : memref<2xf32, #tpu.memory_space<smem>>
    %671 = vector.broadcast %670 : f32 to vector<20x20xf32>
    %c1_569 = arith.constant 1 : index
    %c0_570 = arith.constant 0 : index
    %672 = memref.load %arg6[%c1_569, %c0_570] : memref<2x8xf32, #tpu.memory_space<smem>>
    %c0_571 = arith.constant 0 : index
    %c0_572 = arith.constant 0 : index
    %c0_573 = arith.constant 0 : index
    %673 = vector.load %arg10[%c0_571, %c0_572, %c0_573] : memref<8x20x20xf32, #tpu.memory_space<vmem>>, vector<1x20x20xf32>
    %674 = vector.shape_cast %673 : vector<1x20x20xf32> to vector<20x20xf32>
    %675 = vector.broadcast %672 : f32 to vector<20x20xf32>
    %676 = arith.mulf %675, %674 : vector<20x20xf32>
    %677 = arith.addf %671, %676 : vector<20x20xf32>
    %c1_574 = arith.constant 1 : index
    %c1_575 = arith.constant 1 : index
    %678 = memref.load %arg6[%c1_574, %c1_575] : memref<2x8xf32, #tpu.memory_space<smem>>
    %c1_576 = arith.constant 1 : index
    %c0_577 = arith.constant 0 : index
    %c0_578 = arith.constant 0 : index
    %679 = vector.load %arg10[%c1_576, %c0_577, %c0_578] : memref<8x20x20xf32, #tpu.memory_space<vmem>>, vector<1x20x20xf32>
    %680 = vector.shape_cast %679 : vector<1x20x20xf32> to vector<20x20xf32>
    %681 = vector.broadcast %678 : f32 to vector<20x20xf32>
    %682 = arith.mulf %681, %680 : vector<20x20xf32>
    %683 = arith.addf %677, %682 : vector<20x20xf32>
    %c1_579 = arith.constant 1 : index
    %c2_580 = arith.constant 2 : index
    %684 = memref.load %arg6[%c1_579, %c2_580] : memref<2x8xf32, #tpu.memory_space<smem>>
    %c2_581 = arith.constant 2 : index
    %c0_582 = arith.constant 0 : index
    %c0_583 = arith.constant 0 : index
    %685 = vector.load %arg10[%c2_581, %c0_582, %c0_583] : memref<8x20x20xf32, #tpu.memory_space<vmem>>, vector<1x20x20xf32>
    %686 = vector.shape_cast %685 : vector<1x20x20xf32> to vector<20x20xf32>
    %687 = vector.broadcast %684 : f32 to vector<20x20xf32>
    %688 = arith.mulf %687, %686 : vector<20x20xf32>
    %689 = arith.addf %683, %688 : vector<20x20xf32>
    %c1_584 = arith.constant 1 : index
    %c3_585 = arith.constant 3 : index
    %690 = memref.load %arg6[%c1_584, %c3_585] : memref<2x8xf32, #tpu.memory_space<smem>>
    %c3_586 = arith.constant 3 : index
    %c0_587 = arith.constant 0 : index
    %c0_588 = arith.constant 0 : index
    %691 = vector.load %arg10[%c3_586, %c0_587, %c0_588] : memref<8x20x20xf32, #tpu.memory_space<vmem>>, vector<1x20x20xf32>
    %692 = vector.shape_cast %691 : vector<1x20x20xf32> to vector<20x20xf32>
    %693 = vector.broadcast %690 : f32 to vector<20x20xf32>
    %694 = arith.mulf %693, %692 : vector<20x20xf32>
    %695 = arith.addf %689, %694 : vector<20x20xf32>
    %c1_589 = arith.constant 1 : index
    %c4_590 = arith.constant 4 : index
    %696 = memref.load %arg6[%c1_589, %c4_590] : memref<2x8xf32, #tpu.memory_space<smem>>
    %c4_591 = arith.constant 4 : index
    %c0_592 = arith.constant 0 : index
    %c0_593 = arith.constant 0 : index
    %697 = vector.load %arg10[%c4_591, %c0_592, %c0_593] : memref<8x20x20xf32, #tpu.memory_space<vmem>>, vector<1x20x20xf32>
    %698 = vector.shape_cast %697 : vector<1x20x20xf32> to vector<20x20xf32>
    %699 = vector.broadcast %696 : f32 to vector<20x20xf32>
    %700 = arith.mulf %699, %698 : vector<20x20xf32>
    %701 = arith.addf %695, %700 : vector<20x20xf32>
    %c1_594 = arith.constant 1 : index
    %c5_595 = arith.constant 5 : index
    %702 = memref.load %arg6[%c1_594, %c5_595] : memref<2x8xf32, #tpu.memory_space<smem>>
    %c5_596 = arith.constant 5 : index
    %c0_597 = arith.constant 0 : index
    %c0_598 = arith.constant 0 : index
    %703 = vector.load %arg10[%c5_596, %c0_597, %c0_598] : memref<8x20x20xf32, #tpu.memory_space<vmem>>, vector<1x20x20xf32>
    %704 = vector.shape_cast %703 : vector<1x20x20xf32> to vector<20x20xf32>
    %705 = vector.broadcast %702 : f32 to vector<20x20xf32>
    %706 = arith.mulf %705, %704 : vector<20x20xf32>
    %707 = arith.addf %701, %706 : vector<20x20xf32>
    %c1_599 = arith.constant 1 : index
    %c6_600 = arith.constant 6 : index
    %708 = memref.load %arg6[%c1_599, %c6_600] : memref<2x8xf32, #tpu.memory_space<smem>>
    %c6_601 = arith.constant 6 : index
    %c0_602 = arith.constant 0 : index
    %c0_603 = arith.constant 0 : index
    %709 = vector.load %arg10[%c6_601, %c0_602, %c0_603] : memref<8x20x20xf32, #tpu.memory_space<vmem>>, vector<1x20x20xf32>
    %710 = vector.shape_cast %709 : vector<1x20x20xf32> to vector<20x20xf32>
    %711 = vector.broadcast %708 : f32 to vector<20x20xf32>
    %712 = arith.mulf %711, %710 : vector<20x20xf32>
    %713 = arith.addf %707, %712 : vector<20x20xf32>
    %c1_604 = arith.constant 1 : index
    %c7_605 = arith.constant 7 : index
    %714 = memref.load %arg6[%c1_604, %c7_605] : memref<2x8xf32, #tpu.memory_space<smem>>
    %c7_606 = arith.constant 7 : index
    %c0_607 = arith.constant 0 : index
    %c0_608 = arith.constant 0 : index
    %715 = vector.load %arg10[%c7_606, %c0_607, %c0_608] : memref<8x20x20xf32, #tpu.memory_space<vmem>>, vector<1x20x20xf32>
    %716 = vector.shape_cast %715 : vector<1x20x20xf32> to vector<20x20xf32>
    %717 = vector.broadcast %714 : f32 to vector<20x20xf32>
    %718 = arith.mulf %717, %716 : vector<20x20xf32>
    %719 = arith.addf %713, %718 : vector<20x20xf32>
    %c1_609 = arith.constant 1 : index
    %720 = memref.load %arg7[%c1_609] : memref<2xf32, #tpu.memory_space<smem>>
    %721 = vector.broadcast %720 : f32 to vector<22x22xf32>
    %c0_610 = arith.constant 0 : index
    %c1_611 = arith.constant 1 : index
    %c0_612 = arith.constant 0 : index
    %c0_613 = arith.constant 0 : index
    %722 = vector.load %arg8[%c0_610, %c1_611, %c0_612, %c0_613] : memref<1x2x22x22xf32, #tpu.memory_space<vmem>>, vector<1x1x22x22xf32>
    %723 = vector.shape_cast %722 : vector<1x1x22x22xf32> to vector<22x22xf32>
    %724 = vector.shape_cast %721 : vector<22x22xf32> to vector<1x1x22x22xf32>
    tpu.vector_store %arg8[%c0_610, %c1_611, %c0_612, %c0_613], %724 {strides = array<i32>} : memref<1x2x22x22xf32, #tpu.memory_space<vmem>>, vector<1x1x22x22xf32>,
    %c0_614 = arith.constant 0 : index
    %c1_615 = arith.constant 1 : index
    %c1_616 = arith.constant 1 : index
    %c1_617 = arith.constant 1 : index
    %725 = vector.load %arg8[%c0_614, %c1_615, %c1_616, %c1_617] : memref<1x2x22x22xf32, #tpu.memory_space<vmem>>, vector<1x1x20x20xf32>
    %726 = vector.shape_cast %725 : vector<1x1x20x20xf32> to vector<20x20xf32>
    %727 = vector.shape_cast %719 : vector<20x20xf32> to vector<1x1x20x20xf32>
    tpu.vector_store %arg8[%c0_614, %c1_615, %c1_616, %c1_617], %727 {strides = array<i32>} : memref<1x2x22x22xf32, #tpu.memory_space<vmem>>, vector<1x1x20x20xf32>,
    return
  }
  func.func @transform_0(%arg0: i32) -> (i32, i32, i32, i32) {
    %c0_i32 = arith.constant 0 : i32
    %c0_i32_0 = arith.constant 0 : i32
    %c0_i32_1 = arith.constant 0 : i32
    %c0_i32_2 = arith.constant 0 : i32
    return %arg0, %c0_i32, %c0_i32_0, %c0_i32_1 : i32, i32, i32, i32
  }
  func.func @transform_1(%arg0: i32) -> (i32, i32) {
    %c0_i32 = arith.constant 0 : i32
    %c0_i32_0 = arith.constant 0 : i32
    %c0_i32_1 = arith.constant 0 : i32
    return %c0_i32, %c0_i32_0 : i32, i32
  }
  func.func @transform_2(%arg0: i32) -> i32 {
    %c0_i32 = arith.constant 0 : i32
    %c0_i32_0 = arith.constant 0 : i32
    return %c0_i32 : i32
  }
  func.func @transform_3(%arg0: i32) -> (i32, i32) {
    %c0_i32 = arith.constant 0 : i32
    %c0_i32_0 = arith.constant 0 : i32
    %c0_i32_1 = arith.constant 0 : i32
    return %c0_i32, %c0_i32_0 : i32, i32
  }
  func.func @transform_4(%arg0: i32) -> i32 {
    %c0_i32 = arith.constant 0 : i32
    %c0_i32_0 = arith.constant 0 : i32
    return %c0_i32 : i32
  }
  func.func @transform_5(%arg0: i32) -> (i32, i32) {
    %c0_i32 = arith.constant 0 : i32
    %c0_i32_0 = arith.constant 0 : i32
    %c0_i32_1 = arith.constant 0 : i32
    return %c0_i32, %c0_i32_0 : i32, i32
  }
  func.func @transform_6(%arg0: i32) -> i32 {
    %c0_i32 = arith.constant 0 : i32
    %c0_i32_0 = arith.constant 0 : i32
    return %c0_i32 : i32
  }
  func.func @transform_7(%arg0: i32) -> (i32, i32, i32, i32) {
    %c0_i32 = arith.constant 0 : i32
    %c0_i32_0 = arith.constant 0 : i32
    %c0_i32_1 = arith.constant 0 : i32
    %c0_i32_2 = arith.constant 0 : i32
    return %arg0, %c0_i32, %c0_i32_0, %c0_i32_1 : i32, i32, i32, i32
  }
}

</mosaic_0001>

<llo_original>
// kernel: model_forward.1
$region0: #{model_forward.1}
  #allocation0 [shape = 'u32[]', space=smem, size = 0x4, offset = 0x4, fixed_abs, tag = 'smem constant byte address 0x4 - core index']
  #allocation1 [shape = 'u32[144,128]{1,0:T(1,128)}', space=vmem, size = 0x12000, scoped, tag = 'internal scratch']
  #allocation2 [shape = 'f32[7,18,18]{2,1,0:T(8,128)}', space=vmem, size = 0x15000, scoped, tag = 'scratch operand']
  #allocation3 [shape = 'f32[8,20,20]{2,1,0:T(8,128)}', space=vmem, size = 0x18000, scoped, tag = 'scratch operand']
  %s0 = inlined_call_operand.hbm [shape: f32[2,3,16,16], index: 0, kind: input, shape index: {}]
  %s1 = inlined_call_operand.vmem [shape: f32[7,3], index: 1, kind: input, shape index: {}]
  %s2 = inlined_call_operand.vmem [shape: f32[7], index: 2, kind: input, shape index: {}]
  %s3 = inlined_call_operand.vmem [shape: f32[8,7], index: 3, kind: input, shape index: {}]
  %s4 = inlined_call_operand.vmem [shape: f32[8], index: 4, kind: input, shape index: {}]
  %s5 = inlined_call_operand.vmem [shape: f32[2,8], index: 5, kind: input, shape index: {}]
  %s6 = inlined_call_operand.vmem [shape: f32[2], index: 6, kind: input, shape index: {}]
  %s7 = inlined_call_operand.vmem [shape: f32[2,2,22,22], index: 7, kind: output, shape index: {}]
  %s8 = sld [smem:[#allocation0]]
  $region89: #{model_forward.1} parent=0
    _
  %s10 = ssub.s32 1, %s8
  %s11 = scalar_select 0, %s10, %s8
  $region1: #{model_forward.1} parent=0
    #allocation4 [shape = 'u8[49152]{0}', space=vmem, size = 0xc000, scoped, tag = 'input window, operand 0']
    #allocation5 [shape = 's32[2]{0}', space=sflag, size = 0x8, scoped, tag = 'scoped memory for model_forward.1']
    #allocation6 [shape = 's32[2]{0}', space=sflag, size = 0x8, scoped, tag = 'scoped memory for model_forward.1']
    #allocation7 [shape = 'u8[4096]{0}', space=smem, size = 0x1000, scoped, tag = 'input window, operand 1, single buffered']
    #allocation8 [shape = 'u8[512]{0}', space=smem, size = 0x200, scoped, tag = 'input window, operand 2, single buffered']
    #allocation9 [shape = 's32[1]{0}', space=sflag, size = 0x4, scoped, tag = 'scoped memory for model_forward.1']
    #allocation10 [shape = 'u8[4096]{0}', space=smem, size = 0x1000, scoped, tag = 'input window, operand 3, single buffered']
    #allocation11 [shape = 'u8[512]{0}', space=smem, size = 0x200, scoped, tag = 'input window, operand 4, single buffered']
    #allocation12 [shape = 's32[1]{0}', space=sflag, size = 0x4, scoped, tag = 'scoped memory for model_forward.1']
    #allocation13 [shape = 'u8[1024]{0}', space=smem, size = 0x400, scoped, tag = 'input window, operand 5, single buffered']
    #allocation14 [shape = 'u8[512]{0}', space=smem, size = 0x200, scoped, tag = 'input window, operand 6, single buffered']
    #allocation15 [shape = 's32[1]{0}', space=sflag, size = 0x4, scoped, tag = 'scoped memory for model_forward.1']
    %12 = vsyncpa [#allocation5], 0
    %s13 = scalar_lea.sflag [#allocation5], 1
    %14 = vsyncpa %s13, 0
    %15 = vsyncpa [#allocation6], 0
    %16 = vsyncpa [#allocation9], 0
    %17 = vsyncpa [#allocation12], 0
    %18 = vsyncpa [#allocation15], 0
    loop: start=0, step=1, limit=4
    $region2: #{model_forward.1} parent=1 // loop_pre_header
      _
    $region3: #{model_forward.1} parent=1 // loop_header
      %s20 = sphi 0, %s24
      %p21 = scmp.ge.s32.totalorder %s20, 4
      %s30 = sphi 0, %s32
      %s33 = sphi 0, %s30
      %s34 = sphi 0, %s33
      %s50 = sphi 0, %s34
      %s54 = sphi 0, %s54
      %s56 = sphi 0, %s54
      %s57 = sphi 0, %s56
      %s71 = sphi 0, %s57
      %s75 = sphi 0, %s75
      %s77 = sphi 0, %s75
      %s78 = sphi 0, %s77
      %s92 = sphi 0, %s78
      %s96 = sphi 0, %s96
      %s98 = sphi 0, %s96
      %s99 = sphi 0, %s98
      %s113 = sphi 0, %s99
      %s117 = sphi 0, %s117
      %s119 = sphi 0, %s117
      %s120 = sphi 0, %s119
      %s134 = sphi 0, %s120
      %s138 = sphi 0, %s138
      %s140 = sphi 0, %s138
      %s141 = sphi 0, %s140
      %s155 = sphi 0, %s141
      %s159 = sphi 0, %s159
      %s161 = sphi 0, %s159
      %s162 = sphi 0, %s161
      %s176 = sphi 0, %s162
      %s182 = sphi 0, %s184
      %s185 = sphi 0, %s182
      %s186 = sphi 0, %s185
      %s202 = sphi 0, %s186
    $region4: #{model_forward.1} parent=1 // loop_header_branch
      %23 = sbr.rel (%p21) target = $region8
    $region5: #{model_forward.1} parent=1 // loop_body
      %s25 = ssub.s32 %s20, 1
      %s26 = ssub.s32 %s20, 2
      %s27 = sadd.s32 %s20, 1
      %s28 = ssub.s32 %s20, %s27
      %p29 = scmp.eq.s32.totalorder %s28, 0
      %s31 = sadd.s32 %s30, 1
      %s32 = scalar_select %p29, %s30, %s31
      %p35 = pneg %p29
      %p36 = scmp.eq.s32.totalorder %s20, 1
      %p37 = por %p35, %p36
      %p38 = scmp.ne.s32.totalorder %s30, %s33
      %p39 = scmp.eq.s32.totalorder %s20, 0
      %p40 = por %p38, %p39
      %p41 = scmp.ne.s32.totalorder %s30, %s33
      %p42 = scmp.eq.s32.totalorder %s25, 1
      %p43 = por %p41, %p42
      %p44 = scmp.ne.s32.totalorder %s33, %s34
      %p45 = scmp.eq.s32.totalorder %s25, 0
      %p46 = por %p44, %p45
      %p47 = scmp.ne.s32.totalorder %s33, %s34
      %p48 = scmp.eq.s32.totalorder %s26, 1
      %p49 = por %p47, %p48
      %p51 = scmp.ne.s32.totalorder %s34, %s50
      %p52 = scmp.eq.s32.totalorder %s26, 0
      %p53 = por %p51, %p52
      %s55 = sadd.s32 %s54, 1
      %p58 = scmp.eq.s32.totalorder %s20, 1
      %p59 = scmp.ne.s32.totalorder %s54, %s56
      %p60 = scmp.eq.s32.totalorder %s20, 0
      %p61 = por %p59, %p60
      %p62 = scmp.ne.s32.totalorder %s54, %s56
      %p63 = scmp.eq.s32.totalorder %s25, 1
      %p64 = por %p62, %p63
      %p65 = scmp.ne.s32.totalorder %s56, %s57
      %p66 = scmp.eq.s32.totalorder %s25, 0
      %p67 = por %p65, %p66
      %p68 = scmp.ne.s32.totalorder %s56, %s57
      %p69 = scmp.eq.s32.totalorder %s26, 1
      %p70 = por %p68, %p69
      %p72 = scmp.ne.s32.totalorder %s57, %s71
      %p73 = scmp.eq.s32.totalorder %s26, 0
      %p74 = por %p72, %p73
      %s76 = sadd.s32 %s75, 1
      %p79 = scmp.eq.s32.totalorder %s20, 1
      %p80 = scmp.ne.s32.totalorder %s75, %s77
      %p81 = scmp.eq.s32.totalorder %s20, 0
      %p82 = por %p80, %p81
      %p83 = scmp.ne.s32.totalorder %s75, %s77
      %p84 = scmp.eq.s32.totalorder %s25, 1
      %p85 = por %p83, %p84
      %p86 = scmp.ne.s32.totalorder %s77, %s78
      %p87 = scmp.eq.s32.totalorder %s25, 0
      %p88 = por %p86, %p87
      %p89 = scmp.ne.s32.totalorder %s77, %s78
      %p90 = scmp.eq.s32.totalorder %s26, 1
      %p91 = por %p89, %p90
      %p93 = scmp.ne.s32.totalorder %s78, %s92
      %p94 = scmp.eq.s32.totalorder %s26, 0
      %p95 = por %p93, %p94
      %s97 = sadd.s32 %s96, 1
      %p100 = scmp.eq.s32.totalorder %s20, 1
      %p101 = scmp.ne.s32.totalorder %s96, %s98
      %p102 = scmp.eq.s32.totalorder %s20, 0
      %p103 = por %p101, %p102
      %p104 = scmp.ne.s32.totalorder %s96, %s98
      %p105 = scmp.eq.s32.totalorder %s25, 1
      %p106 = por %p104, %p105
      %p107 = scmp.ne.s32.totalorder %s98, %s99
      %p108 = scmp.eq.s32.totalorder %s25, 0
      %p109 = por %p107, %p108
      %p110 = scmp.ne.s32.totalorder %s98, %s99
      %p111 = scmp.eq.s32.totalorder %s26, 1
      %p112 = por %p110, %p111
      %p114 = scmp.ne.s32.totalorder %s99, %s113
      %p115 = scmp.eq.s32.totalorder %s26, 0
      %p116 = por %p114, %p115
      %s118 = sadd.s32 %s117, 1
      %p121 = scmp.eq.s32.totalorder %s20, 1
      %p122 = scmp.ne.s32.totalorder %s117, %s119
      %p123 = scmp.eq.s32.totalorder %s20, 0
      %p124 = por %p122, %p123
      %p125 = scmp.ne.s32.totalorder %s117, %s119
      %p126 = scmp.eq.s32.totalorder %s25, 1
      %p127 = por %p125, %p126
      %p128 = scmp.ne.s32.totalorder %s119, %s120
      %p129 = scmp.eq.s32.totalorder %s25, 0
      %p130 = por %p128, %p129
      %p131 = scmp.ne.s32.totalorder %s119, %s120
      %p132 = scmp.eq.s32.totalorder %s26, 1
      %p133 = por %p131, %p132
      %p135 = scmp.ne.s32.totalorder %s120, %s134
      %p136 = scmp.eq.s32.totalorder %s26, 0
      %p137 = por %p135, %p136
      %s139 = sadd.s32 %s138, 1
      %p142 = scmp.eq.s32.totalorder %s20, 1
      %p143 = scmp.ne.s32.totalorder %s138, %s140
      %p144 = scmp.eq.s32.totalorder %s20, 0
      %p145 = por %p143, %p144
      %p146 = scmp.ne.s32.totalorder %s138, %s140
      %p147 = scmp.eq.s32.totalorder %s25, 1
      %p148 = por %p146, %p147
      %p149 = scmp.ne.s32.totalorder %s140, %s141
      %p150 = scmp.eq.s32.totalorder %s25, 0
      %p151 = por %p149, %p150
      %p152 = scmp.ne.s32.totalorder %s140, %s141
      %p153 = scmp.eq.s32.totalorder %s26, 1
      %p154 = por %p152, %p153
      %p156 = scmp.ne.s32.totalorder %s141, %s155
      %p157 = scmp.eq.s32.totalorder %s26, 0
      %p158 = por %p156, %p157
      %s160 = sadd.s32 %s159, 1
      %p163 = scmp.eq.s32.totalorder %s20, 1
      %p164 = scmp.ne.s32.totalorder %s159, %s161
      %p165 = scmp.eq.s32.totalorder %s20, 0
      %p166 = por %p164, %p165
      %p167 = scmp.ne.s32.totalorder %s159, %s161
      %p168 = scmp.eq.s32.totalorder %s25, 1
      %p169 = por %p167, %p168
      %p170 = scmp.ne.s32.totalorder %s161, %s162
      %p171 = scmp.eq.s32.totalorder %s25, 0
      %p172 = por %p170, %p171
      %p173 = scmp.ne.s32.totalorder %s161, %s162
      %p174 = scmp.eq.s32.totalorder %s26, 1
      %p175 = por %p173, %p174
      %p177 = scmp.ne.s32.totalorder %s162, %s176
      %p178 = scmp.eq.s32.totalorder %s26, 0
      %p179 = por %p177, %p178
      %s180 = ssub.s32 %s20, %s27
      %p181 = scmp.eq.s32.totalorder %s180, 0
      %s183 = sadd.s32 %s182, 1
      %s184 = scalar_select %p181, %s182, %s183
      %p187 = pneg %p181
      %p188 = scmp.eq.s32.totalorder %s20, 1
      %p189 = por %p187, %p188
      %p190 = scmp.ne.s32.totalorder %s182, %s185
      %p191 = scmp.eq.s32.totalorder %s20, 0
      %p192 = por %p190, %p191
      %p193 = scmp.ne.s32.totalorder %s182, %s185
      %p194 = scmp.eq.s32.totalorder %s25, 1
      %p195 = por %p193, %p194
      %p196 = scmp.ne.s32.totalorder %s185, %s186
      %p197 = scmp.eq.s32.totalorder %s25, 0
      %p198 = por %p196, %p197
      %p199 = scmp.ne.s32.totalorder %s185, %s186
      %p200 = scmp.eq.s32.totalorder %s26, 1
      %p201 = por %p199, %p200
      %p203 = scmp.ne.s32.totalorder %s186, %s202
      %p204 = scmp.eq.s32.totalorder %s26, 0
      %p205 = por %p203, %p204
      %p206 = scmp.le.s32.totalorder 1, %s20
      %p207 = scmp.lt.s32.totalorder %s20, 3
      %p208 = pnand %p206, %p207
      %p209 = pneg %p208
      // Predicated region
      $region9: #{model_forward.1} parent=5 // pred_check
        _
      $region10: #{model_forward.1} parent=5 // pred_check_branch
        %211 = sbr.rel (%p208) target = $region12
      $region11: #{model_forward.1} parent=5 // pred_region
        %s212 = ssub.s32 %s20, 1
        // Predicated region
        $region13: #{model_forward.1} parent=11 // pred_check
          %p213 = pneg %p67
        $region14: #{model_forward.1} parent=11 // pred_check_branch
          %215 = sbr.rel (%p213) target = $region16
        $region15: #{model_forward.1} parent=11 // pred_region
          %s217 = ssub.s32 128, 128
          %218 = vsyncadd [#allocation6], %s217
          %s220 = sshll.u32 %s1, 4
          %s221 = int_to_ptr.vmem [resolvable:$true] %s220
          %223 = dma.vmem_to_smem %s221, 128, [#allocation7], [#allocation6]
        $region16: #{model_forward.1} parent=11 // pred_fallthru
          _
        // Predicated region
        $region17: #{model_forward.1} parent=11 // pred_check
          %p224 = pneg %p88
        $region18: #{model_forward.1} parent=11 // pred_check_branch
          %226 = sbr.rel (%p224) target = $region20
        $region19: #{model_forward.1} parent=11 // pred_region
          %s228 = ssub.s32 16, 16
          %229 = vsyncadd [#allocation9], %s228
          %s231 = sshll.u32 %s2, 4
          %s232 = int_to_ptr.vmem [resolvable:$true] %s231
          %234 = dma.vmem_to_smem %s232, 16, [#allocation8], [#allocation9]
        $region20: #{model_forward.1} parent=11 // pred_fallthru
          _
        // Predicated region
        $region21: #{model_forward.1} parent=11 // pred_check
          %p235 = pneg %p109
        $region22: #{model_forward.1} parent=11 // pred_check_branch
          %237 = sbr.rel (%p235) target = $region24
        $region23: #{model_forward.1} parent=11 // pred_region
          %s239 = ssub.s32 128, 128
          %240 = vsyncadd [#allocation9], %s239
          %s242 = sshll.u32 %s3, 4
          %s243 = int_to_ptr.vmem [resolvable:$true] %s242
          %245 = dma.vmem_to_smem %s243, 128, [#allocation10], [#allocation9]
        $region24: #{model_forward.1} parent=11 // pred_fallthru
          _
        // Predicated region
        $region25: #{model_forward.1} parent=11 // pred_check
          %p246 = pneg %p130
        $region26: #{model_forward.1} parent=11 // pred_check_branch
          %248 = sbr.rel (%p246) target = $region28
        $region27: #{model_forward.1} parent=11 // pred_region
          %s250 = ssub.s32 16, 16
          %251 = vsyncadd [#allocation12], %s250
          %s253 = sshll.u32 %s4, 4
          %s254 = int_to_ptr.vmem [resolvable:$true] %s253
          %256 = dma.vmem_to_smem %s254, 16, [#allocation11], [#allocation12]
        $region28: #{model_forward.1} parent=11 // pred_fallthru
          _
        // Predicated region
        $region29: #{model_forward.1} parent=11 // pred_check
          %p257 = pneg %p151
        $region30: #{model_forward.1} parent=11 // pred_check_branch
          %259 = sbr.rel (%p257) target = $region32
        $region31: #{model_forward.1} parent=11 // pred_region
          %s261 = ssub.s32 32, 32
          %262 = vsyncadd [#allocation12], %s261
          %s264 = sshll.u32 %s5, 4
          %s265 = int_to_ptr.vmem [resolvable:$true] %s264
          %267 = dma.vmem_to_smem %s265, 32, [#allocation13], [#allocation12]
        $region32: #{model_forward.1} parent=11 // pred_fallthru
          _
        // Predicated region
        $region33: #{model_forward.1} parent=11 // pred_check
          %p268 = pneg %p172
        $region34: #{model_forward.1} parent=11 // pred_check_branch
          %270 = sbr.rel (%p268) target = $region36
        $region35: #{model_forward.1} parent=11 // pred_region
          %s272 = ssub.s32 16, 16
          %273 = vsyncadd [#allocation15], %s272
          %s275 = sshll.u32 %s6, 4
          %s276 = int_to_ptr.vmem [resolvable:$true] %s275
          %278 = dma.vmem_to_smem %s276, 16, [#allocation14], [#allocation15]
        $region36: #{model_forward.1} parent=11 // pred_fallthru
          _
      $region12: #{model_forward.1} parent=5 // pred_fallthru
        _
      %p279 = scmp.lt.s32.totalorder %s20, 2
      // Predicated region
      $region37: #{model_forward.1} parent=5 // pred_check
        %p280 = pneg %p279
      $region38: #{model_forward.1} parent=5 // pred_check_branch
        %282 = sbr.rel (%p280) target = $region40
      $region39: #{model_forward.1} parent=5 // pred_region
        // Predicated region
        $region41: #{model_forward.1} parent=39 // pred_check
          %p283 = pneg %p40
        $region42: #{model_forward.1} parent=39 // pred_check_branch
          %285 = sbr.rel (%p283) target = $region44
        $region43: #{model_forward.1} parent=39 // pred_region
          %s286 = sand.u32 %s30, 1
          %s287 = scalar_lea.sflag [#allocation5], %s286
          %s288 = sand.u32 %s30, 1
          %s289 = smul.addr %s288, 48
          %s290 = scalar_lea.vmem [#allocation4], %s289
          %s292 = ssub.s32 768, 768
          %293 = vsyncadd %s287, %s292
          %s294 = smul.addr %s20, 6
          %s295 = smul.addr %s294, 128
          %s296 = scalar_lea.hbm %s0, %s295
          %s297 = sshll.u32 %s290, 4
          %s298 = int_to_ptr.vmem [resolvable:$true] %s297
          %303 = dma.hbm_to_vmem [thread:$0]  %s296, 768, %s298, %s287, 128, 128, 8
        $region44: #{model_forward.1} parent=39 // pred_fallthru
          _
      $region40: #{model_forward.1} parent=5 // pred_fallthru
        _
      %p304 = scmp.le.s32.totalorder 1, %s20
      %p305 = scmp.lt.s32.totalorder %s20, 3
      %p306 = pnand %p304, %p305
      %p307 = pneg %p306
      // Predicated region
      $region45: #{model_forward.1} parent=5 // pred_check
        _
      $region46: #{model_forward.1} parent=5 // pred_check_branch
        %309 = sbr.rel (%p306) target = $region48
      $region47: #{model_forward.1} parent=5 // pred_region
        %s310 = ssub.s32 %s20, 1
        %s311 = sand.u32 %s33, 1
        %s312 = scalar_lea.sflag [#allocation5], %s311
        %s313 = sand.u32 %s33, 1
        %s314 = smul.addr %s313, 48
        %s315 = scalar_lea.vmem [#allocation4], %s314
        // Predicated region
        $region49: #{model_forward.1} parent=47 // pred_check
          %p316 = pneg %p46
        $region50: #{model_forward.1} parent=47 // pred_check_branch
          %318 = sbr.rel (%p316) target = $region52
        $region51: #{model_forward.1} parent=47 // pred_region
          %319 = dma.done %s312, 768
        $region52: #{model_forward.1} parent=47 // pred_fallthru
          _
        // Predicated region
        $region53: #{model_forward.1} parent=47 // pred_check
          %p320 = pneg %p67
        $region54: #{model_forward.1} parent=47 // pred_check_branch
          %322 = sbr.rel (%p320) target = $region56
        $region55: #{model_forward.1} parent=47 // pred_region
          %323 = dma.done [#allocation6], 128
        $region56: #{model_forward.1} parent=47 // pred_fallthru
          _
        // Predicated region
        $region57: #{model_forward.1} parent=47 // pred_check
          %p324 = pneg %p88
        $region58: #{model_forward.1} parent=47 // pred_check_branch
          %326 = sbr.rel (%p324) target = $region60
        $region59: #{model_forward.1} parent=47 // pred_region
          %327 = dma.done [#allocation9], 16
        $region60: #{model_forward.1} parent=47 // pred_fallthru
          _
        // Predicated region
        $region61: #{model_forward.1} parent=47 // pred_check
          %p328 = pneg %p109
        $region62: #{model_forward.1} parent=47 // pred_check_branch
          %330 = sbr.rel (%p328) target = $region64
        $region63: #{model_forward.1} parent=47 // pred_region
          %331 = dma.done [#allocation9], 128
        $region64: #{model_forward.1} parent=47 // pred_fallthru
          _
        // Predicated region
        $region65: #{model_forward.1} parent=47 // pred_check
          %p332 = pneg %p130
        $region66: #{model_forward.1} parent=47 // pred_check_branch
          %334 = sbr.rel (%p332) target = $region68
        $region67: #{model_forward.1} parent=47 // pred_region
          %335 = dma.done [#allocation12], 16
        $region68: #{model_forward.1} parent=47 // pred_fallthru
          _
        // Predicated region
        $region69: #{model_forward.1} parent=47 // pred_check
          %p336 = pneg %p151
        $region70: #{model_forward.1} parent=47 // pred_check_branch
          %338 = sbr.rel (%p336) target = $region72
        $region71: #{model_forward.1} parent=47 // pred_region
          %339 = dma.done [#allocation12], 32
        $region72: #{model_forward.1} parent=47 // pred_fallthru
          _
        // Predicated region
        $region73: #{model_forward.1} parent=47 // pred_check
          %p340 = pneg %p172
        $region74: #{model_forward.1} parent=47 // pred_check_branch
          %342 = sbr.rel (%p340) target = $region76
        $region75: #{model_forward.1} parent=47 // pred_region
          %343 = dma.done [#allocation15], 16
        $region76: #{model_forward.1} parent=47 // pred_fallthru
          _
        %344 = sfence
        %s345 = sand.u32 %s33, 1
        %s346 = scalar_lea.sflag [#allocation5], %s345
        %s347 = sand.u32 %s33, 1
        %s348 = smul.addr %s347, 48
        %s349 = scalar_lea.vmem [#allocation4], %s348
        %p350 = pneg %p46
        %p351 = pneg %p43
        %p352 = pneg %p67
        %p353 = pneg %p64
        %p354 = pneg %p88
        %p355 = pneg %p85
        %p356 = pneg %p109
        %p357 = pneg %p106
        %p358 = pneg %p130
        %p359 = pneg %p127
        %p360 = pneg %p151
        %p361 = pneg %p148
        %p362 = pneg %p172
        %p363 = pneg %p169
        %p364 = pneg %p198
        %p365 = pneg %p195
        %p366 = scmp.lt.s32.totalorder %s25, 1
        %s367 = scalar_select %p366, %s25, 1
        %s368 = smul.addr %s367, 6
        %s369 = smul.addr %s368, 8
        %s370 = scalar_lea.vmem %s7, %s369
        %p371 = scmp.lt.s32.totalorder %s25, 1
        %s372 = scalar_select %p371, %s25, 1
        %s373 = smul.addr %s372, 6
        %s374 = smul.addr %s373, 8
        %s375 = scalar_lea.vmem %s7, %s374
        %s376 = sld [smem:[#allocation8]]
        %v377 = vstv %s376
        %s378 = sld [smem:[#allocation7]]
        %v379 = vld [vmem:[%s315] sm:$0xff]
        %v380 = vld [vmem:[%s315 + $0x8] sm:$0xff]
        %v381 = vstv %s378
        %v382 = vmul.f32 %v381, %v379
        %v383 = vmul.f32 %v381, %v380
        %v384 = vadd.f32 %v377, %v382
        %v385 = vadd.f32 %v377, %v383
        %s386 = sld [smem:[#allocation7 + $0x1]]
        %s387 = scalar_lea.vmem %s315, 16 [#allocation4]
        %v388 = vld [vmem:[%s387] sm:$0xff]
        %v389 = vld [vmem:[%s387 + $0x8] sm:$0xff]
        %v390 = vstv %s386
        %v391 = vmul.f32 %v390, %v388
        %v392 = vmul.f32 %v390, %v389
        %v393 = vadd.f32 %v384, %v391
        %v394 = vadd.f32 %v385, %v392
        %s395 = sld [smem:[#allocation7 + $0x2]]
        %s396 = scalar_lea.vmem %s315, 32 [#allocation4]
        %v397 = vld [vmem:[%s396] sm:$0xff]
        %v398 = vld [vmem:[%s396 + $0x8] sm:$0xff]
        %v399 = vstv %s395
        %v400 = vmul.f32 %v399, %v397
        %v401 = vmul.f32 %v399, %v398
        %v402 = vadd.f32 %v393, %v400
        %v403 = vadd.f32 %v394, %v401
        %vm404 = vcmask 146432
        %405 = vst.msk [vmem:[#allocation2] sm:$0xff] %vm404, %v377
        %406 = vst.msk [vmem:[#allocation2 + $0x8] sm:$0xff] %vm404, %v377
        %vm407 = vcmask 140288
        %408 = vst.msk [vmem:[#allocation2 + $0x10] sm:$0x3] %vm407, %v377
        %411 = vrot.lane.b32.xlu0 %v402, 1
        %v412 = vpop.permute.xlu0 %411
        %413 = vrot.lane.b32.xlu0 %v403, 1
        %v414 = vpop.permute.xlu0 %413
        %vm417 = vcmask 138248
        %418 = vst.msk [vmem:[#allocation2 + $0x1] sm:$0xff] %vm417, %v412
        %419 = vst.msk [vmem:[#allocation2 + $0x9] sm:$0xff] %vm417, %v414
        %s420 = sld [smem:[#allocation8 + $0x1]]
        %v421 = vstv %s420
        %s422 = sld [smem:[#allocation7 + $0x80]]
        %v423 = vld [vmem:[%s315] sm:$0xff]
        %v424 = vld [vmem:[%s315 + $0x8] sm:$0xff]
        %v425 = vstv %s422
        %v426 = vmul.f32 %v425, %v423
        %v427 = vmul.f32 %v425, %v424
        %v428 = vadd.f32 %v421, %v426
        %v429 = vadd.f32 %v421, %v427
        %s430 = sld [smem:[#allocation7 + $0x81]]
        %v431 = vld [vmem:[%s387] sm:$0xff]
        %v432 = vld [vmem:[%s387 + $0x8] sm:$0xff]
        %v433 = vstv %s430
        %v434 = vmul.f32 %v433, %v431
        %v435 = vmul.f32 %v433, %v432
        %v436 = vadd.f32 %v428, %v434
        %v437 = vadd.f32 %v429, %v435
        %s438 = sld [smem:[#allocation7 + $0x82]]
        %v439 = vld [vmem:[%s396] sm:$0xff]
        %v440 = vld [vmem:[%s396 + $0x8] sm:$0xff]
        %v441 = vstv %s438
        %v442 = vmul.f32 %v441, %v439
        %v443 = vmul.f32 %v441, %v440
        %v444 = vadd.f32 %v436, %v442
        %v445 = vadd.f32 %v437, %v443
        %s446 = scalar_lea.vmem [#allocation2], 24
        %447 = vst.msk [vmem:[%s446] sm:$0xff] %vm404, %v421
        %448 = vst.msk [vmem:[%s446 + $0x8] sm:$0xff] %vm404, %v421
        %449 = vst.msk [vmem:[%s446 + $0x10] sm:$0x3] %vm407, %v421
        %452 = vrot.lane.b32.xlu0 %v444, 1
        %v453 = vpop.permute.xlu0 %452
        %454 = vrot.lane.b32.xlu0 %v445, 1
        %v455 = vpop.permute.xlu0 %454
        %458 = vst.msk [vmem:[%s446 + $0x1] sm:$0xff] %vm417, %v453
        %459 = vst.msk [vmem:[%s446 + $0x9] sm:$0xff] %vm417, %v455
        %s460 = sld [smem:[#allocation8 + $0x2]]
        %v461 = vstv %s460
        %s462 = sld [smem:[#allocation7 + $0x100]]
        %v463 = vld [vmem:[%s315] sm:$0xff]
        %v464 = vld [vmem:[%s315 + $0x8] sm:$0xff]
        %v465 = vstv %s462
        %v466 = vmul.f32 %v465, %v463
        %v467 = vmul.f32 %v465, %v464
        %v468 = vadd.f32 %v461, %v466
        %v469 = vadd.f32 %v461, %v467
        %s470 = sld [smem:[#allocation7 + $0x101]]
        %v471 = vld [vmem:[%s387] sm:$0xff]
        %v472 = vld [vmem:[%s387 + $0x8] sm:$0xff]
        %v473 = vstv %s470
        %v474 = vmul.f32 %v473, %v471
        %v475 = vmul.f32 %v473, %v472
        %v476 = vadd.f32 %v468, %v474
        %v477 = vadd.f32 %v469, %v475
        %s478 = sld [smem:[#allocation7 + $0x102]]
        %v479 = vld [vmem:[%s396] sm:$0xff]
        %v480 = vld [vmem:[%s396 + $0x8] sm:$0xff]
        %v481 = vstv %s478
        %v482 = vmul.f32 %v481, %v479
        %v483 = vmul.f32 %v481, %v480
        %v484 = vadd.f32 %v476, %v482
        %v485 = vadd.f32 %v477, %v483
        %s486 = scalar_lea.vmem [#allocation2], 48
        %487 = vst.msk [vmem:[%s486] sm:$0xff] %vm404, %v461
        %488 = vst.msk [vmem:[%s486 + $0x8] sm:$0xff] %vm404, %v461
        %489 = vst.msk [vmem:[%s486 + $0x10] sm:$0x3] %vm407, %v461
        %492 = vrot.lane.b32.xlu0 %v484, 1
        %v493 = vpop.permute.xlu0 %492
        %494 = vrot.lane.b32.xlu0 %v485, 1
        %v495 = vpop.permute.xlu0 %494
        %498 = vst.msk [vmem:[%s486 + $0x1] sm:$0xff] %vm417, %v493
        %499 = vst.msk [vmem:[%s486 + $0x9] sm:$0xff] %vm417, %v495
        %s500 = sld [smem:[#allocation8 + $0x3]]
        %v501 = vstv %s500
        %s502 = sld [smem:[#allocation7 + $0x180]]
        %v503 = vld [vmem:[%s315] sm:$0xff]
        %v504 = vld [vmem:[%s315 + $0x8] sm:$0xff]
        %v505 = vstv %s502
        %v506 = vmul.f32 %v505, %v503
        %v507 = vmul.f32 %v505, %v504
        %v508 = vadd.f32 %v501, %v506
        %v509 = vadd.f32 %v501, %v507
        %s510 = sld [smem:[#allocation7 + $0x181]]
        %v511 = vld [vmem:[%s387] sm:$0xff]
        %v512 = vld [vmem:[%s387 + $0x8] sm:$0xff]
        %v513 = vstv %s510
        %v514 = vmul.f32 %v513, %v511
        %v515 = vmul.f32 %v513, %v512
        %v516 = vadd.f32 %v508, %v514
        %v517 = vadd.f32 %v509, %v515
        %s518 = sld [smem:[#allocation7 + $0x182]]
        %v519 = vld [vmem:[%s396] sm:$0xff]
        %v520 = vld [vmem:[%s396 + $0x8] sm:$0xff]
        %v521 = vstv %s518
        %v522 = vmul.f32 %v521, %v519
        %v523 = vmul.f32 %v521, %v520
        %v524 = vadd.f32 %v516, %v522
        %v525 = vadd.f32 %v517, %v523
        %s526 = scalar_lea.vmem [#allocation2], 72
        %527 = vst.msk [vmem:[%s526] sm:$0xff] %vm404, %v501
        %528 = vst.msk [vmem:[%s526 + $0x8] sm:$0xff] %vm404, %v501
        %529 = vst.msk [vmem:[%s526 + $0x10] sm:$0x3] %vm407, %v501
        %532 = vrot.lane.b32.xlu0 %v524, 1
        %v533 = vpop.permute.xlu0 %532
        %534 = vrot.lane.b32.xlu0 %v525, 1
        %v535 = vpop.permute.xlu0 %534
        %538 = vst.msk [vmem:[%s526 + $0x1] sm:$0xff] %vm417, %v533
        %539 = vst.msk [vmem:[%s526 + $0x9] sm:$0xff] %vm417, %v535
        %s540 = sld [smem:[#allocation8 + $0x4]]
        %v541 = vstv %s540
        %s542 = sld [smem:[#allocation7 + $0x200]]
        %v543 = vld [vmem:[%s315] sm:$0xff]
        %v544 = vld [vmem:[%s315 + $0x8] sm:$0xff]
        %v545 = vstv %s542
        %v546 = vmul.f32 %v545, %v543
        %v547 = vmul.f32 %v545, %v544
        %v548 = vadd.f32 %v541, %v546
        %v549 = vadd.f32 %v541, %v547
        %s550 = sld [smem:[#allocation7 + $0x201]]
        %v551 = vld [vmem:[%s387] sm:$0xff]
        %v552 = vld [vmem:[%s387 + $0x8] sm:$0xff]
        %v553 = vstv %s550
        %v554 = vmul.f32 %v553, %v551
        %v555 = vmul.f32 %v553, %v552
        %v556 = vadd.f32 %v548, %v554
        %v557 = vadd.f32 %v549, %v555
        %s558 = sld [smem:[#allocation7 + $0x202]]
        %v559 = vld [vmem:[%s396] sm:$0xff]
        %v560 = vld [vmem:[%s396 + $0x8] sm:$0xff]
        %v561 = vstv %s558
        %v562 = vmul.f32 %v561, %v559
        %v563 = vmul.f32 %v561, %v560
        %v564 = vadd.f32 %v556, %v562
        %v565 = vadd.f32 %v557, %v563
        %s566 = scalar_lea.vmem [#allocation2], 96
        %567 = vst.msk [vmem:[%s566] sm:$0xff] %vm404, %v541
        %568 = vst.msk [vmem:[%s566 + $0x8] sm:$0xff] %vm404, %v541
        %569 = vst.msk [vmem:[%s566 + $0x10] sm:$0x3] %vm407, %v541
        %572 = vrot.lane.b32.xlu0 %v564, 1
        %v573 = vpop.permute.xlu0 %572
        %574 = vrot.lane.b32.xlu0 %v565, 1
        %v575 = vpop.permute.xlu0 %574
        %578 = vst.msk [vmem:[%s566 + $0x1] sm:$0xff] %vm417, %v573
        %579 = vst.msk [vmem:[%s566 + $0x9] sm:$0xff] %vm417, %v575
        %s580 = sld [smem:[#allocation8 + $0x5]]
        %v581 = vstv %s580
        %s582 = sld [smem:[#allocation7 + $0x280]]
        %v583 = vld [vmem:[%s315] sm:$0xff]
        %v584 = vld [vmem:[%s315 + $0x8] sm:$0xff]
        %v585 = vstv %s582
        %v586 = vmul.f32 %v585, %v583
        %v587 = vmul.f32 %v585, %v584
        %v588 = vadd.f32 %v581, %v586
        %v589 = vadd.f32 %v581, %v587
        %s590 = sld [smem:[#allocation7 + $0x281]]
        %v591 = vld [vmem:[%s387] sm:$0xff]
        %v592 = vld [vmem:[%s387 + $0x8] sm:$0xff]
        %v593 = vstv %s590
        %v594 = vmul.f32 %v593, %v591
        %v595 = vmul.f32 %v593, %v592
        %v596 = vadd.f32 %v588, %v594
        %v597 = vadd.f32 %v589, %v595
        %s598 = sld [smem:[#allocation7 + $0x282]]
        %v599 = vld [vmem:[%s396] sm:$0xff]
        %v600 = vld [vmem:[%s396 + $0x8] sm:$0xff]
        %v601 = vstv %s598
        %v602 = vmul.f32 %v601, %v599
        %v603 = vmul.f32 %v601, %v600
        %v604 = vadd.f32 %v596, %v602
        %v605 = vadd.f32 %v597, %v603
        %s606 = scalar_lea.vmem [#allocation2], 120
        %607 = vst.msk [vmem:[%s606] sm:$0xff] %vm404, %v581
        %608 = vst.msk [vmem:[%s606 + $0x8] sm:$0xff] %vm404, %v581
        %609 = vst.msk [vmem:[%s606 + $0x10] sm:$0x3] %vm407, %v581
        %612 = vrot.lane.b32.xlu0 %v604, 1
        %v613 = vpop.permute.xlu0 %612
        %614 = vrot.lane.b32.xlu0 %v605, 1
        %v615 = vpop.permute.xlu0 %614
        %618 = vst.msk [vmem:[%s606 + $0x1] sm:$0xff] %vm417, %v613
        %619 = vst.msk [vmem:[%s606 + $0x9] sm:$0xff] %vm417, %v615
        %s620 = sld [smem:[#allocation8 + $0x6]]
        %v621 = vstv %s620
        %s622 = sld [smem:[#allocation7 + $0x300]]
        %v623 = vld [vmem:[%s315] sm:$0xff]
        %v624 = vld [vmem:[%s315 + $0x8] sm:$0xff]
        %v625 = vstv %s622
        %v626 = vmul.f32 %v625, %v623
        %v627 = vmul.f32 %v625, %v624
        %v628 = vadd.f32 %v621, %v626
        %v629 = vadd.f32 %v621, %v627
        %s630 = sld [smem:[#allocation7 + $0x301]]
        %v631 = vld [vmem:[%s387] sm:$0xff]
        %v632 = vld [vmem:[%s387 + $0x8] sm:$0xff]
        %v633 = vstv %s630
        %v634 = vmul.f32 %v633, %v631
        %v635 = vmul.f32 %v633, %v632
        %v636 = vadd.f32 %v628, %v634
        %v637 = vadd.f32 %v629, %v635
        %s638 = sld [smem:[#allocation7 + $0x302]]
        %v639 = vld [vmem:[%s396] sm:$0xff]
        %v640 = vld [vmem:[%s396 + $0x8] sm:$0xff]
        %v641 = vstv %s638
        %v642 = vmul.f32 %v641, %v639
        %v643 = vmul.f32 %v641, %v640
        %v644 = vadd.f32 %v636, %v642
        %v645 = vadd.f32 %v637, %v643
        %s646 = scalar_lea.vmem [#allocation2], 144
        %647 = vst.msk [vmem:[%s646] sm:$0xff] %vm404, %v621
        %648 = vst.msk [vmem:[%s646 + $0x8] sm:$0xff] %vm404, %v621
        %649 = vst.msk [vmem:[%s646 + $0x10] sm:$0x3] %vm407, %v621
        %652 = vrot.lane.b32.xlu0 %v644, 1
        %v653 = vpop.permute.xlu0 %652
        %654 = vrot.lane.b32.xlu0 %v645, 1
        %v655 = vpop.permute.xlu0 %654
        %658 = vst.msk [vmem:[%s646 + $0x1] sm:$0xff] %vm417, %v653
        %659 = vst.msk [vmem:[%s646 + $0x9] sm:$0xff] %vm417, %v655
        %s660 = sld [smem:[#allocation11]]
        %v661 = vstv %s660
        %s662 = sld [smem:[#allocation10]]
        %v663 = vld [vmem:[#allocation2] sm:$0xff]
        %v664 = vld [vmem:[#allocation2 + $0x8] sm:$0xff]
        %v665 = vld [vmem:[#allocation2 + $0x10] sm:$0x3]
        %v666 = vstv %s662
        %v667 = vmul.f32 %v666, %v663
        %v668 = vmul.f32 %v666, %v664
        %v669 = vmul.f32 %v666, %v665
        %v670 = vadd.f32 %v661, %v667
        %v671 = vadd.f32 %v661, %v668
        %v672 = vadd.f32 %v661, %v669
        %s673 = sld [smem:[#allocation10 + $0x1]]
        %v674 = vld [vmem:[%s446] sm:$0xff]
        %v675 = vld [vmem:[%s446 + $0x8] sm:$0xff]
        %v676 = vld [vmem:[%s446 + $0x10] sm:$0x3]
        %v677 = vstv %s673
        %v678 = vmul.f32 %v677, %v674
        %v679 = vmul.f32 %v677, %v675
        %v680 = vmul.f32 %v677, %v676
        %v681 = vadd.f32 %v670, %v678
        %v682 = vadd.f32 %v671, %v679
        %v683 = vadd.f32 %v672, %v680
        %s684 = sld [smem:[#allocation10 + $0x2]]
        %v685 = vld [vmem:[%s486] sm:$0xff]
        %v686 = vld [vmem:[%s486 + $0x8] sm:$0xff]
        %v687 = vld [vmem:[%s486 + $0x10] sm:$0x3]
        %v688 = vstv %s684
        %v689 = vmul.f32 %v688, %v685
        %v690 = vmul.f32 %v688, %v686
        %v691 = vmul.f32 %v688, %v687
        %v692 = vadd.f32 %v681, %v689
        %v693 = vadd.f32 %v682, %v690
        %v694 = vadd.f32 %v683, %v691
        %s695 = sld [smem:[#allocation10 + $0x3]]
        %v696 = vld [vmem:[%s526] sm:$0xff]
        %v697 = vld [vmem:[%s526 + $0x8] sm:$0xff]
        %v698 = vld [vmem:[%s526 + $0x10] sm:$0x3]
        %v699 = vstv %s695
        %v700 = vmul.f32 %v699, %v696
        %v701 = vmul.f32 %v699, %v697
        %v702 = vmul.f32 %v699, %v698
        %v703 = vadd.f32 %v692, %v700
        %v704 = vadd.f32 %v693, %v701
        %v705 = vadd.f32 %v694, %v702
        %s706 = sld [smem:[#allocation10 + $0x4]]
        %v707 = vld [vmem:[%s566] sm:$0xff]
        %v708 = vld [vmem:[%s566 + $0x8] sm:$0xff]
        %v709 = vld [vmem:[%s566 + $0x10] sm:$0x3]
        %v710 = vstv %s706
        %v711 = vmul.f32 %v710, %v707
        %v712 = vmul.f32 %v710, %v708
        %v713 = vmul.f32 %v710, %v709
        %v714 = vadd.f32 %v703, %v711
        %v715 = vadd.f32 %v704, %v712
        %v716 = vadd.f32 %v705, %v713
        %s717 = sld [smem:[#allocation10 + $0x5]]
        %v718 = vld [vmem:[%s606] sm:$0xff]
        %v719 = vld [vmem:[%s606 + $0x8] sm:$0xff]
        %v720 = vld [vmem:[%s606 + $0x10] sm:$0x3]
        %v721 = vstv %s717
        %v722 = vmul.f32 %v721, %v718
        %v723 = vmul.f32 %v721, %v719
        %v724 = vmul.f32 %v721, %v720
        %v725 = vadd.f32 %v714, %v722
        %v726 = vadd.f32 %v715, %v723
        %v727 = vadd.f32 %v716, %v724
        %s728 = sld [smem:[#allocation10 + $0x6]]
        %v729 = vld [vmem:[%s646] sm:$0xff]
        %v730 = vld [vmem:[%s646 + $0x8] sm:$0xff]
        %v731 = vld [vmem:[%s646 + $0x10] sm:$0x3]
        %v732 = vstv %s728
        %v733 = vmul.f32 %v732, %v729
        %v734 = vmul.f32 %v732, %v730
        %v735 = vmul.f32 %v732, %v731
        %v736 = vadd.f32 %v725, %v733
        %v737 = vadd.f32 %v726, %v734
        %v738 = vadd.f32 %v727, %v735
        %vm739 = vcmask 162816
        %740 = vst.msk [vmem:[#allocation3] sm:$0xff] %vm739, %v661
        %741 = vst.msk [vmem:[#allocation3 + $0x8] sm:$0xff] %vm739, %v661
        %vm742 = vcmask 158720
        %743 = vst.msk [vmem:[#allocation3 + $0x10] sm:$0xf] %vm742, %v661
        %747 = vrot.lane.b32.xlu0 %v736, 1
        %v748 = vpop.permute.xlu0 %747
        %749 = vrot.lane.b32.xlu0 %v737, 1
        %v750 = vpop.permute.xlu0 %749
        %751 = vrot.lane.b32.xlu0 %v738, 1
        %v752 = vpop.permute.xlu0 %751
        %vm756 = vcmask 154632
        %757 = vst.msk [vmem:[#allocation3 + $0x1] sm:$0xff] %vm756, %v748
        %758 = vst.msk [vmem:[#allocation3 + $0x9] sm:$0xff] %vm756, %v750
        %vm759 = vcmask 148488
        %760 = vst.msk [vmem:[#allocation3 + $0x11] sm:$0x3] %vm759, %v752
        %s761 = sld [smem:[#allocation11 + $0x1]]
        %v762 = vstv %s761
        %s763 = sld [smem:[#allocation10 + $0x80]]
        %v764 = vld [vmem:[#allocation2] sm:$0xff]
        %v765 = vld [vmem:[#allocation2 + $0x8] sm:$0xff]
        %v766 = vld [vmem:[#allocation2 + $0x10] sm:$0x3]
        %v767 = vstv %s763
        %v768 = vmul.f32 %v767, %v764
        %v769 = vmul.f32 %v767, %v765
        %v770 = vmul.f32 %v767, %v766
        %v771 = vadd.f32 %v762, %v768
        %v772 = vadd.f32 %v762, %v769
        %v773 = vadd.f32 %v762, %v770
        %s774 = sld [smem:[#allocation10 + $0x81]]
        %v775 = vld [vmem:[%s446] sm:$0xff]
        %v776 = vld [vmem:[%s446 + $0x8] sm:$0xff]
        %v777 = vld [vmem:[%s446 + $0x10] sm:$0x3]
        %v778 = vstv %s774
        %v779 = vmul.f32 %v778, %v775
        %v780 = vmul.f32 %v778, %v776
        %v781 = vmul.f32 %v778, %v777
        %v782 = vadd.f32 %v771, %v779
        %v783 = vadd.f32 %v772, %v780
        %v784 = vadd.f32 %v773, %v781
        %s785 = sld [smem:[#allocation10 + $0x82]]
        %v786 = vld [vmem:[%s486] sm:$0xff]
        %v787 = vld [vmem:[%s486 + $0x8] sm:$0xff]
        %v788 = vld [vmem:[%s486 + $0x10] sm:$0x3]
        %v789 = vstv %s785
        %v790 = vmul.f32 %v789, %v786
        %v791 = vmul.f32 %v789, %v787
        %v792 = vmul.f32 %v789, %v788
        %v793 = vadd.f32 %v782, %v790
        %v794 = vadd.f32 %v783, %v791
        %v795 = vadd.f32 %v784, %v792
        %s796 = sld [smem:[#allocation10 + $0x83]]
        %v797 = vld [vmem:[%s526] sm:$0xff]
        %v798 = vld [vmem:[%s526 + $0x8] sm:$0xff]
        %v799 = vld [vmem:[%s526 + $0x10] sm:$0x3]
        %v800 = vstv %s796
        %v801 = vmul.f32 %v800, %v797
        %v802 = vmul.f32 %v800, %v798
        %v803 = vmul.f32 %v800, %v799
        %v804 = vadd.f32 %v793, %v801
        %v805 = vadd.f32 %v794, %v802
        %v806 = vadd.f32 %v795, %v803
        %s807 = sld [smem:[#allocation10 + $0x84]]
        %v808 = vld [vmem:[%s566] sm:$0xff]
        %v809 = vld [vmem:[%s566 + $0x8] sm:$0xff]
        %v810 = vld [vmem:[%s566 + $0x10] sm:$0x3]
        %v811 = vstv %s807
        %v812 = vmul.f32 %v811, %v808
        %v813 = vmul.f32 %v811, %v809
        %v814 = vmul.f32 %v811, %v810
        %v815 = vadd.f32 %v804, %v812
        %v816 = vadd.f32 %v805, %v813
        %v817 = vadd.f32 %v806, %v814
        %s818 = sld [smem:[#allocation10 + $0x85]]
        %v819 = vld [vmem:[%s606] sm:$0xff]
        %v820 = vld [vmem:[%s606 + $0x8] sm:$0xff]
        %v821 = vld [vmem:[%s606 + $0x10] sm:$0x3]
        %v822 = vstv %s818
        %v823 = vmul.f32 %v822, %v819
        %v824 = vmul.f32 %v822, %v820
        %v825 = vmul.f32 %v822, %v821
        %v826 = vadd.f32 %v815, %v823
        %v827 = vadd.f32 %v816, %v824
        %v828 = vadd.f32 %v817, %v825
        %s829 = sld [smem:[#allocation10 + $0x86]]
        %v830 = vld [vmem:[%s646] sm:$0xff]
        %v831 = vld [vmem:[%s646 + $0x8] sm:$0xff]
        %v832 = vld [vmem:[%s646 + $0x10] sm:$0x3]
        %v833 = vstv %s829
        %v834 = vmul.f32 %v833, %v830
        %v835 = vmul.f32 %v833, %v831
        %v836 = vmul.f32 %v833, %v832
        %v837 = vadd.f32 %v826, %v834
        %v838 = vadd.f32 %v827, %v835
        %v839 = vadd.f32 %v828, %v836
        %s840 = scalar_lea.vmem [#allocation3], 24
        %841 = vst.msk [vmem:[%s840] sm:$0xff] %vm739, %v762
        %842 = vst.msk [vmem:[%s840 + $0x8] sm:$0xff] %vm739, %v762
        %843 = vst.msk [vmem:[%s840 + $0x10] sm:$0xf] %vm742, %v762
        %847 = vrot.lane.b32.xlu0 %v837, 1
        %v848 = vpop.permute.xlu0 %847
        %849 = vrot.lane.b32.xlu0 %v838, 1
        %v850 = vpop.permute.xlu0 %849
        %851 = vrot.lane.b32.xlu0 %v839, 1
        %v852 = vpop.permute.xlu0 %851
        %856 = vst.msk [vmem:[%s840 + $0x1] sm:$0xff] %vm756, %v848
        %857 = vst.msk [vmem:[%s840 + $0x9] sm:$0xff] %vm756, %v850
        %858 = vst.msk [vmem:[%s840 + $0x11] sm:$0x3] %vm759, %v852
        %s859 = sld [smem:[#allocation11 + $0x2]]
        %v860 = vstv %s859
        %s861 = sld [smem:[#allocation10 + $0x100]]
        %v862 = vld [vmem:[#allocation2] sm:$0xff]
        %v863 = vld [vmem:[#allocation2 + $0x8] sm:$0xff]
        %v864 = vld [vmem:[#allocation2 + $0x10] sm:$0x3]
        %v865 = vstv %s861
        %v866 = vmul.f32 %v865, %v862
        %v867 = vmul.f32 %v865, %v863
        %v868 = vmul.f32 %v865, %v864
        %v869 = vadd.f32 %v860, %v866
        %v870 = vadd.f32 %v860, %v867
        %v871 = vadd.f32 %v860, %v868
        %s872 = sld [smem:[#allocation10 + $0x101]]
        %v873 = vld [vmem:[%s446] sm:$0xff]
        %v874 = vld [vmem:[%s446 + $0x8] sm:$0xff]
        %v875 = vld [vmem:[%s446 + $0x10] sm:$0x3]
        %v876 = vstv %s872
        %v877 = vmul.f32 %v876, %v873
        %v878 = vmul.f32 %v876, %v874
        %v879 = vmul.f32 %v876, %v875
        %v880 = vadd.f32 %v869, %v877
        %v881 = vadd.f32 %v870, %v878
        %v882 = vadd.f32 %v871, %v879
        %s883 = sld [smem:[#allocation10 + $0x102]]
        %v884 = vld [vmem:[%s486] sm:$0xff]
        %v885 = vld [vmem:[%s486 + $0x8] sm:$0xff]
        %v886 = vld [vmem:[%s486 + $0x10] sm:$0x3]
        %v887 = vstv %s883
        %v888 = vmul.f32 %v887, %v884
        %v889 = vmul.f32 %v887, %v885
        %v890 = vmul.f32 %v887, %v886
        %v891 = vadd.f32 %v880, %v888
        %v892 = vadd.f32 %v881, %v889
        %v893 = vadd.f32 %v882, %v890
        %s894 = sld [smem:[#allocation10 + $0x103]]
        %v895 = vld [vmem:[%s526] sm:$0xff]
        %v896 = vld [vmem:[%s526 + $0x8] sm:$0xff]
        %v897 = vld [vmem:[%s526 + $0x10] sm:$0x3]
        %v898 = vstv %s894
        %v899 = vmul.f32 %v898, %v895
        %v900 = vmul.f32 %v898, %v896
        %v901 = vmul.f32 %v898, %v897
        %v902 = vadd.f32 %v891, %v899
        %v903 = vadd.f32 %v892, %v900
        %v904 = vadd.f32 %v893, %v901
        %s905 = sld [smem:[#allocation10 + $0x104]]
        %v906 = vld [vmem:[%s566] sm:$0xff]
        %v907 = vld [vmem:[%s566 + $0x8] sm:$0xff]
        %v908 = vld [vmem:[%s566 + $0x10] sm:$0x3]
        %v909 = vstv %s905
        %v910 = vmul.f32 %v909, %v906
        %v911 = vmul.f32 %v909, %v907
        %v912 = vmul.f32 %v909, %v908
        %v913 = vadd.f32 %v902, %v910
        %v914 = vadd.f32 %v903, %v911
        %v915 = vadd.f32 %v904, %v912
        %s916 = sld [smem:[#allocation10 + $0x105]]
        %v917 = vld [vmem:[%s606] sm:$0xff]
        %v918 = vld [vmem:[%s606 + $0x8] sm:$0xff]
        %v919 = vld [vmem:[%s606 + $0x10] sm:$0x3]
        %v920 = vstv %s916
        %v921 = vmul.f32 %v920, %v917
        %v922 = vmul.f32 %v920, %v918
        %v923 = vmul.f32 %v920, %v919
        %v924 = vadd.f32 %v913, %v921
        %v925 = vadd.f32 %v914, %v922
        %v926 = vadd.f32 %v915, %v923
        %s927 = sld [smem:[#allocation10 + $0x106]]
        %v928 = vld [vmem:[%s646] sm:$0xff]
        %v929 = vld [vmem:[%s646 + $0x8] sm:$0xff]
        %v930 = vld [vmem:[%s646 + $0x10] sm:$0x3]
        %v931 = vstv %s927
        %v932 = vmul.f32 %v931, %v928
        %v933 = vmul.f32 %v931, %v929
        %v934 = vmul.f32 %v931, %v930
        %v935 = vadd.f32 %v924, %v932
        %v936 = vadd.f32 %v925, %v933
        %v937 = vadd.f32 %v926, %v934
        %s938 = scalar_lea.vmem [#allocation3], 48
        %939 = vst.msk [vmem:[%s938] sm:$0xff] %vm739, %v860
        %940 = vst.msk [vmem:[%s938 + $0x8] sm:$0xff] %vm739, %v860
        %941 = vst.msk [vmem:[%s938 + $0x10] sm:$0xf] %vm742, %v860
        %945 = vrot.lane.b32.xlu0 %v935, 1
        %v946 = vpop.permute.xlu0 %945
        %947 = vrot.lane.b32.xlu0 %v936, 1
        %v948 = vpop.permute.xlu0 %947
        %949 = vrot.lane.b32.xlu0 %v937, 1
        %v950 = vpop.permute.xlu0 %949
        %954 = vst.msk [vmem:[%s938 + $0x1] sm:$0xff] %vm756, %v946
        %955 = vst.msk [vmem:[%s938 + $0x9] sm:$0xff] %vm756, %v948
        %956 = vst.msk [vmem:[%s938 + $0x11] sm:$0x3] %vm759, %v950
        %s957 = sld [smem:[#allocation11 + $0x3]]
        %v958 = vstv %s957
        %s959 = sld [smem:[#allocation10 + $0x180]]
        %v960 = vld [vmem:[#allocation2] sm:$0xff]
        %v961 = vld [vmem:[#allocation2 + $0x8] sm:$0xff]
        %v962 = vld [vmem:[#allocation2 + $0x10] sm:$0x3]
        %v963 = vstv %s959
        %v964 = vmul.f32 %v963, %v960
        %v965 = vmul.f32 %v963, %v961
        %v966 = vmul.f32 %v963, %v962
        %v967 = vadd.f32 %v958, %v964
        %v968 = vadd.f32 %v958, %v965
        %v969 = vadd.f32 %v958, %v966
        %s970 = sld [smem:[#allocation10 + $0x181]]
        %v971 = vld [vmem:[%s446] sm:$0xff]
        %v972 = vld [vmem:[%s446 + $0x8] sm:$0xff]
        %v973 = vld [vmem:[%s446 + $0x10] sm:$0x3]
        %v974 = vstv %s970
        %v975 = vmul.f32 %v974, %v971
        %v976 = vmul.f32 %v974, %v972
        %v977 = vmul.f32 %v974, %v973
        %v978 = vadd.f32 %v967, %v975
        %v979 = vadd.f32 %v968, %v976
        %v980 = vadd.f32 %v969, %v977
        %s981 = sld [smem:[#allocation10 + $0x182]]
        %v982 = vld [vmem:[%s486] sm:$0xff]
        %v983 = vld [vmem:[%s486 + $0x8] sm:$0xff]
        %v984 = vld [vmem:[%s486 + $0x10] sm:$0x3]
        %v985 = vstv %s981
        %v986 = vmul.f32 %v985, %v982
        %v987 = vmul.f32 %v985, %v983
        %v988 = vmul.f32 %v985, %v984
        %v989 = vadd.f32 %v978, %v986
        %v990 = vadd.f32 %v979, %v987
        %v991 = vadd.f32 %v980, %v988
        %s992 = sld [smem:[#allocation10 + $0x183]]
        %v993 = vld [vmem:[%s526] sm:$0xff]
        %v994 = vld [vmem:[%s526 + $0x8] sm:$0xff]
        %v995 = vld [vmem:[%s526 + $0x10] sm:$0x3]
        %v996 = vstv %s992
        %v997 = vmul.f32 %v996, %v993
        %v998 = vmul.f32 %v996, %v994
        %v999 = vmul.f32 %v996, %v995
        %v1000 = vadd.f32 %v989, %v997
        %v1001 = vadd.f32 %v990, %v998
        %v1002 = vadd.f32 %v991, %v999
        %s1003 = sld [smem:[#allocation10 + $0x184]]
        %v1004 = vld [vmem:[%s566] sm:$0xff]
        %v1005 = vld [vmem:[%s566 + $0x8] sm:$0xff]
        %v1006 = vld [vmem:[%s566 + $0x10] sm:$0x3]
        %v1007 = vstv %s1003
        %v1008 = vmul.f32 %v1007, %v1004
        %v1009 = vmul.f32 %v1007, %v1005
        %v1010 = vmul.f32 %v1007, %v1006
        %v1011 = vadd.f32 %v1000, %v1008
        %v1012 = vadd.f32 %v1001, %v1009
        %v1013 = vadd.f32 %v1002, %v1010
        %s1014 = sld [smem:[#allocation10 + $0x185]]
        %v1015 = vld [vmem:[%s606] sm:$0xff]
        %v1016 = vld [vmem:[%s606 + $0x8] sm:$0xff]
        %v1017 = vld [vmem:[%s606 + $0x10] sm:$0x3]
        %v1018 = vstv %s1014
        %v1019 = vmul.f32 %v1018, %v1015
        %v1020 = vmul.f32 %v1018, %v1016
        %v1021 = vmul.f32 %v1018, %v1017
        %v1022 = vadd.f32 %v1011, %v1019
        %v1023 = vadd.f32 %v1012, %v1020
        %v1024 = vadd.f32 %v1013, %v1021
        %s1025 = sld [smem:[#allocation10 + $0x186]]
        %v1026 = vld [vmem:[%s646] sm:$0xff]
        %v1027 = vld [vmem:[%s646 + $0x8] sm:$0xff]
        %v1028 = vld [vmem:[%s646 + $0x10] sm:$0x3]
        %v1029 = vstv %s1025
        %v1030 = vmul.f32 %v1029, %v1026
        %v1031 = vmul.f32 %v1029, %v1027
        %v1032 = vmul.f32 %v1029, %v1028
        %v1033 = vadd.f32 %v1022, %v1030
        %v1034 = vadd.f32 %v1023, %v1031
        %v1035 = vadd.f32 %v1024, %v1032
        %s1036 = scalar_lea.vmem [#allocation3], 72
        %1037 = vst.msk [vmem:[%s1036] sm:$0xff] %vm739, %v958
        %1038 = vst.msk [vmem:[%s1036 + $0x8] sm:$0xff] %vm739, %v958
        %1039 = vst.msk [vmem:[%s1036 + $0x10] sm:$0xf] %vm742, %v958
        %1043 = vrot.lane.b32.xlu0 %v1033, 1
        %v1044 = vpop.permute.xlu0 %1043
        %1045 = vrot.lane.b32.xlu0 %v1034, 1
        %v1046 = vpop.permute.xlu0 %1045
        %1047 = vrot.lane.b32.xlu0 %v1035, 1
        %v1048 = vpop.permute.xlu0 %1047
        %1052 = vst.msk [vmem:[%s1036 + $0x1] sm:$0xff] %vm756, %v1044
        %1053 = vst.msk [vmem:[%s1036 + $0x9] sm:$0xff] %vm756, %v1046
        %1054 = vst.msk [vmem:[%s1036 + $0x11] sm:$0x3] %vm759, %v1048
        %s1055 = sld [smem:[#allocation11 + $0x4]]
        %v1056 = vstv %s1055
        %s1057 = sld [smem:[#allocation10 + $0x200]]
        %v1058 = vld [vmem:[#allocation2] sm:$0xff]
        %v1059 = vld [vmem:[#allocation2 + $0x8] sm:$0xff]
        %v1060 = vld [vmem:[#allocation2 + $0x10] sm:$0x3]
        %v1061 = vstv %s1057
        %v1062 = vmul.f32 %v1061, %v1058
        %v1063 = vmul.f32 %v1061, %v1059
        %v1064 = vmul.f32 %v1061, %v1060
        %v1065 = vadd.f32 %v1056, %v1062
        %v1066 = vadd.f32 %v1056, %v1063
        %v1067 = vadd.f32 %v1056, %v1064
        %s1068 = sld [smem:[#allocation10 + $0x201]]
        %v1069 = vld [vmem:[%s446] sm:$0xff]
        %v1070 = vld [vmem:[%s446 + $0x8] sm:$0xff]
        %v1071 = vld [vmem:[%s446 + $0x10] sm:$0x3]
        %v1072 = vstv %s1068
        %v1073 = vmul.f32 %v1072, %v1069
        %v1074 = vmul.f32 %v1072, %v1070
        %v1075 = vmul.f32 %v1072, %v1071
        %v1076 = vadd.f32 %v1065, %v1073
        %v1077 = vadd.f32 %v1066, %v1074
        %v1078 = vadd.f32 %v1067, %v1075
        %s1079 = sld [smem:[#allocation10 + $0x202]]
        %v1080 = vld [vmem:[%s486] sm:$0xff]
        %v1081 = vld [vmem:[%s486 + $0x8] sm:$0xff]
        %v1082 = vld [vmem:[%s486 + $0x10] sm:$0x3]
        %v1083 = vstv %s1079
        %v1084 = vmul.f32 %v1083, %v1080
        %v1085 = vmul.f32 %v1083, %v1081
        %v1086 = vmul.f32 %v1083, %v1082
        %v1087 = vadd.f32 %v1076, %v1084
        %v1088 = vadd.f32 %v1077, %v1085
        %v1089 = vadd.f32 %v1078, %v1086
        %s1090 = sld [smem:[#allocation10 + $0x203]]
        %v1091 = vld [vmem:[%s526] sm:$0xff]
        %v1092 = vld [vmem:[%s526 + $0x8] sm:$0xff]
        %v1093 = vld [vmem:[%s526 + $0x10] sm:$0x3]
        %v1094 = vstv %s1090
        %v1095 = vmul.f32 %v1094, %v1091
        %v1096 = vmul.f32 %v1094, %v1092
        %v1097 = vmul.f32 %v1094, %v1093
        %v1098 = vadd.f32 %v1087, %v1095
        %v1099 = vadd.f32 %v1088, %v1096
        %v1100 = vadd.f32 %v1089, %v1097
        %s1101 = sld [smem:[#allocation10 + $0x204]]
        %v1102 = vld [vmem:[%s566] sm:$0xff]
        %v1103 = vld [vmem:[%s566 + $0x8] sm:$0xff]
        %v1104 = vld [vmem:[%s566 + $0x10] sm:$0x3]
        %v1105 = vstv %s1101
        %v1106 = vmul.f32 %v1105, %v1102
        %v1107 = vmul.f32 %v1105, %v1103
        %v1108 = vmul.f32 %v1105, %v1104
        %v1109 = vadd.f32 %v1098, %v1106
        %v1110 = vadd.f32 %v1099, %v1107
        %v1111 = vadd.f32 %v1100, %v1108
        %s1112 = sld [smem:[#allocation10 + $0x205]]
        %v1113 = vld [vmem:[%s606] sm:$0xff]
        %v1114 = vld [vmem:[%s606 + $0x8] sm:$0xff]
        %v1115 = vld [vmem:[%s606 + $0x10] sm:$0x3]
        %v1116 = vstv %s1112
        %v1117 = vmul.f32 %v1116, %v1113
        %v1118 = vmul.f32 %v1116, %v1114
        %v1119 = vmul.f32 %v1116, %v1115
        %v1120 = vadd.f32 %v1109, %v1117
        %v1121 = vadd.f32 %v1110, %v1118
        %v1122 = vadd.f32 %v1111, %v1119
        %s1123 = sld [smem:[#allocation10 + $0x206]]
        %v1124 = vld [vmem:[%s646] sm:$0xff]
        %v1125 = vld [vmem:[%s646 + $0x8] sm:$0xff]
        %v1126 = vld [vmem:[%s646 + $0x10] sm:$0x3]
        %v1127 = vstv %s1123
        %v1128 = vmul.f32 %v1127, %v1124
        %v1129 = vmul.f32 %v1127, %v1125
        %v1130 = vmul.f32 %v1127, %v1126
        %v1131 = vadd.f32 %v1120, %v1128
        %v1132 = vadd.f32 %v1121, %v1129
        %v1133 = vadd.f32 %v1122, %v1130
        %s1134 = scalar_lea.vmem [#allocation3], 96
        %1135 = vst.msk [vmem:[%s1134] sm:$0xff] %vm739, %v1056
        %1136 = vst.msk [vmem:[%s1134 + $0x8] sm:$0xff] %vm739, %v1056
        %1137 = vst.msk [vmem:[%s1134 + $0x10] sm:$0xf] %vm742, %v1056
        %1141 = vrot.lane.b32.xlu0 %v1131, 1
        %v1142 = vpop.permute.xlu0 %1141
        %1143 = vrot.lane.b32.xlu0 %v1132, 1
        %v1144 = vpop.permute.xlu0 %1143
        %1145 = vrot.lane.b32.xlu0 %v1133, 1
        %v1146 = vpop.permute.xlu0 %1145
        %1150 = vst.msk [vmem:[%s1134 + $0x1] sm:$0xff] %vm756, %v1142
        %1151 = vst.msk [vmem:[%s1134 + $0x9] sm:$0xff] %vm756, %v1144
        %1152 = vst.msk [vmem:[%s1134 + $0x11] sm:$0x3] %vm759, %v1146
        %s1153 = sld [smem:[#allocation11 + $0x5]]
        %v1154 = vstv %s1153
        %s1155 = sld [smem:[#allocation10 + $0x280]]
        %v1156 = vld [vmem:[#allocation2] sm:$0xff]
        %v1157 = vld [vmem:[#allocation2 + $0x8] sm:$0xff]
        %v1158 = vld [vmem:[#allocation2 + $0x10] sm:$0x3]
        %v1159 = vstv %s1155
        %v1160 = vmul.f32 %v1159, %v1156
        %v1161 = vmul.f32 %v1159, %v1157
        %v1162 = vmul.f32 %v1159, %v1158
        %v1163 = vadd.f32 %v1154, %v1160
        %v1164 = vadd.f32 %v1154, %v1161
        %v1165 = vadd.f32 %v1154, %v1162
        %s1166 = sld [smem:[#allocation10 + $0x281]]
        %v1167 = vld [vmem:[%s446] sm:$0xff]
        %v1168 = vld [vmem:[%s446 + $0x8] sm:$0xff]
        %v1169 = vld [vmem:[%s446 + $0x10] sm:$0x3]
        %v1170 = vstv %s1166
        %v1171 = vmul.f32 %v1170, %v1167
        %v1172 = vmul.f32 %v1170, %v1168
        %v1173 = vmul.f32 %v1170, %v1169
        %v1174 = vadd.f32 %v1163, %v1171
        %v1175 = vadd.f32 %v1164, %v1172
        %v1176 = vadd.f32 %v1165, %v1173
        %s1177 = sld [smem:[#allocation10 + $0x282]]
        %v1178 = vld [vmem:[%s486] sm:$0xff]
        %v1179 = vld [vmem:[%s486 + $0x8] sm:$0xff]
        %v1180 = vld [vmem:[%s486 + $0x10] sm:$0x3]
        %v1181 = vstv %s1177
        %v1182 = vmul.f32 %v1181, %v1178
        %v1183 = vmul.f32 %v1181, %v1179
        %v1184 = vmul.f32 %v1181, %v1180
        %v1185 = vadd.f32 %v1174, %v1182
        %v1186 = vadd.f32 %v1175, %v1183
        %v1187 = vadd.f32 %v1176, %v1184
        %s1188 = sld [smem:[#allocation10 + $0x283]]
        %v1189 = vld [vmem:[%s526] sm:$0xff]
        %v1190 = vld [vmem:[%s526 + $0x8] sm:$0xff]
        %v1191 = vld [vmem:[%s526 + $0x10] sm:$0x3]
        %v1192 = vstv %s1188
        %v1193 = vmul.f32 %v1192, %v1189
        %v1194 = vmul.f32 %v1192, %v1190
        %v1195 = vmul.f32 %v1192, %v1191
        %v1196 = vadd.f32 %v1185, %v1193
        %v1197 = vadd.f32 %v1186, %v1194
        %v1198 = vadd.f32 %v1187, %v1195
        %s1199 = sld [smem:[#allocation10 + $0x284]]
        %v1200 = vld [vmem:[%s566] sm:$0xff]
        %v1201 = vld [vmem:[%s566 + $0x8] sm:$0xff]
        %v1202 = vld [vmem:[%s566 + $0x10] sm:$0x3]
        %v1203 = vstv %s1199
        %v1204 = vmul.f32 %v1203, %v1200
        %v1205 = vmul.f32 %v1203, %v1201
        %v1206 = vmul.f32 %v1203, %v1202
        %v1207 = vadd.f32 %v1196, %v1204
        %v1208 = vadd.f32 %v1197, %v1205
        %v1209 = vadd.f32 %v1198, %v1206
        %s1210 = sld [smem:[#allocation10 + $0x285]]
        %v1211 = vld [vmem:[%s606] sm:$0xff]
        %v1212 = vld [vmem:[%s606 + $0x8] sm:$0xff]
        %v1213 = vld [vmem:[%s606 + $0x10] sm:$0x3]
        %v1214 = vstv %s1210
        %v1215 = vmul.f32 %v1214, %v1211
        %v1216 = vmul.f32 %v1214, %v1212
        %v1217 = vmul.f32 %v1214, %v1213
        %v1218 = vadd.f32 %v1207, %v1215
        %v1219 = vadd.f32 %v1208, %v1216
        %v1220 = vadd.f32 %v1209, %v1217
        %s1221 = sld [smem:[#allocation10 + $0x286]]
        %v1222 = vld [vmem:[%s646] sm:$0xff]
        %v1223 = vld [vmem:[%s646 + $0x8] sm:$0xff]
        %v1224 = vld [vmem:[%s646 + $0x10] sm:$0x3]
        %v1225 = vstv %s1221
        %v1226 = vmul.f32 %v1225, %v1222
        %v1227 = vmul.f32 %v1225, %v1223
        %v1228 = vmul.f32 %v1225, %v1224
        %v1229 = vadd.f32 %v1218, %v1226
        %v1230 = vadd.f32 %v1219, %v1227
        %v1231 = vadd.f32 %v1220, %v1228
        %s1232 = scalar_lea.vmem [#allocation3], 120
        %1233 = vst.msk [vmem:[%s1232] sm:$0xff] %vm739, %v1154
        %1234 = vst.msk [vmem:[%s1232 + $0x8] sm:$0xff] %vm739, %v1154
        %1235 = vst.msk [vmem:[%s1232 + $0x10] sm:$0xf] %vm742, %v1154
        %1239 = vrot.lane.b32.xlu0 %v1229, 1
        %v1240 = vpop.permute.xlu0 %1239
        %1241 = vrot.lane.b32.xlu0 %v1230, 1
        %v1242 = vpop.permute.xlu0 %1241
        %1243 = vrot.lane.b32.xlu0 %v1231, 1
        %v1244 = vpop.permute.xlu0 %1243
        %1248 = vst.msk [vmem:[%s1232 + $0x1] sm:$0xff] %vm756, %v1240
        %1249 = vst.msk [vmem:[%s1232 + $0x9] sm:$0xff] %vm756, %v1242
        %1250 = vst.msk [vmem:[%s1232 + $0x11] sm:$0x3] %vm759, %v1244
        %s1251 = sld [smem:[#allocation11 + $0x6]]
        %v1252 = vstv %s1251
        %s1253 = sld [smem:[#allocation10 + $0x300]]
        %v1254 = vld [vmem:[#allocation2] sm:$0xff]
        %v1255 = vld [vmem:[#allocation2 + $0x8] sm:$0xff]
        %v1256 = vld [vmem:[#allocation2 + $0x10] sm:$0x3]
        %v1257 = vstv %s1253
        %v1258 = vmul.f32 %v1257, %v1254
        %v1259 = vmul.f32 %v1257, %v1255
        %v1260 = vmul.f32 %v1257, %v1256
        %v1261 = vadd.f32 %v1252, %v1258
        %v1262 = vadd.f32 %v1252, %v1259
        %v1263 = vadd.f32 %v1252, %v1260
        %s1264 = sld [smem:[#allocation10 + $0x301]]
        %v1265 = vld [vmem:[%s446] sm:$0xff]
        %v1266 = vld [vmem:[%s446 + $0x8] sm:$0xff]
        %v1267 = vld [vmem:[%s446 + $0x10] sm:$0x3]
        %v1268 = vstv %s1264
        %v1269 = vmul.f32 %v1268, %v1265
        %v1270 = vmul.f32 %v1268, %v1266
        %v1271 = vmul.f32 %v1268, %v1267
        %v1272 = vadd.f32 %v1261, %v1269
        %v1273 = vadd.f32 %v1262, %v1270
        %v1274 = vadd.f32 %v1263, %v1271
        %s1275 = sld [smem:[#allocation10 + $0x302]]
        %v1276 = vld [vmem:[%s486] sm:$0xff]
        %v1277 = vld [vmem:[%s486 + $0x8] sm:$0xff]
        %v1278 = vld [vmem:[%s486 + $0x10] sm:$0x3]
        %v1279 = vstv %s1275
        %v1280 = vmul.f32 %v1279, %v1276
        %v1281 = vmul.f32 %v1279, %v1277
        %v1282 = vmul.f32 %v1279, %v1278
        %v1283 = vadd.f32 %v1272, %v1280
        %v1284 = vadd.f32 %v1273, %v1281
        %v1285 = vadd.f32 %v1274, %v1282
        %s1286 = sld [smem:[#allocation10 + $0x303]]
        %v1287 = vld [vmem:[%s526] sm:$0xff]
        %v1288 = vld [vmem:[%s526 + $0x8] sm:$0xff]
        %v1289 = vld [vmem:[%s526 + $0x10] sm:$0x3]
        %v1290 = vstv %s1286
        %v1291 = vmul.f32 %v1290, %v1287
        %v1292 = vmul.f32 %v1290, %v1288
        %v1293 = vmul.f32 %v1290, %v1289
        %v1294 = vadd.f32 %v1283, %v1291
        %v1295 = vadd.f32 %v1284, %v1292
        %v1296 = vadd.f32 %v1285, %v1293
        %s1297 = sld [smem:[#allocation10 + $0x304]]
        %v1298 = vld [vmem:[%s566] sm:$0xff]
        %v1299 = vld [vmem:[%s566 + $0x8] sm:$0xff]
        %v1300 = vld [vmem:[%s566 + $0x10] sm:$0x3]
        %v1301 = vstv %s1297
        %v1302 = vmul.f32 %v1301, %v1298
        %v1303 = vmul.f32 %v1301, %v1299
        %v1304 = vmul.f32 %v1301, %v1300
        %v1305 = vadd.f32 %v1294, %v1302
        %v1306 = vadd.f32 %v1295, %v1303
        %v1307 = vadd.f32 %v1296, %v1304
        %s1308 = sld [smem:[#allocation10 + $0x305]]
        %v1309 = vld [vmem:[%s606] sm:$0xff]
        %v1310 = vld [vmem:[%s606 + $0x8] sm:$0xff]
        %v1311 = vld [vmem:[%s606 + $0x10] sm:$0x3]
        %v1312 = vstv %s1308
        %v1313 = vmul.f32 %v1312, %v1309
        %v1314 = vmul.f32 %v1312, %v1310
        %v1315 = vmul.f32 %v1312, %v1311
        %v1316 = vadd.f32 %v1305, %v1313
        %v1317 = vadd.f32 %v1306, %v1314
        %v1318 = vadd.f32 %v1307, %v1315
        %s1319 = sld [smem:[#allocation10 + $0x306]]
        %v1320 = vld [vmem:[%s646] sm:$0xff]
        %v1321 = vld [vmem:[%s646 + $0x8] sm:$0xff]
        %v1322 = vld [vmem:[%s646 + $0x10] sm:$0x3]
        %v1323 = vstv %s1319
        %v1324 = vmul.f32 %v1323, %v1320
        %v1325 = vmul.f32 %v1323, %v1321
        %v1326 = vmul.f32 %v1323, %v1322
        %v1327 = vadd.f32 %v1316, %v1324
        %v1328 = vadd.f32 %v1317, %v1325
        %v1329 = vadd.f32 %v1318, %v1326
        %s1330 = scalar_lea.vmem [#allocation3], 144
        %1331 = vst.msk [vmem:[%s1330] sm:$0xff] %vm739, %v1252
        %1332 = vst.msk [vmem:[%s1330 + $0x8] sm:$0xff] %vm739, %v1252
        %1333 = vst.msk [vmem:[%s1330 + $0x10] sm:$0xf] %vm742, %v1252
        %1337 = vrot.lane.b32.xlu0 %v1327, 1
        %v1338 = vpop.permute.xlu0 %1337
        %1339 = vrot.lane.b32.xlu0 %v1328, 1
        %v1340 = vpop.permute.xlu0 %1339
        %1341 = vrot.lane.b32.xlu0 %v1329, 1
        %v1342 = vpop.permute.xlu0 %1341
        %1346 = vst.msk [vmem:[%s1330 + $0x1] sm:$0xff] %vm756, %v1338
        %1347 = vst.msk [vmem:[%s1330 + $0x9] sm:$0xff] %vm756, %v1340
        %1348 = vst.msk [vmem:[%s1330 + $0x11] sm:$0x3] %vm759, %v1342
        %s1349 = sld [smem:[#allocation11 + $0x7]]
        %v1350 = vstv %s1349
        %s1351 = sld [smem:[#allocation10 + $0x380]]
        %v1352 = vld [vmem:[#allocation2] sm:$0xff]
        %v1353 = vld [vmem:[#allocation2 + $0x8] sm:$0xff]
        %v1354 = vld [vmem:[#allocation2 + $0x10] sm:$0x3]
        %v1355 = vstv %s1351
        %v1356 = vmul.f32 %v1355, %v1352
        %v1357 = vmul.f32 %v1355, %v1353
        %v1358 = vmul.f32 %v1355, %v1354
        %v1359 = vadd.f32 %v1350, %v1356
        %v1360 = vadd.f32 %v1350, %v1357
        %v1361 = vadd.f32 %v1350, %v1358
        %s1362 = sld [smem:[#allocation10 + $0x381]]
        %v1363 = vld [vmem:[%s446] sm:$0xff]
        %v1364 = vld [vmem:[%s446 + $0x8] sm:$0xff]
        %v1365 = vld [vmem:[%s446 + $0x10] sm:$0x3]
        %v1366 = vstv %s1362
        %v1367 = vmul.f32 %v1366, %v1363
        %v1368 = vmul.f32 %v1366, %v1364
        %v1369 = vmul.f32 %v1366, %v1365
        %v1370 = vadd.f32 %v1359, %v1367
        %v1371 = vadd.f32 %v1360, %v1368
        %v1372 = vadd.f32 %v1361, %v1369
        %s1373 = sld [smem:[#allocation10 + $0x382]]
        %v1374 = vld [vmem:[%s486] sm:$0xff]
        %v1375 = vld [vmem:[%s486 + $0x8] sm:$0xff]
        %v1376 = vld [vmem:[%s486 + $0x10] sm:$0x3]
        %v1377 = vstv %s1373
        %v1378 = vmul.f32 %v1377, %v1374
        %v1379 = vmul.f32 %v1377, %v1375
        %v1380 = vmul.f32 %v1377, %v1376
        %v1381 = vadd.f32 %v1370, %v1378
        %v1382 = vadd.f32 %v1371, %v1379
        %v1383 = vadd.f32 %v1372, %v1380
        %s1384 = sld [smem:[#allocation10 + $0x383]]
        %v1385 = vld [vmem:[%s526] sm:$0xff]
        %v1386 = vld [vmem:[%s526 + $0x8] sm:$0xff]
        %v1387 = vld [vmem:[%s526 + $0x10] sm:$0x3]
        %v1388 = vstv %s1384
        %v1389 = vmul.f32 %v1388, %v1385
        %v1390 = vmul.f32 %v1388, %v1386
        %v1391 = vmul.f32 %v1388, %v1387
        %v1392 = vadd.f32 %v1381, %v1389
        %v1393 = vadd.f32 %v1382, %v1390
        %v1394 = vadd.f32 %v1383, %v1391
        %s1395 = sld [smem:[#allocation10 + $0x384]]
        %v1396 = vld [vmem:[%s566] sm:$0xff]
        %v1397 = vld [vmem:[%s566 + $0x8] sm:$0xff]
        %v1398 = vld [vmem:[%s566 + $0x10] sm:$0x3]
        %v1399 = vstv %s1395
        %v1400 = vmul.f32 %v1399, %v1396
        %v1401 = vmul.f32 %v1399, %v1397
        %v1402 = vmul.f32 %v1399, %v1398
        %v1403 = vadd.f32 %v1392, %v1400
        %v1404 = vadd.f32 %v1393, %v1401
        %v1405 = vadd.f32 %v1394, %v1402
        %s1406 = sld [smem:[#allocation10 + $0x385]]
        %v1407 = vld [vmem:[%s606] sm:$0xff]
        %v1408 = vld [vmem:[%s606 + $0x8] sm:$0xff]
        %v1409 = vld [vmem:[%s606 + $0x10] sm:$0x3]
        %v1410 = vstv %s1406
        %v1411 = vmul.f32 %v1410, %v1407
        %v1412 = vmul.f32 %v1410, %v1408
        %v1413 = vmul.f32 %v1410, %v1409
        %v1414 = vadd.f32 %v1403, %v1411
        %v1415 = vadd.f32 %v1404, %v1412
        %v1416 = vadd.f32 %v1405, %v1413
        %s1417 = sld [smem:[#allocation10 + $0x386]]
        %v1418 = vld [vmem:[%s646] sm:$0xff]
        %v1419 = vld [vmem:[%s646 + $0x8] sm:$0xff]
        %v1420 = vld [vmem:[%s646 + $0x10] sm:$0x3]
        %v1421 = vstv %s1417
        %v1422 = vmul.f32 %v1421, %v1418
        %v1423 = vmul.f32 %v1421, %v1419
        %v1424 = vmul.f32 %v1421, %v1420
        %v1425 = vadd.f32 %v1414, %v1422
        %v1426 = vadd.f32 %v1415, %v1423
        %v1427 = vadd.f32 %v1416, %v1424
        %s1428 = scalar_lea.vmem [#allocation3], 168
        %1429 = vst.msk [vmem:[%s1428] sm:$0xff] %vm739, %v1350
        %1430 = vst.msk [vmem:[%s1428 + $0x8] sm:$0xff] %vm739, %v1350
        %1431 = vst.msk [vmem:[%s1428 + $0x10] sm:$0xf] %vm742, %v1350
        %1435 = vrot.lane.b32.xlu0 %v1425, 1
        %v1436 = vpop.permute.xlu0 %1435
        %1437 = vrot.lane.b32.xlu0 %v1426, 1
        %v1438 = vpop.permute.xlu0 %1437
        %1439 = vrot.lane.b32.xlu0 %v1427, 1
        %v1440 = vpop.permute.xlu0 %1439
        %1444 = vst.msk [vmem:[%s1428 + $0x1] sm:$0xff] %vm756, %v1436
        %1445 = vst.msk [vmem:[%s1428 + $0x9] sm:$0xff] %vm756, %v1438
        %1446 = vst.msk [vmem:[%s1428 + $0x11] sm:$0x3] %vm759, %v1440
        %s1447 = sld [smem:[#allocation14]]
        %v1448 = vstv %s1447
        %s1449 = sld [smem:[#allocation13]]
        %v1450 = vld [vmem:[#allocation3] sm:$0xff]
        %v1451 = vld [vmem:[#allocation3 + $0x8] sm:$0xff]
        %v1452 = vld [vmem:[#allocation3 + $0x10] sm:$0xf]
        %v1453 = vstv %s1449
        %v1454 = vmul.f32 %v1453, %v1450
        %v1455 = vmul.f32 %v1453, %v1451
        %v1456 = vmul.f32 %v1453, %v1452
        %v1457 = vadd.f32 %v1448, %v1454
        %v1458 = vadd.f32 %v1448, %v1455
        %v1459 = vadd.f32 %v1448, %v1456
        %s1460 = sld [smem:[#allocation13 + $0x1]]
        %v1461 = vld [vmem:[%s840] sm:$0xff]
        %v1462 = vld [vmem:[%s840 + $0x8] sm:$0xff]
        %v1463 = vld [vmem:[%s840 + $0x10] sm:$0xf]
        %v1464 = vstv %s1460
        %v1465 = vmul.f32 %v1464, %v1461
        %v1466 = vmul.f32 %v1464, %v1462
        %v1467 = vmul.f32 %v1464, %v1463
        %v1468 = vadd.f32 %v1457, %v1465
        %v1469 = vadd.f32 %v1458, %v1466
        %v1470 = vadd.f32 %v1459, %v1467
        %s1471 = sld [smem:[#allocation13 + $0x2]]
        %v1472 = vld [vmem:[%s938] sm:$0xff]
        %v1473 = vld [vmem:[%s938 + $0x8] sm:$0xff]
        %v1474 = vld [vmem:[%s938 + $0x10] sm:$0xf]
        %v1475 = vstv %s1471
        %v1476 = vmul.f32 %v1475, %v1472
        %v1477 = vmul.f32 %v1475, %v1473
        %v1478 = vmul.f32 %v1475, %v1474
        %v1479 = vadd.f32 %v1468, %v1476
        %v1480 = vadd.f32 %v1469, %v1477
        %v1481 = vadd.f32 %v1470, %v1478
        %s1482 = sld [smem:[#allocation13 + $0x3]]
        %v1483 = vld [vmem:[%s1036] sm:$0xff]
        %v1484 = vld [vmem:[%s1036 + $0x8] sm:$0xff]
        %v1485 = vld [vmem:[%s1036 + $0x10] sm:$0xf]
        %v1486 = vstv %s1482
        %v1487 = vmul.f32 %v1486, %v1483
        %v1488 = vmul.f32 %v1486, %v1484
        %v1489 = vmul.f32 %v1486, %v1485
        %v1490 = vadd.f32 %v1479, %v1487
        %v1491 = vadd.f32 %v1480, %v1488
        %v1492 = vadd.f32 %v1481, %v1489
        %s1493 = sld [smem:[#allocation13 + $0x4]]
        %v1494 = vld [vmem:[%s1134] sm:$0xff]
        %v1495 = vld [vmem:[%s1134 + $0x8] sm:$0xff]
        %v1496 = vld [vmem:[%s1134 + $0x10] sm:$0xf]
        %v1497 = vstv %s1493
        %v1498 = vmul.f32 %v1497, %v1494
        %v1499 = vmul.f32 %v1497, %v1495
        %v1500 = vmul.f32 %v1497, %v1496
        %v1501 = vadd.f32 %v1490, %v1498
        %v1502 = vadd.f32 %v1491, %v1499
        %v1503 = vadd.f32 %v1492, %v1500
        %s1504 = sld [smem:[#allocation13 + $0x5]]
        %v1505 = vld [vmem:[%s1232] sm:$0xff]
        %v1506 = vld [vmem:[%s1232 + $0x8] sm:$0xff]
        %v1507 = vld [vmem:[%s1232 + $0x10] sm:$0xf]
        %v1508 = vstv %s1504
        %v1509 = vmul.f32 %v1508, %v1505
        %v1510 = vmul.f32 %v1508, %v1506
        %v1511 = vmul.f32 %v1508, %v1507
        %v1512 = vadd.f32 %v1501, %v1509
        %v1513 = vadd.f32 %v1502, %v1510
        %v1514 = vadd.f32 %v1503, %v1511
        %s1515 = sld [smem:[#allocation13 + $0x6]]
        %v1516 = vld [vmem:[%s1330] sm:$0xff]
        %v1517 = vld [vmem:[%s1330 + $0x8] sm:$0xff]
        %v1518 = vld [vmem:[%s1330 + $0x10] sm:$0xf]
        %v1519 = vstv %s1515
        %v1520 = vmul.f32 %v1519, %v1516
        %v1521 = vmul.f32 %v1519, %v1517
        %v1522 = vmul.f32 %v1519, %v1518
        %v1523 = vadd.f32 %v1512, %v1520
        %v1524 = vadd.f32 %v1513, %v1521
        %v1525 = vadd.f32 %v1514, %v1522
        %s1526 = sld [smem:[#allocation13 + $0x7]]
        %v1527 = vld [vmem:[%s1428] sm:$0xff]
        %v1528 = vld [vmem:[%s1428 + $0x8] sm:$0xff]
        %v1529 = vld [vmem:[%s1428 + $0x10] sm:$0xf]
        %v1530 = vstv %s1526
        %v1531 = vmul.f32 %v1530, %v1527
        %v1532 = vmul.f32 %v1530, %v1528
        %v1533 = vmul.f32 %v1530, %v1529
        %v1534 = vadd.f32 %v1523, %v1531
        %v1535 = vadd.f32 %v1524, %v1532
        %v1536 = vadd.f32 %v1525, %v1533
        %vm1537 = vcmask 179200
        %1538 = vst.msk [vmem:[%s375] sm:$0xff] %vm1537, %v1448
        %1539 = vst.msk [vmem:[%s375 + $0x8] sm:$0xff] %vm1537, %v1448
        %vm1540 = vcmask 177152
        %1541 = vst.msk [vmem:[%s375 + $0x10] sm:$0x3f] %vm1540, %v1448
        %1545 = vrot.lane.b32.xlu0 %v1534, 1
        %v1546 = vpop.permute.xlu0 %1545
        %1547 = vrot.lane.b32.xlu0 %v1535, 1
        %v1548 = vpop.permute.xlu0 %1547
        %1549 = vrot.lane.b32.xlu0 %v1536, 1
        %v1550 = vpop.permute.xlu0 %1549
        %vm1554 = vcmask 171016
        %1555 = vst.msk [vmem:[%s375 + $0x1] sm:$0xff] %vm1554, %v1546
        %1556 = vst.msk [vmem:[%s375 + $0x9] sm:$0xff] %vm1554, %v1548
        %vm1557 = vcmask 166920
        %1558 = vst.msk [vmem:[%s375 + $0x11] sm:$0xf] %vm1557, %v1550
        %s1559 = sld [smem:[#allocation14 + $0x1]]
        %v1560 = vstv %s1559
        %s1561 = sld [smem:[#allocation13 + $0x80]]
        %v1562 = vld [vmem:[#allocation3] sm:$0xff]
        %v1563 = vld [vmem:[#allocation3 + $0x8] sm:$0xff]
        %v1564 = vld [vmem:[#allocation3 + $0x10] sm:$0xf]
        %v1565 = vstv %s1561
        %v1566 = vmul.f32 %v1565, %v1562
        %v1567 = vmul.f32 %v1565, %v1563
        %v1568 = vmul.f32 %v1565, %v1564
        %v1569 = vadd.f32 %v1560, %v1566
        %v1570 = vadd.f32 %v1560, %v1567
        %v1571 = vadd.f32 %v1560, %v1568
        %s1572 = sld [smem:[#allocation13 + $0x81]]
        %v1573 = vld [vmem:[%s840] sm:$0xff]
        %v1574 = vld [vmem:[%s840 + $0x8] sm:$0xff]
        %v1575 = vld [vmem:[%s840 + $0x10] sm:$0xf]
        %v1576 = vstv %s1572
        %v1577 = vmul.f32 %v1576, %v1573
        %v1578 = vmul.f32 %v1576, %v1574
        %v1579 = vmul.f32 %v1576, %v1575
        %v1580 = vadd.f32 %v1569, %v1577
        %v1581 = vadd.f32 %v1570, %v1578
        %v1582 = vadd.f32 %v1571, %v1579
        %s1583 = sld [smem:[#allocation13 + $0x82]]
        %v1584 = vld [vmem:[%s938] sm:$0xff]
        %v1585 = vld [vmem:[%s938 + $0x8] sm:$0xff]
        %v1586 = vld [vmem:[%s938 + $0x10] sm:$0xf]
        %v1587 = vstv %s1583
        %v1588 = vmul.f32 %v1587, %v1584
        %v1589 = vmul.f32 %v1587, %v1585
        %v1590 = vmul.f32 %v1587, %v1586
        %v1591 = vadd.f32 %v1580, %v1588
        %v1592 = vadd.f32 %v1581, %v1589
        %v1593 = vadd.f32 %v1582, %v1590
        %s1594 = sld [smem:[#allocation13 + $0x83]]
        %v1595 = vld [vmem:[%s1036] sm:$0xff]
        %v1596 = vld [vmem:[%s1036 + $0x8] sm:$0xff]
        %v1597 = vld [vmem:[%s1036 + $0x10] sm:$0xf]
        %v1598 = vstv %s1594
        %v1599 = vmul.f32 %v1598, %v1595
        %v1600 = vmul.f32 %v1598, %v1596
        %v1601 = vmul.f32 %v1598, %v1597
        %v1602 = vadd.f32 %v1591, %v1599
        %v1603 = vadd.f32 %v1592, %v1600
        %v1604 = vadd.f32 %v1593, %v1601
        %s1605 = sld [smem:[#allocation13 + $0x84]]
        %v1606 = vld [vmem:[%s1134] sm:$0xff]
        %v1607 = vld [vmem:[%s1134 + $0x8] sm:$0xff]
        %v1608 = vld [vmem:[%s1134 + $0x10] sm:$0xf]
        %v1609 = vstv %s1605
        %v1610 = vmul.f32 %v1609, %v1606
        %v1611 = vmul.f32 %v1609, %v1607
        %v1612 = vmul.f32 %v1609, %v1608
        %v1613 = vadd.f32 %v1602, %v1610
        %v1614 = vadd.f32 %v1603, %v1611
        %v1615 = vadd.f32 %v1604, %v1612
        %s1616 = sld [smem:[#allocation13 + $0x85]]
        %v1617 = vld [vmem:[%s1232] sm:$0xff]
        %v1618 = vld [vmem:[%s1232 + $0x8] sm:$0xff]
        %v1619 = vld [vmem:[%s1232 + $0x10] sm:$0xf]
        %v1620 = vstv %s1616
        %v1621 = vmul.f32 %v1620, %v1617
        %v1622 = vmul.f32 %v1620, %v1618
        %v1623 = vmul.f32 %v1620, %v1619
        %v1624 = vadd.f32 %v1613, %v1621
        %v1625 = vadd.f32 %v1614, %v1622
        %v1626 = vadd.f32 %v1615, %v1623
        %s1627 = sld [smem:[#allocation13 + $0x86]]
        %v1628 = vld [vmem:[%s1330] sm:$0xff]
        %v1629 = vld [vmem:[%s1330 + $0x8] sm:$0xff]
        %v1630 = vld [vmem:[%s1330 + $0x10] sm:$0xf]
        %v1631 = vstv %s1627
        %v1632 = vmul.f32 %v1631, %v1628
        %v1633 = vmul.f32 %v1631, %v1629
        %v1634 = vmul.f32 %v1631, %v1630
        %v1635 = vadd.f32 %v1624, %v1632
        %v1636 = vadd.f32 %v1625, %v1633
        %v1637 = vadd.f32 %v1626, %v1634
        %s1638 = sld [smem:[#allocation13 + $0x87]]
        %v1639 = vld [vmem:[%s1428] sm:$0xff]
        %v1640 = vld [vmem:[%s1428 + $0x8] sm:$0xff]
        %v1641 = vld [vmem:[%s1428 + $0x10] sm:$0xf]
        %v1642 = vstv %s1638
        %v1643 = vmul.f32 %v1642, %v1639
        %v1644 = vmul.f32 %v1642, %v1640
        %v1645 = vmul.f32 %v1642, %v1641
        %v1646 = vadd.f32 %v1635, %v1643
        %v1647 = vadd.f32 %v1636, %v1644
        %v1648 = vadd.f32 %v1637, %v1645
        %s1649 = scalar_lea.vmem %s375, 24
        %1650 = vst.msk [vmem:[%s1649] sm:$0xff] %vm1537, %v1560
        %1651 = vst.msk [vmem:[%s1649 + $0x8] sm:$0xff] %vm1537, %v1560
        %1652 = vst.msk [vmem:[%s1649 + $0x10] sm:$0x3f] %vm1540, %v1560
        %1656 = vrot.lane.b32.xlu0 %v1646, 1
        %v1657 = vpop.permute.xlu0 %1656
        %1658 = vrot.lane.b32.xlu0 %v1647, 1
        %v1659 = vpop.permute.xlu0 %1658
        %1660 = vrot.lane.b32.xlu0 %v1648, 1
        %v1661 = vpop.permute.xlu0 %1660
        %1665 = vst.msk [vmem:[%s1649 + $0x1] sm:$0xff] %vm1554, %v1657
        %1666 = vst.msk [vmem:[%s1649 + $0x9] sm:$0xff] %vm1554, %v1659
        %1667 = vst.msk [vmem:[%s1649 + $0x11] sm:$0xf] %vm1557, %v1661
        %p1668 = scmp.lt.s32.totalorder %s25, 1
        %s1669 = scalar_select %p1668, %s25, 1
        %s1670 = smul.addr %s1669, 6
        %s1671 = smul.addr %s1670, 8
        %s1672 = scalar_lea.vmem %s7, %s1671
        // Predicated region
        $region77: #{model_forward.1} parent=47 // pred_check
          %p1673 = pneg %p195
        $region78: #{model_forward.1} parent=47 // pred_check_branch
          %1675 = sbr.rel (%p1673) target = $region80
        $region79: #{model_forward.1} parent=47 // pred_region
          _
        $region80: #{model_forward.1} parent=47 // pred_fallthru
          _
      $region48: #{model_forward.1} parent=5 // pred_fallthru
        _
      %p1676 = scmp.le.s32.totalorder 2, %s20
      // Predicated region
      $region81: #{model_forward.1} parent=5 // pred_check
        %p1677 = pneg %p1676
      $region82: #{model_forward.1} parent=5 // pred_check_branch
        %1679 = sbr.rel (%p1677) target = $region84
      $region83: #{model_forward.1} parent=5 // pred_region
        %s1680 = ssub.s32 %s20, 2
        // Predicated region
        $region85: #{model_forward.1} parent=83 // pred_check
          %p1681 = pneg %p201
        $region86: #{model_forward.1} parent=83 // pred_check_branch
          %1683 = sbr.rel (%p1681) target = $region88
        $region87: #{model_forward.1} parent=83 // pred_region
          %p1684 = scmp.lt.s32.totalorder %s26, 1
          %s1685 = scalar_select %p1684, %s26, 1
          %s1686 = smul.addr %s1685, 6
          %s1687 = smul.addr %s1686, 8
          %s1688 = scalar_lea.vmem %s7, %s1687
        $region88: #{model_forward.1} parent=83 // pred_fallthru
          _
      $region84: #{model_forward.1} parent=5 // pred_fallthru
        _
    $region6: #{model_forward.1} parent=1 // loop_footer
      %s24 = sadd.s32 1, %s20
    $region7: #{model_forward.1} parent=1 // loop_footer_branch
      %19 = sbr.rel target = $region3
    $region8: #{model_forward.1} parent=1 // loop_exit
      _
    %1689 = vsyncpa [#allocation5], 1
    %s1690 = scalar_lea.sflag [#allocation5], 1
    %1691 = vsyncpa %s1690, 1
    %1692 = vsyncpa [#allocation6], 1
    %s1693 = scalar_lea.sflag [#allocation6], 1
    %1694 = vsyncpa %s1693, 1
    %1695 = vsyncpa [#allocation9], 1
    %1696 = vsyncpa [#allocation12], 1
    %1697 = vsyncpa [#allocation15], 1

</llo_original>
